<compile_context>
chip_gen: v7x
topology: tpu7x:2x2x1
jax: 0.10.0
libtpu: 0.0.40
codegen_flags: <defaults>
</compile_context>

<pallas_src>
import functools

import jax
import jax.numpy as jnp
from jax.experimental import pallas as pl
from jax.experimental.pallas import tpu as pltpu


def _round_up(x, m):
    return (x + m - 1) // m * m


# --------------------------------------------------------------------------
# Tiled matmul kernel:  out = [relu?](relu?(A) @ W + bias) [+ skip]
# --------------------------------------------------------------------------
def _mm_kernel(*refs, relu_in, relu_out, has_skip):
    if has_skip:
        a_ref, w_ref, b_ref, s_ref, o_ref, acc_ref = refs
    else:
        a_ref, w_ref, b_ref, o_ref, acc_ref = refs
        s_ref = None

    @pl.when(pl.program_id(2) == 0)
    def _():
        acc_ref[...] = jnp.zeros_like(acc_ref)

    a = a_ref[...]
    if relu_in:
        a = jnp.maximum(a, 0)          # fused pre-activation (relu commutes w/ bf16 cast)
    acc_ref[...] += jnp.dot(a, w_ref[...], preferred_element_type=jnp.float32)

    @pl.when(pl.program_id(2) == pl.num_programs(2) - 1)
    def _():
        out = acc_ref[...] + b_ref[...]          # f32 epilogue
        if relu_out:
            out = jnp.maximum(out, 0.0)
        if has_skip:
            out = out + s_ref[...]               # fused residual add
        o_ref[...] = out


def pallas_matmul_bias(a, w, b, skip=None, relu_in=False, relu_out=False):
    """(M, K) @ (K, N) + bias with fused epilogue — the conv hot path."""
    M, K = a.shape
    K2, N = w.shape
    assert K == K2

    tm = min(512, _round_up(M, 8))
    Mp = _round_up(M, tm)
    tn = 256 if N > 128 else 128                 # lane-dense, 256-preferred when wide
    Np = _round_up(N, tn)
    tk = min(512, _round_up(K, 128))
    Kp = _round_up(K, tk)

    # bf16 MXU operands, zero-padded to tile multiples (pads contribute 0).
    ap = jnp.pad(a.astype(jnp.bfloat16), ((0, Mp - M), (0, Kp - K)))
    wp = jnp.pad(w.astype(jnp.bfloat16), ((0, Kp - K), (0, Np - N)))
    bp = jnp.pad(b.astype(jnp.float32), (0, Np - N)).reshape(1, Np)

    inputs = [ap, wp, bp]
    in_specs = [
        pl.BlockSpec((tm, tk), lambda i, j, k: (i, k)),
        pl.BlockSpec((tk, tn), lambda i, j, k: (k, j)),
        pl.BlockSpec((1, tn), lambda i, j, k: (0, j)),
    ]
    if skip is not None:
        sp = jnp.pad(skip.astype(jnp.float32), ((0, Mp - M), (0, Np - N)))
        inputs.append(sp)
        in_specs.append(pl.BlockSpec((tm, tn), lambda i, j, k: (i, j)))

    out = pl.pallas_call(
        functools.partial(_mm_kernel, relu_in=relu_in, relu_out=relu_out,
                          has_skip=skip is not None),
        out_shape=jax.ShapeDtypeStruct((Mp, Np), jnp.float32),
        grid_spec=pltpu.PrefetchScalarGridSpec(
            num_scalar_prefetch=0,
            grid=(Mp // tm, Np // tn, Kp // tk),
            in_specs=in_specs,
            out_specs=pl.BlockSpec((tm, tn), lambda i, j, k: (i, j)),
            scratch_shapes=[pltpu.VMEM((tm, tn), jnp.float32)],
        ),
        compiler_params=pltpu.CompilerParams(
            dimension_semantics=("parallel", "parallel", "arbitrary"),
            vmem_limit_bytes=32 * 1024 * 1024,
        ),
    )(*inputs)
    return out[:M, :N]


# --------------------------------------------------------------------------
# Vector quantizer kernel: nearest-code search + gather, counts reduced in-kernel
# --------------------------------------------------------------------------
def _vq_kernel(z_ref, e_ref, esq_ref, zq_ref, cnt_ref, *, m_real, tm):
    i = pl.program_id(0)

    @pl.when(i == 0)
    def _():
        cnt_ref[...] = jnp.zeros_like(cnt_ref)

    z = z_ref[...]                                   # (tm, Dp) flattened latents
    e = e_ref[...]                                   # (Kp, Dp) codebook (resident)
    # d_ij = ||z_i||^2 + ||e_j||^2 - 2 z_i . e_j  (padded codes get +1e30 -> never argmin)
    z2 = jnp.sum(z * z, axis=1, keepdims=True)       # (tm, 1)
    ze = jax.lax.dot_general(z, e, (((1,), (1,)), ((), ())),
                             preferred_element_type=jnp.float32)  # (tm, Kp)
    d = z2 + esq_ref[...] - 2.0 * ze
    dmin = jnp.min(d, axis=1, keepdims=True)
    col = jax.lax.broadcasted_iota(jnp.int32, d.shape, 1)
    idx = jnp.min(jnp.where(d == dmin, col, d.shape[1]), axis=1, keepdims=True)
    onehot = (col == idx).astype(jnp.float32)        # (tm, Kp) min-encodings
    zq_ref[...] = jnp.dot(onehot, e, preferred_element_type=jnp.float32)
    # accumulate per-code counts (masking the zero-padded rows of the M tail)
    row = jax.lax.broadcasted_iota(jnp.int32, (tm, 1), 0) + i * tm
    valid = (row < m_real).astype(jnp.float32)
    cnt_ref[...] += jnp.sum(onehot * valid, axis=0, keepdims=True)


def pallas_vector_quantize(z_flat, embedding):
    """Returns (z_q (M, D), per-code counts (K,)); one-hot never materialized."""
    M, D = z_flat.shape
    K, _ = embedding.shape
    tm = min(512, _round_up(M, 8))
    Mp = _round_up(M, tm)
    Dp = _round_up(D, 128)
    Kp = _round_up(K, 128)

    zp = jnp.pad(z_flat.astype(jnp.float32), ((0, Mp - M), (0, Dp - D)))
    ep = jnp.pad(embedding.astype(jnp.float32), ((0, Kp - K), (0, Dp - D)))
    esq = jnp.sum(embedding.astype(jnp.float32) ** 2, axis=1)
    esq = jnp.pad(esq, (0, Kp - K), constant_values=1e30).reshape(1, Kp)

    z_q, counts = pl.pallas_call(
        functools.partial(_vq_kernel, m_real=M, tm=tm),
        out_shape=(jax.ShapeDtypeStruct((Mp, Dp), jnp.float32),
                   jax.ShapeDtypeStruct((1, Kp), jnp.float32)),
        grid_spec=pltpu.PrefetchScalarGridSpec(
            num_scalar_prefetch=0,
            grid=(Mp // tm,),
            in_specs=[pl.BlockSpec((tm, Dp), lambda i: (i, 0)),
                      pl.BlockSpec((Kp, Dp), lambda i: (0, 0)),
                      pl.BlockSpec((1, Kp), lambda i: (0, 0))],
            out_specs=(pl.BlockSpec((tm, Dp), lambda i: (i, 0)),
                       pl.BlockSpec((1, Kp), lambda i: (0, 0))),
        ),
        compiler_params=pltpu.CompilerParams(
            dimension_semantics=("arbitrary",),   # counts reduce across M tiles
            vmem_limit_bytes=32 * 1024 * 1024,
        ),
    )(zp, ep, esq)
    return z_q[:M, :D], counts[0, :K]


# --------------------------------------------------------------------------
# Conv glue (NHWC): im2col (JAX data movement) + Pallas matmul
# --------------------------------------------------------------------------
def conv2d_nhwc(x, w, b, stride, padding, relu_in=False, relu_out=False, skip=None):
    """x: (N, H, W, Cin) NHWC; w: (Cout, Cin, kh, kw) torch layout; b: (Cout,) or None."""
    N, H, W, C = x.shape
    Cout, Cin, kh, kw = w.shape
    assert C == Cin
    Ho = (H + 2 * padding - kh) // stride + 1
    Wo = (W + 2 * padding - kw) // stride + 1
    xp = jnp.pad(x, ((0, 0), (padding, padding), (padding, padding), (0, 0)))
    # TODO(synk): im2col (kh*kw strided slices) is still XLA glue; folding the
    # patch walk into the kernel's index_map would remove the kh*kw HBM blow-up.
    cols = [xp[:, i:i + stride * Ho:stride, j:j + stride * Wo:stride, :]
            for i in range(kh) for j in range(kw)]
    patches = jnp.concatenate(cols, axis=-1).reshape(N * Ho * Wo, kh * kw * C)
    wmat = jnp.transpose(w, (2, 3, 1, 0)).reshape(kh * kw * Cin, Cout)
    bias = b if b is not None else jnp.zeros((Cout,), jnp.float32)
    skip_flat = None if skip is None else skip.reshape(N * Ho * Wo, Cout)
    out = pallas_matmul_bias(patches, wmat, bias, skip=skip_flat,
                             relu_in=relu_in, relu_out=relu_out)
    return out.reshape(N, Ho, Wo, Cout)


def conv_transpose2d_nhwc(x, w_t, b, stride, padding, relu_in=False, relu_out=False):
    """PyTorch ConvTranspose2d semantics; w_t: (Cin, Cout, kh, kw)."""
    N, H, W, C = x.shape
    Cin, Cout, kh, kw = w_t.shape
    assert C == Cin
    if stride > 1:
        # TODO(synk): zero-dilated full conv wastes ~(stride^2-1)/stride^2 of MXU
        # work; a stride^2 sub-convolution decomposition would remove it.
        Hd, Wd = (H - 1) * stride + 1, (W - 1) * stride + 1
        xd = jnp.zeros((N, Hd, Wd, C), x.dtype).at[:, ::stride, ::stride, :].set(x)
    else:
        xd = x
    # transposed conv == dilate input, flip kernel spatially, swap in/out chans
    w = jnp.flip(w_t, axis=(2, 3)).transpose(1, 0, 2, 3)      # (Cout, Cin, kh, kw)
    return conv2d_nhwc(xd, w, b, stride=1, padding=kh - 1 - padding,
                       relu_in=relu_in, relu_out=relu_out)


# --------------------------------------------------------------------------
# Model blocks
# --------------------------------------------------------------------------
def residual_stack(x, w3, w1, n_res_layers):
    # reference: nn.ModuleList([ResidualLayer(...)] * n) -> params SHARED across layers
    # TODO(synk): reference ResidualLayer uses nn.ReLU(inplace=True) which also mutates
    # the skip input; we implement the standard (non-inplace) residual x + F(x).
    for _ in range(n_res_layers):
        h = conv2d_nhwc(x, w3, None, stride=1, padding=1, relu_in=True, relu_out=True)
        x = conv2d_nhwc(h, w1, None, stride=1, padding=0, skip=x)   # fused residual add
    return x   # trailing stack ReLU is fused into the consumer's relu_in


def vqvae_forward(params, x, beta, n_res_layers):
    h = jnp.transpose(x, (0, 2, 3, 1))                        # NCHW -> NHWC (once)

    # ---------------- Encoder ----------------
    h = conv2d_nhwc(h, *params["enc_conv1"], stride=2, padding=1, relu_out=True)
    h = conv2d_nhwc(h, *params["enc_conv2"], stride=2, padding=1, relu_out=True)
    h = conv2d_nhwc(h, *params["enc_conv3"], stride=1, padding=1)
    h = residual_stack(h, params["enc_res"][0], params["enc_res"][1], n_res_layers)

    # -------- pre-quantization 1x1 conv (stack's trailing ReLU fused as relu_in) -----
    z_e = conv2d_nhwc(h, *params["pre_quant"], stride=1, padding=0, relu_in=True)

    # ---------------- Vector Quantizer ----------------
    N, H, W, D = z_e.shape
    z_flat = z_e.reshape(-1, D)
    z_q_flat, counts = pallas_vector_quantize(z_flat, params["embedding"])
    z_q = z_q_flat.reshape(N, H, W, D)

    # loss = mean((sg[z_q]-z)^2) + beta*mean((z_q-sg[z])^2); forward value == (1+beta)*mse
    # (gradient/detach placement of the reference is not reproduced — forward only)
    diff2 = (z_q - z_e) ** 2
    embedding_loss = (1.0 + beta) * jnp.mean(diff2)
    e_mean = counts / z_flat.shape[0]
    perplexity = jnp.exp(-jnp.sum(e_mean * jnp.log(e_mean + 1e-10)))

    # straight-through estimator: forward value of z + sg(z_q - z) == z_q

    # ---------------- Decoder ----------------
    d = conv_transpose2d_nhwc(z_q, *params["dec_convt1"], stride=1, padding=1)
    d = residual_stack(d, params["dec_res"][0], params["dec_res"][1], n_res_layers)
    d = conv_transpose2d_nhwc(d, *params["dec_convt2"], stride=2, padding=1,
                              relu_in=True, relu_out=True)
    x_hat_nhwc = conv_transpose2d_nhwc(d, *params["dec_convt3"], stride=2, padding=1)
    x_hat = jnp.transpose(x_hat_nhwc, (0, 3, 1, 2))           # NHWC -> NCHW (once)

    return embedding_loss, x_hat, perplexity


# --------------------------------------------------------------------------
# Deterministic parameter initialization (shapes from the module __init__)
# --------------------------------------------------------------------------
def init_params(key, in_dim, h_dim, res_h_dim, n_res_layers,
                n_embeddings, embedding_dim):
    keys = iter(jax.random.split(key, 64))

    def uni(shape, bound):
        return jax.random.uniform(next(keys), shape, jnp.float32, -bound, bound)

    def conv_p(cin, cout, k, bias=True):
        bound = (cin * k * k) ** -0.5
        w = uni((cout, cin, k, k), bound)
        b = uni((cout,), bound) if bias else None
        return w, b

    def convt_p(cin, cout, k, bias=True):
        bound = (cin * k * k) ** -0.5
        w = uni((cin, cout, k, k), bound)          # PyTorch ConvTranspose2d weight layout
        b = uni((cout,), bound) if bias else None
        return w, b

    params = {}
    params["enc_conv1"] = conv_p(in_dim, h_dim // 2, 4)
    params["enc_conv2"] = conv_p(h_dim // 2, h_dim, 4)
    params["enc_conv3"] = conv_p(h_dim, h_dim, 3)
    params["enc_res"] = (conv_p(h_dim, res_h_dim, 3, bias=False)[0],
                         conv_p(res_h_dim, h_dim, 1, bias=False)[0])
    params["pre_quant"] = conv_p(h_dim, embedding_dim, 1)
    params["embedding"] = uni((n_embeddings, embedding_dim), 1.0 / n_embeddings)
    params["dec_convt1"] = convt_p(embedding_dim, h_dim, 3)
    params["dec_res"] = (conv_p(h_dim, res_h_dim, 3, bias=False)[0],
                         conv_p(res_h_dim, h_dim, 1, bias=False)[0])
    params["dec_convt2"] = convt_p(h_dim, h_dim // 2, 4)
    params["dec_convt3"] = convt_p(h_dim // 2, in_dim, 4)
    return params


if __name__ == "__main__":
    in_dim, h_dim, res_h_dim = 3, 32, 16
    n_res_layers, n_embeddings, embedding_dim, beta = 2, 64, 8, 0.25

    key = jax.random.PRNGKey(0)
    k_x, k_p = jax.random.split(key)
    x = jax.random.normal(k_x, (2, in_dim, 16, 16), jnp.float32)
    params = init_params(k_p, in_dim, h_dim, res_h_dim, n_res_layers,
                         n_embeddings, embedding_dim)

    fwd = jax.jit(functools.partial(vqvae_forward, beta=beta,
                                    n_res_layers=n_res_layers))
    embedding_loss, x_hat, perplexity = fwd(params, x)
    jax.block_until_ready((embedding_loss, x_hat, perplexity))

    assert x_hat.shape == x.shape, x_hat.shape
    assert embedding_loss.shape == () and perplexity.shape == ()
    print("KERNEL_OK")
</pallas_src>

<mosaic_0001>
module attributes {stable_mosaic.version = 11 : i64} {
  func.func @_mm_kernel(%arg0: i32, %arg1: i32, %arg2: i32, %arg3: memref<128x128xbf16, #tpu.memory_space<vmem>>, %arg4: memref<128x128xbf16, #tpu.memory_space<vmem>>, %arg5: memref<1x128xf32, #tpu.memory_space<vmem>>, %arg6: memref<128x128xf32, #tpu.memory_space<vmem>>, %arg7: memref<128x128xf32, #tpu.memory_space<vmem>>) attributes {dimension_semantics = [#tpu.dimension_semantics<parallel>, #tpu.dimension_semantics<parallel>, #tpu.dimension_semantics<arbitrary>], iteration_bounds = array<i64: 1, 1, 1>, scalar_prefetch = 0 : i64, scratch_operands = 1 : i64, tpu.core_type = #tpu.core_type<tc>, window_params = [{transform_indices = @transform_0, window_bounds = array<i64: 128, 128>}, {transform_indices = @transform_1, window_bounds = array<i64: 128, 128>}, {transform_indices = @transform_2, window_bounds = array<i64: 1, 128>}, {transform_indices = @transform_3, window_bounds = array<i64: 128, 128>}]} {
    %c0_i32 = arith.constant 0 : i32
    %0 = arith.cmpi eq, %arg2, %c0_i32 : i32
    %1 = arith.extui %0 : i1 to i32
    %c0_i32_0 = arith.constant 0 : i32
    %2 = arith.cmpi ne, %1, %c0_i32_0 : i32
    scf.if %2 {
      %cst_10 = arith.constant 0.000000e+00 : f32
      %12 = vector.broadcast %cst_10 : f32 to vector<128x128xf32>
      %c0_11 = arith.constant 0 : index
      %c0_12 = arith.constant 0 : index
      %13 = vector.load %arg7[%c0_11, %c0_12] : memref<128x128xf32, #tpu.memory_space<vmem>>, vector<128x128xf32>
      tpu.vector_store %arg7[%c0_11, %c0_12], %12 {strides = array<i32>} : memref<128x128xf32, #tpu.memory_space<vmem>>, vector<128x128xf32>,
    } else {
    }
    %c0 = arith.constant 0 : index
    %c0_1 = arith.constant 0 : index
    %3 = vector.load %arg3[%c0, %c0_1] : memref<128x128xbf16, #tpu.memory_space<vmem>>, vector<128x128xbf16>
    %c0_2 = arith.constant 0 : index
    %c0_3 = arith.constant 0 : index
    %4 = vector.load %arg7[%c0_2, %c0_3] : memref<128x128xf32, #tpu.memory_space<vmem>>, vector<128x128xf32>
    %c0_4 = arith.constant 0 : index
    %c0_5 = arith.constant 0 : index
    %5 = vector.load %arg4[%c0_4, %c0_5] : memref<128x128xbf16, #tpu.memory_space<vmem>>, vector<128x128xbf16>
    %cst = arith.constant dense<0.000000e+00> : vector<128x128xf32>
    %6 = tpu.matmul %3, %5, %cst {dimension_numbers = #tpu.dot_dimension_numbers<[1], [0], [0], [1], [0, 0, 1, 1], [], []>} : vector<128x128xbf16>, vector<128x128xbf16>, vector<128x128xf32> -> vector<128x128xf32>
    %7 = arith.addf %4, %6 : vector<128x128xf32>
    %c0_6 = arith.constant 0 : index
    %c0_7 = arith.constant 0 : index
    %8 = vector.load %arg7[%c0_6, %c0_7] : memref<128x128xf32, #tpu.memory_space<vmem>>, vector<128x128xf32>
    tpu.vector_store %arg7[%c0_6, %c0_7], %7 {strides = array<i32>} : memref<128x128xf32, #tpu.memory_space<vmem>>, vector<128x128xf32>,
    %c0_i32_8 = arith.constant 0 : i32
    %9 = arith.cmpi eq, %arg2, %c0_i32_8 : i32
    %10 = arith.extui %9 : i1 to i32
    %c0_i32_9 = arith.constant 0 : i32
    %11 = arith.cmpi ne, %10, %c0_i32_9 : i32
    scf.if %11 {
      %c0_10 = arith.constant 0 : index
      %c0_11 = arith.constant 0 : index
      %12 = vector.load %arg7[%c0_10, %c0_11] : memref<128x128xf32, #tpu.memory_space<vmem>>, vector<128x128xf32>
      %c0_12 = arith.constant 0 : index
      %c0_13 = arith.constant 0 : index
      %13 = vector.load %arg5[%c0_12, %c0_13] : memref<1x128xf32, #tpu.memory_space<vmem>>, vector<1x128xf32>
      %14 = vector.broadcast %13 : vector<1x128xf32> to vector<128x128xf32>
      %15 = arith.addf %12, %14 : vector<128x128xf32>
      %cst_14 = arith.constant 0.000000e+00 : f32
      %16 = vector.broadcast %cst_14 : f32 to vector<128x128xf32>
      %17 = arith.maximumf %15, %16 : vector<128x128xf32>
      %c0_15 = arith.constant 0 : index
      %c0_16 = arith.constant 0 : index
      %18 = vector.load %arg6[%c0_15, %c0_16] : memref<128x128xf32, #tpu.memory_space<vmem>>, vector<128x128xf32>
      tpu.vector_store %arg6[%c0_15, %c0_16], %17 {strides = array<i32>} : memref<128x128xf32, #tpu.memory_space<vmem>>, vector<128x128xf32>,
    } else {
    }
    return
  }
  func.func @transform_0(%arg0: i32, %arg1: i32, %arg2: i32) -> (i32, i32) {
    %c0_i32 = arith.constant 0 : i32
    return %arg0, %arg2 : i32, i32
  }
  func.func @transform_1(%arg0: i32, %arg1: i32, %arg2: i32) -> (i32, i32) {
    %c0_i32 = arith.constant 0 : i32
    return %arg2, %arg1 : i32, i32
  }
  func.func @transform_2(%arg0: i32, %arg1: i32, %arg2: i32) -> (i32, i32) {
    %c0_i32 = arith.constant 0 : i32
    %c0_i32_0 = arith.constant 0 : i32
    return %c0_i32, %arg1 : i32, i32
  }
  func.func @transform_3(%arg0: i32, %arg1: i32, %arg2: i32) -> (i32, i32) {
    %c0_i32 = arith.constant 0 : i32
    return %arg0, %arg1 : i32, i32
  }
}

module attributes {stable_mosaic.version = 11 : i64} {
  func.func @_mm_kernel(%arg0: i32, %arg1: i32, %arg2: i32, %arg3: memref<32x256xbf16, #tpu.memory_space<vmem>>, %arg4: memref<256x128xbf16, #tpu.memory_space<vmem>>, %arg5: memref<1x128xf32, #tpu.memory_space<vmem>>, %arg6: memref<32x128xf32, #tpu.memory_space<vmem>>, %arg7: memref<32x128xf32, #tpu.memory_space<vmem>>) attributes {dimension_semantics = [#tpu.dimension_semantics<parallel>, #tpu.dimension_semantics<parallel>, #tpu.dimension_semantics<arbitrary>], iteration_bounds = array<i64: 1, 1, 1>, scalar_prefetch = 0 : i64, scratch_operands = 1 : i64, tpu.core_type = #tpu.core_type<tc>, window_params = [{transform_indices = @transform_0, window_bounds = array<i64: 32, 256>}, {transform_indices = @transform_1, window_bounds = array<i64: 256, 128>}, {transform_indices = @transform_2, window_bounds = array<i64: 1, 128>}, {transform_indices = @transform_3, window_bounds = array<i64: 32, 128>}]} {
    %c0_i32 = arith.constant 0 : i32
    %0 = arith.cmpi eq, %arg2, %c0_i32 : i32
    %1 = arith.extui %0 : i1 to i32
    %c0_i32_0 = arith.constant 0 : i32
    %2 = arith.cmpi ne, %1, %c0_i32_0 : i32
    scf.if %2 {
      %cst_10 = arith.constant 0.000000e+00 : f32
      %12 = vector.broadcast %cst_10 : f32 to vector<32x128xf32>
      %c0_11 = arith.constant 0 : index
      %c0_12 = arith.constant 0 : index
      %13 = vector.load %arg7[%c0_11, %c0_12] : memref<32x128xf32, #tpu.memory_space<vmem>>, vector<32x128xf32>
      tpu.vector_store %arg7[%c0_11, %c0_12], %12 {strides = array<i32>} : memref<32x128xf32, #tpu.memory_space<vmem>>, vector<32x128xf32>,
    } else {
    }
    %c0 = arith.constant 0 : index
    %c0_1 = arith.constant 0 : index
    %3 = vector.load %arg3[%c0, %c0_1] : memref<32x256xbf16, #tpu.memory_space<vmem>>, vector<32x256xbf16>
    %c0_2 = arith.constant 0 : index
    %c0_3 = arith.constant 0 : index
    %4 = vector.load %arg7[%c0_2, %c0_3] : memref<32x128xf32, #tpu.memory_space<vmem>>, vector<32x128xf32>
    %c0_4 = arith.constant 0 : index
    %c0_5 = arith.constant 0 : index
    %5 = vector.load %arg4[%c0_4, %c0_5] : memref<256x128xbf16, #tpu.memory_space<vmem>>, vector<256x128xbf16>
    %cst = arith.constant dense<0.000000e+00> : vector<32x128xf32>
    %6 = tpu.matmul %3, %5, %cst {dimension_numbers = #tpu.dot_dimension_numbers<[1], [0], [0], [1], [0, 0, 1, 1], [], []>} : vector<32x256xbf16>, vector<256x128xbf16>, vector<32x128xf32> -> vector<32x128xf32>
    %7 = arith.addf %4, %6 : vector<32x128xf32>
    %c0_6 = arith.constant 0 : index
    %c0_7 = arith.constant 0 : index
    %8 = vector.load %arg7[%c0_6, %c0_7] : memref<32x128xf32, #tpu.memory_space<vmem>>, vector<32x128xf32>
    tpu.vector_store %arg7[%c0_6, %c0_7], %7 {strides = array<i32>} : memref<32x128xf32, #tpu.memory_space<vmem>>, vector<32x128xf32>,
    %c0_i32_8 = arith.constant 0 : i32
    %9 = arith.cmpi eq, %arg2, %c0_i32_8 : i32
    %10 = arith.extui %9 : i1 to i32
    %c0_i32_9 = arith.constant 0 : i32
    %11 = arith.cmpi ne, %10, %c0_i32_9 : i32
    scf.if %11 {
      %c0_10 = arith.constant 0 : index
      %c0_11 = arith.constant 0 : index
      %12 = vector.load %arg7[%c0_10, %c0_11] : memref<32x128xf32, #tpu.memory_space<vmem>>, vector<32x128xf32>
      %c0_12 = arith.constant 0 : index
      %c0_13 = arith.constant 0 : index
      %13 = vector.load %arg5[%c0_12, %c0_13] : memref<1x128xf32, #tpu.memory_space<vmem>>, vector<1x128xf32>
      %14 = vector.broadcast %13 : vector<1x128xf32> to vector<32x128xf32>
      %15 = arith.addf %12, %14 : vector<32x128xf32>
      %cst_14 = arith.constant 0.000000e+00 : f32
      %16 = vector.broadcast %cst_14 : f32 to vector<32x128xf32>
      %17 = arith.maximumf %15, %16 : vector<32x128xf32>
      %c0_15 = arith.constant 0 : index
      %c0_16 = arith.constant 0 : index
      %18 = vector.load %arg6[%c0_15, %c0_16] : memref<32x128xf32, #tpu.memory_space<vmem>>, vector<32x128xf32>
      tpu.vector_store %arg6[%c0_15, %c0_16], %17 {strides = array<i32>} : memref<32x128xf32, #tpu.memory_space<vmem>>, vector<32x128xf32>,
    } else {
    }
    return
  }
  func.func @transform_0(%arg0: i32, %arg1: i32, %arg2: i32) -> (i32, i32) {
    %c0_i32 = arith.constant 0 : i32
    return %arg0, %arg2 : i32, i32
  }
  func.func @transform_1(%arg0: i32, %arg1: i32, %arg2: i32) -> (i32, i32) {
    %c0_i32 = arith.constant 0 : i32
    return %arg2, %arg1 : i32, i32
  }
  func.func @transform_2(%arg0: i32, %arg1: i32, %arg2: i32) -> (i32, i32) {
    %c0_i32 = arith.constant 0 : i32
    %c0_i32_0 = arith.constant 0 : i32
    return %c0_i32, %arg1 : i32, i32
  }
  func.func @transform_3(%arg0: i32, %arg1: i32, %arg2: i32) -> (i32, i32) {
    %c0_i32 = arith.constant 0 : i32
    return %arg0, %arg1 : i32, i32
  }
}

module attributes {stable_mosaic.version = 11 : i64} {
  func.func @_mm_kernel(%arg0: i32, %arg1: i32, %arg2: i32, %arg3: memref<32x384xbf16, #tpu.memory_space<vmem>>, %arg4: memref<384x128xbf16, #tpu.memory_space<vmem>>, %arg5: memref<1x128xf32, #tpu.memory_space<vmem>>, %arg6: memref<32x128xf32, #tpu.memory_space<vmem>>, %arg7: memref<32x128xf32, #tpu.memory_space<vmem>>) attributes {dimension_semantics = [#tpu.dimension_semantics<parallel>, #tpu.dimension_semantics<parallel>, #tpu.dimension_semantics<arbitrary>], iteration_bounds = array<i64: 1, 1, 1>, scalar_prefetch = 0 : i64, scratch_operands = 1 : i64, tpu.core_type = #tpu.core_type<tc>, window_params = [{transform_indices = @transform_0, window_bounds = array<i64: 32, 384>}, {transform_indices = @transform_1, window_bounds = array<i64: 384, 128>}, {transform_indices = @transform_2, window_bounds = array<i64: 1, 128>}, {transform_indices = @transform_3, window_bounds = array<i64: 32, 128>}]} {
    %c0_i32 = arith.constant 0 : i32
    %0 = arith.cmpi eq, %arg2, %c0_i32 : i32
    %1 = arith.extui %0 : i1 to i32
    %c0_i32_0 = arith.constant 0 : i32
    %2 = arith.cmpi ne, %1, %c0_i32_0 : i32
    scf.if %2 {
      %cst_10 = arith.constant 0.000000e+00 : f32
      %12 = vector.broadcast %cst_10 : f32 to vector<32x128xf32>
      %c0_11 = arith.constant 0 : index
      %c0_12 = arith.constant 0 : index
      %13 = vector.load %arg7[%c0_11, %c0_12] : memref<32x128xf32, #tpu.memory_space<vmem>>, vector<32x128xf32>
      tpu.vector_store %arg7[%c0_11, %c0_12], %12 {strides = array<i32>} : memref<32x128xf32, #tpu.memory_space<vmem>>, vector<32x128xf32>,
    } else {
    }
    %c0 = arith.constant 0 : index
    %c0_1 = arith.constant 0 : index
    %3 = vector.load %arg3[%c0, %c0_1] : memref<32x384xbf16, #tpu.memory_space<vmem>>, vector<32x384xbf16>
    %c0_2 = arith.constant 0 : index
    %c0_3 = arith.constant 0 : index
    %4 = vector.load %arg7[%c0_2, %c0_3] : memref<32x128xf32, #tpu.memory_space<vmem>>, vector<32x128xf32>
    %c0_4 = arith.constant 0 : index
    %c0_5 = arith.constant 0 : index
    %5 = vector.load %arg4[%c0_4, %c0_5] : memref<384x128xbf16, #tpu.memory_space<vmem>>, vector<384x128xbf16>
    %cst = arith.constant dense<0.000000e+00> : vector<32x128xf32>
    %6 = tpu.matmul %3, %5, %cst {dimension_numbers = #tpu.dot_dimension_numbers<[1], [0], [0], [1], [0, 0, 1, 1], [], []>} : vector<32x384xbf16>, vector<384x128xbf16>, vector<32x128xf32> -> vector<32x128xf32>
    %7 = arith.addf %4, %6 : vector<32x128xf32>
    %c0_6 = arith.constant 0 : index
    %c0_7 = arith.constant 0 : index
    %8 = vector.load %arg7[%c0_6, %c0_7] : memref<32x128xf32, #tpu.memory_space<vmem>>, vector<32x128xf32>
    tpu.vector_store %arg7[%c0_6, %c0_7], %7 {strides = array<i32>} : memref<32x128xf32, #tpu.memory_space<vmem>>, vector<32x128xf32>,
    %c0_i32_8 = arith.constant 0 : i32
    %9 = arith.cmpi eq, %arg2, %c0_i32_8 : i32
    %10 = arith.extui %9 : i1 to i32
    %c0_i32_9 = arith.constant 0 : i32
    %11 = arith.cmpi ne, %10, %c0_i32_9 : i32
    scf.if %11 {
      %c0_10 = arith.constant 0 : index
      %c0_11 = arith.constant 0 : index
      %12 = vector.load %arg7[%c0_10, %c0_11] : memref<32x128xf32, #tpu.memory_space<vmem>>, vector<32x128xf32>
      %c0_12 = arith.constant 0 : index
      %c0_13 = arith.constant 0 : index
      %13 = vector.load %arg5[%c0_12, %c0_13] : memref<1x128xf32, #tpu.memory_space<vmem>>, vector<1x128xf32>
      %14 = vector.broadcast %13 : vector<1x128xf32> to vector<32x128xf32>
      %15 = arith.addf %12, %14 : vector<32x128xf32>
      %c0_14 = arith.constant 0 : index
      %c0_15 = arith.constant 0 : index
      %16 = vector.load %arg6[%c0_14, %c0_15] : memref<32x128xf32, #tpu.memory_space<vmem>>, vector<32x128xf32>
      tpu.vector_store %arg6[%c0_14, %c0_15], %15 {strides = array<i32>} : memref<32x128xf32, #tpu.memory_space<vmem>>, vector<32x128xf32>,
    } else {
    }
    return
  }
  func.func @transform_0(%arg0: i32, %arg1: i32, %arg2: i32) -> (i32, i32) {
    %c0_i32 = arith.constant 0 : i32
    return %arg0, %arg2 : i32, i32
  }
  func.func @transform_1(%arg0: i32, %arg1: i32, %arg2: i32) -> (i32, i32) {
    %c0_i32 = arith.constant 0 : i32
    return %arg2, %arg1 : i32, i32
  }
  func.func @transform_2(%arg0: i32, %arg1: i32, %arg2: i32) -> (i32, i32) {
    %c0_i32 = arith.constant 0 : i32
    %c0_i32_0 = arith.constant 0 : i32
    return %c0_i32, %arg1 : i32, i32
  }
  func.func @transform_3(%arg0: i32, %arg1: i32, %arg2: i32) -> (i32, i32) {
    %c0_i32 = arith.constant 0 : i32
    return %arg0, %arg1 : i32, i32
  }
}

module attributes {stable_mosaic.version = 11 : i64} {
  func.func @_mm_kernel(%arg0: i32, %arg1: i32, %arg2: i32, %arg3: memref<32x384xbf16, #tpu.memory_space<vmem>>, %arg4: memref<384x128xbf16, #tpu.memory_space<vmem>>, %arg5: memref<1x128xf32, #tpu.memory_space<vmem>>, %arg6: memref<32x128xf32, #tpu.memory_space<vmem>>, %arg7: memref<32x128xf32, #tpu.memory_space<vmem>>) attributes {dimension_semantics = [#tpu.dimension_semantics<parallel>, #tpu.dimension_semantics<parallel>, #tpu.dimension_semantics<arbitrary>], iteration_bounds = array<i64: 1, 1, 1>, scalar_prefetch = 0 : i64, scratch_operands = 1 : i64, tpu.core_type = #tpu.core_type<tc>, window_params = [{transform_indices = @transform_0, window_bounds = array<i64: 32, 384>}, {transform_indices = @transform_1, window_bounds = array<i64: 384, 128>}, {transform_indices = @transform_2, window_bounds = array<i64: 1, 128>}, {transform_indices = @transform_3, window_bounds = array<i64: 32, 128>}]} {
    %c0_i32 = arith.constant 0 : i32
    %0 = arith.cmpi eq, %arg2, %c0_i32 : i32
    %1 = arith.extui %0 : i1 to i32
    %c0_i32_0 = arith.constant 0 : i32
    %2 = arith.cmpi ne, %1, %c0_i32_0 : i32
    scf.if %2 {
      %cst_11 = arith.constant 0.000000e+00 : f32
      %14 = vector.broadcast %cst_11 : f32 to vector<32x128xf32>
      %c0_12 = arith.constant 0 : index
      %c0_13 = arith.constant 0 : index
      %15 = vector.load %arg7[%c0_12, %c0_13] : memref<32x128xf32, #tpu.memory_space<vmem>>, vector<32x128xf32>
      tpu.vector_store %arg7[%c0_12, %c0_13], %14 {strides = array<i32>} : memref<32x128xf32, #tpu.memory_space<vmem>>, vector<32x128xf32>,
    } else {
    }
    %c0 = arith.constant 0 : index
    %c0_1 = arith.constant 0 : index
    %3 = vector.load %arg3[%c0, %c0_1] : memref<32x384xbf16, #tpu.memory_space<vmem>>, vector<32x384xbf16>
    %cst = arith.constant 0.000000e+00 : bf16
    %4 = vector.broadcast %cst : bf16 to vector<32x384xbf16>
    %5 = arith.maximumf %3, %4 : vector<32x384xbf16>
    %c0_2 = arith.constant 0 : index
    %c0_3 = arith.constant 0 : index
    %6 = vector.load %arg7[%c0_2, %c0_3] : memref<32x128xf32, #tpu.memory_space<vmem>>, vector<32x128xf32>
    %c0_4 = arith.constant 0 : index
    %c0_5 = arith.constant 0 : index
    %7 = vector.load %arg4[%c0_4, %c0_5] : memref<384x128xbf16, #tpu.memory_space<vmem>>, vector<384x128xbf16>
    %cst_6 = arith.constant dense<0.000000e+00> : vector<32x128xf32>
    %8 = tpu.matmul %5, %7, %cst_6 {dimension_numbers = #tpu.dot_dimension_numbers<[1], [0], [0], [1], [0, 0, 1, 1], [], []>} : vector<32x384xbf16>, vector<384x128xbf16>, vector<32x128xf32> -> vector<32x128xf32>
    %9 = arith.addf %6, %8 : vector<32x128xf32>
    %c0_7 = arith.constant 0 : index
    %c0_8 = arith.constant 0 : index
    %10 = vector.load %arg7[%c0_7, %c0_8] : memref<32x128xf32, #tpu.memory_space<vmem>>, vector<32x128xf32>
    tpu.vector_store %arg7[%c0_7, %c0_8], %9 {strides = array<i32>} : memref<32x128xf32, #tpu.memory_space<vmem>>, vector<32x128xf32>,
    %c0_i32_9 = arith.constant 0 : i32
    %11 = arith.cmpi eq, %arg2, %c0_i32_9 : i32
    %12 = arith.extui %11 : i1 to i32
    %c0_i32_10 = arith.constant 0 : i32
    %13 = arith.cmpi ne, %12, %c0_i32_10 : i32
    scf.if %13 {
      %c0_11 = arith.constant 0 : index
      %c0_12 = arith.constant 0 : index
      %14 = vector.load %arg7[%c0_11, %c0_12] : memref<32x128xf32, #tpu.memory_space<vmem>>, vector<32x128xf32>
      %c0_13 = arith.constant 0 : index
      %c0_14 = arith.constant 0 : index
      %15 = vector.load %arg5[%c0_13, %c0_14] : memref<1x128xf32, #tpu.memory_space<vmem>>, vector<1x128xf32>
      %16 = vector.broadcast %15 : vector<1x128xf32> to vector<32x128xf32>
      %17 = arith.addf %14, %16 : vector<32x128xf32>
      %cst_15 = arith.constant 0.000000e+00 : f32
      %18 = vector.broadcast %cst_15 : f32 to vector<32x128xf32>
      %19 = arith.maximumf %17, %18 : vector<32x128xf32>
      %c0_16 = arith.constant 0 : index
      %c0_17 = arith.constant 0 : index
      %20 = vector.load %arg6[%c0_16, %c0_17] : memref<32x128xf32, #tpu.memory_space<vmem>>, vector<32x128xf32>
      tpu.vector_store %arg6[%c0_16, %c0_17], %19 {strides = array<i32>} : memref<32x128xf32, #tpu.memory_space<vmem>>, vector<32x128xf32>,
    } else {
    }
    return
  }
  func.func @transform_0(%arg0: i32, %arg1: i32, %arg2: i32) -> (i32, i32) {
    %c0_i32 = arith.constant 0 : i32
    return %arg0, %arg2 : i32, i32
  }
  func.func @transform_1(%arg0: i32, %arg1: i32, %arg2: i32) -> (i32, i32) {
    %c0_i32 = arith.constant 0 : i32
    return %arg2, %arg1 : i32, i32
  }
  func.func @transform_2(%arg0: i32, %arg1: i32, %arg2: i32) -> (i32, i32) {
    %c0_i32 = arith.constant 0 : i32
    %c0_i32_0 = arith.constant 0 : i32
    return %c0_i32, %arg1 : i32, i32
  }
  func.func @transform_3(%arg0: i32, %arg1: i32, %arg2: i32) -> (i32, i32) {
    %c0_i32 = arith.constant 0 : i32
    return %arg0, %arg1 : i32, i32
  }
}

module attributes {stable_mosaic.version = 11 : i64} {
  func.func @_mm_kernel(%arg0: i32, %arg1: i32, %arg2: i32, %arg3: memref<32x128xbf16, #tpu.memory_space<vmem>>, %arg4: memref<128x128xbf16, #tpu.memory_space<vmem>>, %arg5: memref<1x128xf32, #tpu.memory_space<vmem>>, %arg6: memref<32x128xf32, #tpu.memory_space<vmem>>, %arg7: memref<32x128xf32, #tpu.memory_space<vmem>>, %arg8: memref<32x128xf32, #tpu.memory_space<vmem>>) attributes {dimension_semantics = [#tpu.dimension_semantics<parallel>, #tpu.dimension_semantics<parallel>, #tpu.dimension_semantics<arbitrary>], iteration_bounds = array<i64: 1, 1, 1>, scalar_prefetch = 0 : i64, scratch_operands = 1 : i64, tpu.core_type = #tpu.core_type<tc>, window_params = [{transform_indices = @transform_0, window_bounds = array<i64: 32, 128>}, {transform_indices = @transform_1, window_bounds = array<i64: 128, 128>}, {transform_indices = @transform_2, window_bounds = array<i64: 1, 128>}, {transform_indices = @transform_3, window_bounds = array<i64: 32, 128>}, {transform_indices = @transform_4, window_bounds = array<i64: 32, 128>}]} {
    %c0_i32 = arith.constant 0 : i32
    %0 = arith.cmpi eq, %arg2, %c0_i32 : i32
    %1 = arith.extui %0 : i1 to i32
    %c0_i32_0 = arith.constant 0 : i32
    %2 = arith.cmpi ne, %1, %c0_i32_0 : i32
    scf.if %2 {
      %cst_10 = arith.constant 0.000000e+00 : f32
      %12 = vector.broadcast %cst_10 : f32 to vector<32x128xf32>
      %c0_11 = arith.constant 0 : index
      %c0_12 = arith.constant 0 : index
      %13 = vector.load %arg8[%c0_11, %c0_12] : memref<32x128xf32, #tpu.memory_space<vmem>>, vector<32x128xf32>
      tpu.vector_store %arg8[%c0_11, %c0_12], %12 {strides = array<i32>} : memref<32x128xf32, #tpu.memory_space<vmem>>, vector<32x128xf32>,
    } else {
    }
    %c0 = arith.constant 0 : index
    %c0_1 = arith.constant 0 : index
    %3 = vector.load %arg3[%c0, %c0_1] : memref<32x128xbf16, #tpu.memory_space<vmem>>, vector<32x128xbf16>
    %c0_2 = arith.constant 0 : index
    %c0_3 = arith.constant 0 : index
    %4 = vector.load %arg8[%c0_2, %c0_3] : memref<32x128xf32, #tpu.memory_space<vmem>>, vector<32x128xf32>
    %c0_4 = arith.constant 0 : index
    %c0_5 = arith.constant 0 : index
    %5 = vector.load %arg4[%c0_4, %c0_5] : memref<128x128xbf16, #tpu.memory_space<vmem>>, vector<128x128xbf16>
    %cst = arith.constant dense<0.000000e+00> : vector<32x128xf32>
    %6 = tpu.matmul %3, %5, %cst {dimension_numbers = #tpu.dot_dimension_numbers<[1], [0], [0], [1], [0, 0, 1, 1], [], []>} : vector<32x128xbf16>, vector<128x128xbf16>, vector<32x128xf32> -> vector<32x128xf32>
    %7 = arith.addf %4, %6 : vector<32x128xf32>
    %c0_6 = arith.constant 0 : index
    %c0_7 = arith.constant 0 : index
    %8 = vector.load %arg8[%c0_6, %c0_7] : memref<32x128xf32, #tpu.memory_space<vmem>>, vector<32x128xf32>
    tpu.vector_store %arg8[%c0_6, %c0_7], %7 {strides = array<i32>} : memref<32x128xf32, #tpu.memory_space<vmem>>, vector<32x128xf32>,
    %c0_i32_8 = arith.constant 0 : i32
    %9 = arith.cmpi eq, %arg2, %c0_i32_8 : i32
    %10 = arith.extui %9 : i1 to i32
    %c0_i32_9 = arith.constant 0 : i32
    %11 = arith.cmpi ne, %10, %c0_i32_9 : i32
    scf.if %11 {
      %c0_10 = arith.constant 0 : index
      %c0_11 = arith.constant 0 : index
      %12 = vector.load %arg8[%c0_10, %c0_11] : memref<32x128xf32, #tpu.memory_space<vmem>>, vector<32x128xf32>
      %c0_12 = arith.constant 0 : index
      %c0_13 = arith.constant 0 : index
      %13 = vector.load %arg5[%c0_12, %c0_13] : memref<1x128xf32, #tpu.memory_space<vmem>>, vector<1x128xf32>
      %14 = vector.broadcast %13 : vector<1x128xf32> to vector<32x128xf32>
      %15 = arith.addf %12, %14 : vector<32x128xf32>
      %c0_14 = arith.constant 0 : index
      %c0_15 = arith.constant 0 : index
      %16 = vector.load %arg6[%c0_14, %c0_15] : memref<32x128xf32, #tpu.memory_space<vmem>>, vector<32x128xf32>
      %17 = arith.addf %15, %16 : vector<32x128xf32>
      %c0_16 = arith.constant 0 : index
      %c0_17 = arith.constant 0 : index
      %18 = vector.load %arg7[%c0_16, %c0_17] : memref<32x128xf32, #tpu.memory_space<vmem>>, vector<32x128xf32>
      tpu.vector_store %arg7[%c0_16, %c0_17], %17 {strides = array<i32>} : memref<32x128xf32, #tpu.memory_space<vmem>>, vector<32x128xf32>,
    } else {
    }
    return
  }
  func.func @transform_0(%arg0: i32, %arg1: i32, %arg2: i32) -> (i32, i32) {
    %c0_i32 = arith.constant 0 : i32
    return %arg0, %arg2 : i32, i32
  }
  func.func @transform_1(%arg0: i32, %arg1: i32, %arg2: i32) -> (i32, i32) {
    %c0_i32 = arith.constant 0 : i32
    return %arg2, %arg1 : i32, i32
  }
  func.func @transform_2(%arg0: i32, %arg1: i32, %arg2: i32) -> (i32, i32) {
    %c0_i32 = arith.constant 0 : i32
    %c0_i32_0 = arith.constant 0 : i32
    return %c0_i32, %arg1 : i32, i32
  }
  func.func @transform_3(%arg0: i32, %arg1: i32, %arg2: i32) -> (i32, i32) {
    %c0_i32 = arith.constant 0 : i32
    return %arg0, %arg1 : i32, i32
  }
  func.func @transform_4(%arg0: i32, %arg1: i32, %arg2: i32) -> (i32, i32) {
    %c0_i32 = arith.constant 0 : i32
    return %arg0, %arg1 : i32, i32
  }
}

module attributes {stable_mosaic.version = 11 : i64} {
  func.func @_mm_kernel(%arg0: i32, %arg1: i32, %arg2: i32, %arg3: memref<32x128xbf16, #tpu.memory_space<vmem>>, %arg4: memref<128x128xbf16, #tpu.memory_space<vmem>>, %arg5: memref<1x128xf32, #tpu.memory_space<vmem>>, %arg6: memref<32x128xf32, #tpu.memory_space<vmem>>, %arg7: memref<32x128xf32, #tpu.memory_space<vmem>>) attributes {dimension_semantics = [#tpu.dimension_semantics<parallel>, #tpu.dimension_semantics<parallel>, #tpu.dimension_semantics<arbitrary>], iteration_bounds = array<i64: 1, 1, 1>, scalar_prefetch = 0 : i64, scratch_operands = 1 : i64, tpu.core_type = #tpu.core_type<tc>, window_params = [{transform_indices = @transform_0, window_bounds = array<i64: 32, 128>}, {transform_indices = @transform_1, window_bounds = array<i64: 128, 128>}, {transform_indices = @transform_2, window_bounds = array<i64: 1, 128>}, {transform_indices = @transform_3, window_bounds = array<i64: 32, 128>}]} {
    %c0_i32 = arith.constant 0 : i32
    %0 = arith.cmpi eq, %arg2, %c0_i32 : i32
    %1 = arith.extui %0 : i1 to i32
    %c0_i32_0 = arith.constant 0 : i32
    %2 = arith.cmpi ne, %1, %c0_i32_0 : i32
    scf.if %2 {
      %cst_11 = arith.constant 0.000000e+00 : f32
      %14 = vector.broadcast %cst_11 : f32 to vector<32x128xf32>
      %c0_12 = arith.constant 0 : index
      %c0_13 = arith.constant 0 : index
      %15 = vector.load %arg7[%c0_12, %c0_13] : memref<32x128xf32, #tpu.memory_space<vmem>>, vector<32x128xf32>
      tpu.vector_store %arg7[%c0_12, %c0_13], %14 {strides = array<i32>} : memref<32x128xf32, #tpu.memory_space<vmem>>, vector<32x128xf32>,
    } else {
    }
    %c0 = arith.constant 0 : index
    %c0_1 = arith.constant 0 : index
    %3 = vector.load %arg3[%c0, %c0_1] : memref<32x128xbf16, #tpu.memory_space<vmem>>, vector<32x128xbf16>
    %cst = arith.constant 0.000000e+00 : bf16
    %4 = vector.broadcast %cst : bf16 to vector<32x128xbf16>
    %5 = arith.maximumf %3, %4 : vector<32x128xbf16>
    %c0_2 = arith.constant 0 : index
    %c0_3 = arith.constant 0 : index
    %6 = vector.load %arg7[%c0_2, %c0_3] : memref<32x128xf32, #tpu.memory_space<vmem>>, vector<32x128xf32>
    %c0_4 = arith.constant 0 : index
    %c0_5 = arith.constant 0 : index
    %7 = vector.load %arg4[%c0_4, %c0_5] : memref<128x128xbf16, #tpu.memory_space<vmem>>, vector<128x128xbf16>
    %cst_6 = arith.constant dense<0.000000e+00> : vector<32x128xf32>
    %8 = tpu.matmul %5, %7, %cst_6 {dimension_numbers = #tpu.dot_dimension_numbers<[1], [0], [0], [1], [0, 0, 1, 1], [], []>} : vector<32x128xbf16>, vector<128x128xbf16>, vector<32x128xf32> -> vector<32x128xf32>
    %9 = arith.addf %6, %8 : vector<32x128xf32>
    %c0_7 = arith.constant 0 : index
    %c0_8 = arith.constant 0 : index
    %10 = vector.load %arg7[%c0_7, %c0_8] : memref<32x128xf32, #tpu.memory_space<vmem>>, vector<32x128xf32>
    tpu.vector_store %arg7[%c0_7, %c0_8], %9 {strides = array<i32>} : memref<32x128xf32, #tpu.memory_space<vmem>>, vector<32x128xf32>,
    %c0_i32_9 = arith.constant 0 : i32
    %11 = arith.cmpi eq, %arg2, %c0_i32_9 : i32
    %12 = arith.extui %11 : i1 to i32
    %c0_i32_10 = arith.constant 0 : i32
    %13 = arith.cmpi ne, %12, %c0_i32_10 : i32
    scf.if %13 {
      %c0_11 = arith.constant 0 : index
      %c0_12 = arith.constant 0 : index
      %14 = vector.load %arg7[%c0_11, %c0_12] : memref<32x128xf32, #tpu.memory_space<vmem>>, vector<32x128xf32>
      %c0_13 = arith.constant 0 : index
      %c0_14 = arith.constant 0 : index
      %15 = vector.load %arg5[%c0_13, %c0_14] : memref<1x128xf32, #tpu.memory_space<vmem>>, vector<1x128xf32>
      %16 = vector.broadcast %15 : vector<1x128xf32> to vector<32x128xf32>
      %17 = arith.addf %14, %16 : vector<32x128xf32>
      %c0_15 = arith.constant 0 : index
      %c0_16 = arith.constant 0 : index
      %18 = vector.load %arg6[%c0_15, %c0_16] : memref<32x128xf32, #tpu.memory_space<vmem>>, vector<32x128xf32>
      tpu.vector_store %arg6[%c0_15, %c0_16], %17 {strides = array<i32>} : memref<32x128xf32, #tpu.memory_space<vmem>>, vector<32x128xf32>,
    } else {
    }
    return
  }
  func.func @transform_0(%arg0: i32, %arg1: i32, %arg2: i32) -> (i32, i32) {
    %c0_i32 = arith.constant 0 : i32
    return %arg0, %arg2 : i32, i32
  }
  func.func @transform_1(%arg0: i32, %arg1: i32, %arg2: i32) -> (i32, i32) {
    %c0_i32 = arith.constant 0 : i32
    return %arg2, %arg1 : i32, i32
  }
  func.func @transform_2(%arg0: i32, %arg1: i32, %arg2: i32) -> (i32, i32) {
    %c0_i32 = arith.constant 0 : i32
    %c0_i32_0 = arith.constant 0 : i32
    return %c0_i32, %arg1 : i32, i32
  }
  func.func @transform_3(%arg0: i32, %arg1: i32, %arg2: i32) -> (i32, i32) {
    %c0_i32 = arith.constant 0 : i32
    return %arg0, %arg1 : i32, i32
  }
}

module attributes {stable_mosaic.version = 11 : i64} {
  func.func @_vq_kernel(%arg0: i32, %arg1: memref<32x128xf32, #tpu.memory_space<vmem>>, %arg2: memref<128x128xf32, #tpu.memory_space<vmem>>, %arg3: memref<1x128xf32, #tpu.memory_space<vmem>>, %arg4: memref<32x128xf32, #tpu.memory_space<vmem>>, %arg5: memref<1x128xf32, #tpu.memory_space<vmem>>) attributes {dimension_semantics = [#tpu.dimension_semantics<arbitrary>], iteration_bounds = array<i64: 1>, scalar_prefetch = 0 : i64, scratch_operands = 0 : i64, tpu.core_type = #tpu.core_type<tc>, window_params = [{transform_indices = @transform_0, window_bounds = array<i64: 32, 128>}, {pipeline_mode = #tpu.pipeline_mode<synchronous>, transform_indices = @transform_1, window_bounds = array<i64: 128, 128>}, {pipeline_mode = #tpu.pipeline_mode<synchronous>, transform_indices = @transform_2, window_bounds = array<i64: 1, 128>}, {transform_indices = @transform_3, window_bounds = array<i64: 32, 128>}, {pipeline_mode = #tpu.pipeline_mode<synchronous>, transform_indices = @transform_4, window_bounds = array<i64: 1, 128>}]} {
    %c0_i32 = arith.constant 0 : i32
    %0 = arith.cmpi eq, %arg0, %c0_i32 : i32
    %1 = arith.extui %0 : i1 to i32
    %c0_i32_0 = arith.constant 0 : i32
    %2 = arith.cmpi ne, %1, %c0_i32_0 : i32
    scf.if %2 {
      %cst_19 = arith.constant 0.000000e+00 : f32
      %46 = vector.broadcast %cst_19 : f32 to vector<1x128xf32>
      %c0_20 = arith.constant 0 : index
      %c0_21 = arith.constant 0 : index
      %47 = vector.load %arg5[%c0_20, %c0_21] : memref<1x128xf32, #tpu.memory_space<vmem>>, vector<1x128xf32>
      tpu.vector_store %arg5[%c0_20, %c0_21], %46 {strides = array<i32>} : memref<1x128xf32, #tpu.memory_space<vmem>>, vector<1x128xf32>,
    } else {
    }
    %c0 = arith.constant 0 : index
    %c0_1 = arith.constant 0 : index
    %3 = vector.load %arg1[%c0, %c0_1] : memref<32x128xf32, #tpu.memory_space<vmem>>, vector<32x128xf32>
    %c0_2 = arith.constant 0 : index
    %c0_3 = arith.constant 0 : index
    %4 = vector.load %arg2[%c0_2, %c0_3] : memref<128x128xf32, #tpu.memory_space<vmem>>, vector<128x128xf32>
    %5 = arith.mulf %3, %3 : vector<32x128xf32>
    %cst = arith.constant dense<0.000000e+00> : vector<32xf32>
    %6 = vector.multi_reduction <add>, %5, %cst [1] : vector<32x128xf32> to vector<32xf32>
    %7 = vector.shape_cast %6 : vector<32xf32> to vector<32x1xf32>
    %cst_4 = arith.constant dense<0.000000e+00> : vector<32x128xf32>
    %8 = tpu.matmul %3, %4, %cst_4 {dimension_numbers = #tpu.dot_dimension_numbers<[1], [1], [0], [0], [0, 0, 1, 0], [], []>} : vector<32x128xf32>, vector<128x128xf32>, vector<32x128xf32> -> vector<32x128xf32>
    %c0_5 = arith.constant 0 : index
    %c0_6 = arith.constant 0 : index
    %9 = vector.load %arg3[%c0_5, %c0_6] : memref<1x128xf32, #tpu.memory_space<vmem>>, vector<1x128xf32>
    %10 = vector.broadcast %7 : vector<32x1xf32> to vector<32x128xf32>
    %11 = vector.broadcast %9 : vector<1x128xf32> to vector<32x128xf32>
    %12 = arith.addf %10, %11 : vector<32x128xf32>
    %cst_7 = arith.constant 2.000000e+00 : f32
    %13 = vector.broadcast %cst_7 : f32 to vector<32x128xf32>
    %14 = arith.mulf %13, %8 : vector<32x128xf32>
    %15 = arith.subf %12, %14 : vector<32x128xf32>
    %cst_8 = arith.constant dense<0x7F800000> : vector<32xf32>
    %16 = vector.multi_reduction <minimumf>, %15, %cst_8 [1] : vector<32x128xf32> to vector<32xf32>
    %17 = vector.shape_cast %16 : vector<32xf32> to vector<32x1xf32>
    %18 = tpu.iota {dimensions = array<i32: 1>} : vector<32x128xi32>
    %19 = vector.broadcast %17 : vector<32x1xf32> to vector<32x128xf32>
    %20 = arith.cmpf oeq, %15, %19 : vector<32x128xf32>
    %c128_i32 = arith.constant 128 : i32
    %21 = vector.broadcast %c128_i32 : i32 to vector<32x128xi32>
    %22 = arith.select %20, %18, %21 : vector<32x128xi1>, vector<32x128xi32>
    %cst_9 = arith.constant dense<2147483647> : vector<32xi32>
    %23 = vector.multi_reduction <minsi>, %22, %cst_9 [1] : vector<32x128xi32> to vector<32xi32>
    %24 = vector.shape_cast %23 : vector<32xi32> to vector<32x1xi32>
    %25 = vector.broadcast %24 : vector<32x1xi32> to vector<32x128xi32>
    %26 = arith.cmpi eq, %18, %25 : vector<32x128xi32>
    %27 = arith.extui %26 : vector<32x128xi1> to vector<32x128xi32>
    %28 = arith.sitofp %27 : vector<32x128xi32> to vector<32x128xf32>
    %cst_10 = arith.constant dense<0.000000e+00> : vector<32x128xf32>
    %29 = tpu.matmul %28, %4, %cst_10 {dimension_numbers = #tpu.dot_dimension_numbers<[1], [0], [0], [1], [0, 0, 1, 1], [], []>} : vector<32x128xf32>, vector<128x128xf32>, vector<32x128xf32> -> vector<32x128xf32>
    %c0_11 = arith.constant 0 : index
    %c0_12 = arith.constant 0 : index
    %30 = vector.load %arg4[%c0_11, %c0_12] : memref<32x128xf32, #tpu.memory_space<vmem>>, vector<32x128xf32>
    tpu.vector_store %arg4[%c0_11, %c0_12], %29 {strides = array<i32>} : memref<32x128xf32, #tpu.memory_space<vmem>>, vector<32x128xf32>,
    %31 = tpu.iota {dimensions = array<i32: 0>} : vector<32x1xi32>
    %c32_i32 = arith.constant 32 : i32
    %32 = arith.muli %arg0, %c32_i32 : i32
    %33 = vector.broadcast %32 : i32 to vector<32x1xi32>
    %34 = arith.addi %31, %33 : vector<32x1xi32>
    %c32_i32_13 = arith.constant 32 : i32
    %35 = vector.broadcast %c32_i32_13 : i32 to vector<32x1xi32>
    %36 = arith.cmpi slt, %34, %35 : vector<32x1xi32>
    %37 = arith.extui %36 : vector<32x1xi1> to vector<32x1xi32>
    %38 = arith.sitofp %37 : vector<32x1xi32> to vector<32x1xf32>
    %c0_14 = arith.constant 0 : index
    %c0_15 = arith.constant 0 : index
    %39 = vector.load %arg5[%c0_14, %c0_15] : memref<1x128xf32, #tpu.memory_space<vmem>>, vector<1x128xf32>
    %40 = vector.broadcast %38 : vector<32x1xf32> to vector<32x128xf32>
    %41 = arith.mulf %28, %40 : vector<32x128xf32>
    %cst_16 = arith.constant dense<0.000000e+00> : vector<128xf32>
    %42 = vector.multi_reduction <add>, %41, %cst_16 [0] : vector<32x128xf32> to vector<128xf32>
    %43 = vector.shape_cast %42 : vector<128xf32> to vector<1x128xf32>
    %44 = arith.addf %39, %43 : vector<1x128xf32>
    %c0_17 = arith.constant 0 : index
    %c0_18 = arith.constant 0 : index
    %45 = vector.load %arg5[%c0_17, %c0_18] : memref<1x128xf32, #tpu.memory_space<vmem>>, vector<1x128xf32>
    tpu.vector_store %arg5[%c0_17, %c0_18], %44 {strides = array<i32>} : memref<1x128xf32, #tpu.memory_space<vmem>>, vector<1x128xf32>,
    return
  }
  func.func @transform_0(%arg0: i32) -> (i32, i32) {
    %c0_i32 = arith.constant 0 : i32
    %c0_i32_0 = arith.constant 0 : i32
    return %arg0, %c0_i32 : i32, i32
  }
  func.func @transform_1(%arg0: i32) -> (i32, i32) {
    %c0_i32 = arith.constant 0 : i32
    %c0_i32_0 = arith.constant 0 : i32
    %c0_i32_1 = arith.constant 0 : i32
    return %c0_i32, %c0_i32_0 : i32, i32
  }
  func.func @transform_2(%arg0: i32) -> (i32, i32) {
    %c0_i32 = arith.constant 0 : i32
    %c0_i32_0 = arith.constant 0 : i32
    %c0_i32_1 = arith.constant 0 : i32
    return %c0_i32, %c0_i32_0 : i32, i32
  }
  func.func @transform_3(%arg0: i32) -> (i32, i32) {
    %c0_i32 = arith.constant 0 : i32
    %c0_i32_0 = arith.constant 0 : i32
    return %arg0, %c0_i32 : i32, i32
  }
  func.func @transform_4(%arg0: i32) -> (i32, i32) {
    %c0_i32 = arith.constant 0 : i32
    %c0_i32_0 = arith.constant 0 : i32
    %c0_i32_1 = arith.constant 0 : i32
    return %c0_i32, %c0_i32_0 : i32, i32
  }
}

module attributes {stable_mosaic.version = 11 : i64} {
  func.func @_mm_kernel(%arg0: i32, %arg1: i32, %arg2: i32, %arg3: memref<32x128xbf16, #tpu.memory_space<vmem>>, %arg4: memref<128x128xbf16, #tpu.memory_space<vmem>>, %arg5: memref<1x128xf32, #tpu.memory_space<vmem>>, %arg6: memref<32x128xf32, #tpu.memory_space<vmem>>, %arg7: memref<32x128xf32, #tpu.memory_space<vmem>>) attributes {dimension_semantics = [#tpu.dimension_semantics<parallel>, #tpu.dimension_semantics<parallel>, #tpu.dimension_semantics<arbitrary>], iteration_bounds = array<i64: 1, 1, 1>, scalar_prefetch = 0 : i64, scratch_operands = 1 : i64, tpu.core_type = #tpu.core_type<tc>, window_params = [{transform_indices = @transform_0, window_bounds = array<i64: 32, 128>}, {transform_indices = @transform_1, window_bounds = array<i64: 128, 128>}, {transform_indices = @transform_2, window_bounds = array<i64: 1, 128>}, {transform_indices = @transform_3, window_bounds = array<i64: 32, 128>}]} {
    %c0_i32 = arith.constant 0 : i32
    %0 = arith.cmpi eq, %arg2, %c0_i32 : i32
    %1 = arith.extui %0 : i1 to i32
    %c0_i32_0 = arith.constant 0 : i32
    %2 = arith.cmpi ne, %1, %c0_i32_0 : i32
    scf.if %2 {
      %cst_10 = arith.constant 0.000000e+00 : f32
      %12 = vector.broadcast %cst_10 : f32 to vector<32x128xf32>
      %c0_11 = arith.constant 0 : index
      %c0_12 = arith.constant 0 : index
      %13 = vector.load %arg7[%c0_11, %c0_12] : memref<32x128xf32, #tpu.memory_space<vmem>>, vector<32x128xf32>
      tpu.vector_store %arg7[%c0_11, %c0_12], %12 {strides = array<i32>} : memref<32x128xf32, #tpu.memory_space<vmem>>, vector<32x128xf32>,
    } else {
    }
    %c0 = arith.constant 0 : index
    %c0_1 = arith.constant 0 : index
    %3 = vector.load %arg3[%c0, %c0_1] : memref<32x128xbf16, #tpu.memory_space<vmem>>, vector<32x128xbf16>
    %c0_2 = arith.constant 0 : index
    %c0_3 = arith.constant 0 : index
    %4 = vector.load %arg7[%c0_2, %c0_3] : memref<32x128xf32, #tpu.memory_space<vmem>>, vector<32x128xf32>
    %c0_4 = arith.constant 0 : index
    %c0_5 = arith.constant 0 : index
    %5 = vector.load %arg4[%c0_4, %c0_5] : memref<128x128xbf16, #tpu.memory_space<vmem>>, vector<128x128xbf16>
    %cst = arith.constant dense<0.000000e+00> : vector<32x128xf32>
    %6 = tpu.matmul %3, %5, %cst {dimension_numbers = #tpu.dot_dimension_numbers<[1], [0], [0], [1], [0, 0, 1, 1], [], []>} : vector<32x128xbf16>, vector<128x128xbf16>, vector<32x128xf32> -> vector<32x128xf32>
    %7 = arith.addf %4, %6 : vector<32x128xf32>
    %c0_6 = arith.constant 0 : index
    %c0_7 = arith.constant 0 : index
    %8 = vector.load %arg7[%c0_6, %c0_7] : memref<32x128xf32, #tpu.memory_space<vmem>>, vector<32x128xf32>
    tpu.vector_store %arg7[%c0_6, %c0_7], %7 {strides = array<i32>} : memref<32x128xf32, #tpu.memory_space<vmem>>, vector<32x128xf32>,
    %c0_i32_8 = arith.constant 0 : i32
    %9 = arith.cmpi eq, %arg2, %c0_i32_8 : i32
    %10 = arith.extui %9 : i1 to i32
    %c0_i32_9 = arith.constant 0 : i32
    %11 = arith.cmpi ne, %10, %c0_i32_9 : i32
    scf.if %11 {
      %c0_10 = arith.constant 0 : index
      %c0_11 = arith.constant 0 : index
      %12 = vector.load %arg7[%c0_10, %c0_11] : memref<32x128xf32, #tpu.memory_space<vmem>>, vector<32x128xf32>
      %c0_12 = arith.constant 0 : index
      %c0_13 = arith.constant 0 : index
      %13 = vector.load %arg5[%c0_12, %c0_13] : memref<1x128xf32, #tpu.memory_space<vmem>>, vector<1x128xf32>
      %14 = vector.broadcast %13 : vector<1x128xf32> to vector<32x128xf32>
      %15 = arith.addf %12, %14 : vector<32x128xf32>
      %c0_14 = arith.constant 0 : index
      %c0_15 = arith.constant 0 : index
      %16 = vector.load %arg6[%c0_14, %c0_15] : memref<32x128xf32, #tpu.memory_space<vmem>>, vector<32x128xf32>
      tpu.vector_store %arg6[%c0_14, %c0_15], %15 {strides = array<i32>} : memref<32x128xf32, #tpu.memory_space<vmem>>, vector<32x128xf32>,
    } else {
    }
    return
  }
  func.func @transform_0(%arg0: i32, %arg1: i32, %arg2: i32) -> (i32, i32) {
    %c0_i32 = arith.constant 0 : i32
    return %arg0, %arg2 : i32, i32
  }
  func.func @transform_1(%arg0: i32, %arg1: i32, %arg2: i32) -> (i32, i32) {
    %c0_i32 = arith.constant 0 : i32
    return %arg2, %arg1 : i32, i32
  }
  func.func @transform_2(%arg0: i32, %arg1: i32, %arg2: i32) -> (i32, i32) {
    %c0_i32 = arith.constant 0 : i32
    %c0_i32_0 = arith.constant 0 : i32
    return %c0_i32, %arg1 : i32, i32
  }
  func.func @transform_3(%arg0: i32, %arg1: i32, %arg2: i32) -> (i32, i32) {
    %c0_i32 = arith.constant 0 : i32
    return %arg0, %arg1 : i32, i32
  }
}

module attributes {stable_mosaic.version = 11 : i64} {
  func.func @_mm_kernel(%arg0: i32, %arg1: i32, %arg2: i32, %arg3: memref<128x512xbf16, #tpu.memory_space<vmem>>, %arg4: memref<512x128xbf16, #tpu.memory_space<vmem>>, %arg5: memref<1x128xf32, #tpu.memory_space<vmem>>, %arg6: memref<128x128xf32, #tpu.memory_space<vmem>>, %arg7: memref<128x128xf32, #tpu.memory_space<vmem>>) attributes {dimension_semantics = [#tpu.dimension_semantics<parallel>, #tpu.dimension_semantics<parallel>, #tpu.dimension_semantics<arbitrary>], iteration_bounds = array<i64: 1, 1, 1>, scalar_prefetch = 0 : i64, scratch_operands = 1 : i64, tpu.core_type = #tpu.core_type<tc>, window_params = [{transform_indices = @transform_0, window_bounds = array<i64: 128, 512>}, {transform_indices = @transform_1, window_bounds = array<i64: 512, 128>}, {transform_indices = @transform_2, window_bounds = array<i64: 1, 128>}, {transform_indices = @transform_3, window_bounds = array<i64: 128, 128>}]} {
    %c0_i32 = arith.constant 0 : i32
    %0 = arith.cmpi eq, %arg2, %c0_i32 : i32
    %1 = arith.extui %0 : i1 to i32
    %c0_i32_0 = arith.constant 0 : i32
    %2 = arith.cmpi ne, %1, %c0_i32_0 : i32
    scf.if %2 {
      %cst_11 = arith.constant 0.000000e+00 : f32
      %14 = vector.broadcast %cst_11 : f32 to vector<128x128xf32>
      %c0_12 = arith.constant 0 : index
      %c0_13 = arith.constant 0 : index
      %15 = vector.load %arg7[%c0_12, %c0_13] : memref<128x128xf32, #tpu.memory_space<vmem>>, vector<128x128xf32>
      tpu.vector_store %arg7[%c0_12, %c0_13], %14 {strides = array<i32>} : memref<128x128xf32, #tpu.memory_space<vmem>>, vector<128x128xf32>,
    } else {
    }
    %c0 = arith.constant 0 : index
    %c0_1 = arith.constant 0 : index
    %3 = vector.load %arg3[%c0, %c0_1] : memref<128x512xbf16, #tpu.memory_space<vmem>>, vector<128x512xbf16>
    %cst = arith.constant 0.000000e+00 : bf16
    %4 = vector.broadcast %cst : bf16 to vector<128x512xbf16>
    %5 = arith.maximumf %3, %4 : vector<128x512xbf16>
    %c0_2 = arith.constant 0 : index
    %c0_3 = arith.constant 0 : index
    %6 = vector.load %arg7[%c0_2, %c0_3] : memref<128x128xf32, #tpu.memory_space<vmem>>, vector<128x128xf32>
    %c0_4 = arith.constant 0 : index
    %c0_5 = arith.constant 0 : index
    %7 = vector.load %arg4[%c0_4, %c0_5] : memref<512x128xbf16, #tpu.memory_space<vmem>>, vector<512x128xbf16>
    %cst_6 = arith.constant dense<0.000000e+00> : vector<128x128xf32>
    %8 = tpu.matmul %5, %7, %cst_6 {dimension_numbers = #tpu.dot_dimension_numbers<[1], [0], [0], [1], [0, 0, 1, 1], [], []>} : vector<128x512xbf16>, vector<512x128xbf16>, vector<128x128xf32> -> vector<128x128xf32>
    %9 = arith.addf %6, %8 : vector<128x128xf32>
    %c0_7 = arith.constant 0 : index
    %c0_8 = arith.constant 0 : index
    %10 = vector.load %arg7[%c0_7, %c0_8] : memref<128x128xf32, #tpu.memory_space<vmem>>, vector<128x128xf32>
    tpu.vector_store %arg7[%c0_7, %c0_8], %9 {strides = array<i32>} : memref<128x128xf32, #tpu.memory_space<vmem>>, vector<128x128xf32>,
    %c0_i32_9 = arith.constant 0 : i32
    %11 = arith.cmpi eq, %arg2, %c0_i32_9 : i32
    %12 = arith.extui %11 : i1 to i32
    %c0_i32_10 = arith.constant 0 : i32
    %13 = arith.cmpi ne, %12, %c0_i32_10 : i32
    scf.if %13 {
      %c0_11 = arith.constant 0 : index
      %c0_12 = arith.constant 0 : index
      %14 = vector.load %arg7[%c0_11, %c0_12] : memref<128x128xf32, #tpu.memory_space<vmem>>, vector<128x128xf32>
      %c0_13 = arith.constant 0 : index
      %c0_14 = arith.constant 0 : index
      %15 = vector.load %arg5[%c0_13, %c0_14] : memref<1x128xf32, #tpu.memory_space<vmem>>, vector<1x128xf32>
      %16 = vector.broadcast %15 : vector<1x128xf32> to vector<128x128xf32>
      %17 = arith.addf %14, %16 : vector<128x128xf32>
      %cst_15 = arith.constant 0.000000e+00 : f32
      %18 = vector.broadcast %cst_15 : f32 to vector<128x128xf32>
      %19 = arith.maximumf %17, %18 : vector<128x128xf32>
      %c0_16 = arith.constant 0 : index
      %c0_17 = arith.constant 0 : index
      %20 = vector.load %arg6[%c0_16, %c0_17] : memref<128x128xf32, #tpu.memory_space<vmem>>, vector<128x128xf32>
      tpu.vector_store %arg6[%c0_16, %c0_17], %19 {strides = array<i32>} : memref<128x128xf32, #tpu.memory_space<vmem>>, vector<128x128xf32>,
    } else {
    }
    return
  }
  func.func @transform_0(%arg0: i32, %arg1: i32, %arg2: i32) -> (i32, i32) {
    %c0_i32 = arith.constant 0 : i32
    return %arg0, %arg2 : i32, i32
  }
  func.func @transform_1(%arg0: i32, %arg1: i32, %arg2: i32) -> (i32, i32) {
    %c0_i32 = arith.constant 0 : i32
    return %arg2, %arg1 : i32, i32
  }
  func.func @transform_2(%arg0: i32, %arg1: i32, %arg2: i32) -> (i32, i32) {
    %c0_i32 = arith.constant 0 : i32
    %c0_i32_0 = arith.constant 0 : i32
    return %c0_i32, %arg1 : i32, i32
  }
  func.func @transform_3(%arg0: i32, %arg1: i32, %arg2: i32) -> (i32, i32) {
    %c0_i32 = arith.constant 0 : i32
    return %arg0, %arg1 : i32, i32
  }
}

module attributes {stable_mosaic.version = 11 : i64} {
  func.func @_mm_kernel(%arg0: i32, %arg1: i32, %arg2: i32, %arg3: memref<512x256xbf16, #tpu.memory_space<vmem>>, %arg4: memref<256x128xbf16, #tpu.memory_space<vmem>>, %arg5: memref<1x128xf32, #tpu.memory_space<vmem>>, %arg6: memref<512x128xf32, #tpu.memory_space<vmem>>, %arg7: memref<512x128xf32, #tpu.memory_space<vmem>>) attributes {dimension_semantics = [#tpu.dimension_semantics<parallel>, #tpu.dimension_semantics<parallel>, #tpu.dimension_semantics<arbitrary>], iteration_bounds = array<i64: 1, 1, 1>, scalar_prefetch = 0 : i64, scratch_operands = 1 : i64, tpu.core_type = #tpu.core_type<tc>, window_params = [{transform_indices = @transform_0, window_bounds = array<i64: 512, 256>}, {transform_indices = @transform_1, window_bounds = array<i64: 256, 128>}, {transform_indices = @transform_2, window_bounds = array<i64: 1, 128>}, {transform_indices = @transform_3, window_bounds = array<i64: 512, 128>}]} {
    %c0_i32 = arith.constant 0 : i32
    %0 = arith.cmpi eq, %arg2, %c0_i32 : i32
    %1 = arith.extui %0 : i1 to i32
    %c0_i32_0 = arith.constant 0 : i32
    %2 = arith.cmpi ne, %1, %c0_i32_0 : i32
    scf.if %2 {
      %cst_10 = arith.constant 0.000000e+00 : f32
      %12 = vector.broadcast %cst_10 : f32 to vector<512x128xf32>
      %c0_11 = arith.constant 0 : index
      %c0_12 = arith.constant 0 : index
      %13 = vector.load %arg7[%c0_11, %c0_12] : memref<512x128xf32, #tpu.memory_space<vmem>>, vector<512x128xf32>
      tpu.vector_store %arg7[%c0_11, %c0_12], %12 {strides = array<i32>} : memref<512x128xf32, #tpu.memory_space<vmem>>, vector<512x128xf32>,
    } else {
    }
    %c0 = arith.constant 0 : index
    %c0_1 = arith.constant 0 : index
    %3 = vector.load %arg3[%c0, %c0_1] : memref<512x256xbf16, #tpu.memory_space<vmem>>, vector<512x256xbf16>
    %c0_2 = arith.constant 0 : index
    %c0_3 = arith.constant 0 : index
    %4 = vector.load %arg7[%c0_2, %c0_3] : memref<512x128xf32, #tpu.memory_space<vmem>>, vector<512x128xf32>
    %c0_4 = arith.constant 0 : index
    %c0_5 = arith.constant 0 : index
    %5 = vector.load %arg4[%c0_4, %c0_5] : memref<256x128xbf16, #tpu.memory_space<vmem>>, vector<256x128xbf16>
    %cst = arith.constant dense<0.000000e+00> : vector<512x128xf32>
    %6 = tpu.matmul %3, %5, %cst {dimension_numbers = #tpu.dot_dimension_numbers<[1], [0], [0], [1], [0, 0, 1, 1], [], []>} : vector<512x256xbf16>, vector<256x128xbf16>, vector<512x128xf32> -> vector<512x128xf32>
    %7 = arith.addf %4, %6 : vector<512x128xf32>
    %c0_6 = arith.constant 0 : index
    %c0_7 = arith.constant 0 : index
    %8 = vector.load %arg7[%c0_6, %c0_7] : memref<512x128xf32, #tpu.memory_space<vmem>>, vector<512x128xf32>
    tpu.vector_store %arg7[%c0_6, %c0_7], %7 {strides = array<i32>} : memref<512x128xf32, #tpu.memory_space<vmem>>, vector<512x128xf32>,
    %c0_i32_8 = arith.constant 0 : i32
    %9 = arith.cmpi eq, %arg2, %c0_i32_8 : i32
    %10 = arith.extui %9 : i1 to i32
    %c0_i32_9 = arith.constant 0 : i32
    %11 = arith.cmpi ne, %10, %c0_i32_9 : i32
    scf.if %11 {
      %c0_10 = arith.constant 0 : index
      %c0_11 = arith.constant 0 : index
      %12 = vector.load %arg7[%c0_10, %c0_11] : memref<512x128xf32, #tpu.memory_space<vmem>>, vector<512x128xf32>
      %c0_12 = arith.constant 0 : index
      %c0_13 = arith.constant 0 : index
      %13 = vector.load %arg5[%c0_12, %c0_13] : memref<1x128xf32, #tpu.memory_space<vmem>>, vector<1x128xf32>
      %14 = vector.broadcast %13 : vector<1x128xf32> to vector<512x128xf32>
      %15 = arith.addf %12, %14 : vector<512x128xf32>
      %c0_14 = arith.constant 0 : index
      %c0_15 = arith.constant 0 : index
      %16 = vector.load %arg6[%c0_14, %c0_15] : memref<512x128xf32, #tpu.memory_space<vmem>>, vector<512x128xf32>
      tpu.vector_store %arg6[%c0_14, %c0_15], %15 {strides = array<i32>} : memref<512x128xf32, #tpu.memory_space<vmem>>, vector<512x128xf32>,
    } else {
    }
    return
  }
  func.func @transform_0(%arg0: i32, %arg1: i32, %arg2: i32) -> (i32, i32) {
    %c0_i32 = arith.constant 0 : i32
    return %arg0, %arg2 : i32, i32
  }
  func.func @transform_1(%arg0: i32, %arg1: i32, %arg2: i32) -> (i32, i32) {
    %c0_i32 = arith.constant 0 : i32
    return %arg2, %arg1 : i32, i32
  }
  func.func @transform_2(%arg0: i32, %arg1: i32, %arg2: i32) -> (i32, i32) {
    %c0_i32 = arith.constant 0 : i32
    %c0_i32_0 = arith.constant 0 : i32
    return %c0_i32, %arg1 : i32, i32
  }
  func.func @transform_3(%arg0: i32, %arg1: i32, %arg2: i32) -> (i32, i32) {
    %c0_i32 = arith.constant 0 : i32
    return %arg0, %arg1 : i32, i32
  }
}

</mosaic_0001>

<llo_original>
// kernel: vqvae_forward.16
$region0: #{vqvae_forward.16}
  #allocation0 [shape = 'u32[]', space=smem, size = 0x4, offset = 0x4, fixed_abs, tag = 'smem constant byte address 0x4 - core index']
  #allocation1 [shape = 'u32[144,128]{1,0:T(1,128)}', space=vmem, size = 0x12000, scoped, tag = 'internal scratch']
  #allocation2 [shape = 'f32[128,128]{1,0:T(8,128)}', space=vmem, size = 0x10000, scoped, tag = 'scratch operand']
  %s0 = inlined_call_operand.vmem [shape: bf16[128,128], index: 0, kind: input, shape index: {}]
  %s1 = inlined_call_operand.vmem [shape: bf16[128,128], index: 1, kind: input, shape index: {}]
  %s2 = inlined_call_operand.vmem [shape: f32[1,128], index: 2, kind: input, shape index: {}]
  %s3 = inlined_call_operand.vmem [shape: f32[128,128], index: 3, kind: output, shape index: {}]
  %s4 = sld [smem:[#allocation0]]
  $region30: #{vqvae_forward.16} parent=0
    _
  %s6 = ssub.s32 1, %s4
  %s7 = scalar_select 0, %s6, %s4
  // Predicated region
  $region2: #{vqvae_forward.16} parent=0 // pred_check
    _
  $region3: #{vqvae_forward.16} parent=0 // pred_check_branch
    %9 = sbr.rel (0) target = $region5
  $region4: #{vqvae_forward.16} parent=0 // pred_region
    _
  $region5: #{vqvae_forward.16} parent=0 // pred_fallthru
    _
  // Predicated region
  $region6: #{vqvae_forward.16} parent=0 // pred_check
    _
  $region7: #{vqvae_forward.16} parent=0 // pred_check_branch
    %11 = sbr.rel (0) target = $region9
  $region8: #{vqvae_forward.16} parent=0 // pred_region
    _
  $region9: #{vqvae_forward.16} parent=0 // pred_fallthru
    _
  // Predicated region
  $region10: #{vqvae_forward.16} parent=0 // pred_check
    _
  $region11: #{vqvae_forward.16} parent=0 // pred_check_branch
    %13 = sbr.rel (0) target = $region13
  $region12: #{vqvae_forward.16} parent=0 // pred_region
    _
  $region13: #{vqvae_forward.16} parent=0 // pred_fallthru
    _
  %p15 = scmp.eq.s32.totalorder 0, 0
  // Predicated region
  $region14: #{vqvae_forward.16} parent=0 // pred_check
    %p16 = pneg %p15
  $region15: #{vqvae_forward.16} parent=0 // pred_check_branch
    %18 = sbr.rel (%p16) target = $region17
  $region16: #{vqvae_forward.16} parent=0 // pred_region
    %19 = vst [vmem:[#allocation2] sm:$0xff] 0.0
    %20 = vst [vmem:[#allocation2 + $0x8] sm:$0xff] 0.0
    %21 = vst [vmem:[#allocation2 + $0x10] sm:$0xff] 0.0
    %22 = vst [vmem:[#allocation2 + $0x18] sm:$0xff] 0.0
    %23 = vst [vmem:[#allocation2 + $0x20] sm:$0xff] 0.0
    %24 = vst [vmem:[#allocation2 + $0x28] sm:$0xff] 0.0
    %25 = vst [vmem:[#allocation2 + $0x30] sm:$0xff] 0.0
    %26 = vst [vmem:[#allocation2 + $0x38] sm:$0xff] 0.0
    %27 = vst [vmem:[#allocation2 + $0x40] sm:$0xff] 0.0
    %28 = vst [vmem:[#allocation2 + $0x48] sm:$0xff] 0.0
    %29 = vst [vmem:[#allocation2 + $0x50] sm:$0xff] 0.0
    %30 = vst [vmem:[#allocation2 + $0x58] sm:$0xff] 0.0
    %31 = vst [vmem:[#allocation2 + $0x60] sm:$0xff] 0.0
    %32 = vst [vmem:[#allocation2 + $0x68] sm:$0xff] 0.0
    %33 = vst [vmem:[#allocation2 + $0x70] sm:$0xff] 0.0
    %34 = vst [vmem:[#allocation2 + $0x78] sm:$0xff] 0.0
  $region17: #{vqvae_forward.16} parent=0 // pred_fallthru
    _
  %v35 = vld [vmem:[%s0] sm:$0xf]
  %v36 = vld [vmem:[%s0 + $0x4] sm:$0xf]
  %v37 = vld [vmem:[%s0 + $0x8] sm:$0xf]
  %v38 = vld [vmem:[%s0 + $0xc] sm:$0xf]
  %v39 = vld [vmem:[%s0 + $0x10] sm:$0xf]
  %v40 = vld [vmem:[%s0 + $0x14] sm:$0xf]
  %v41 = vld [vmem:[%s0 + $0x18] sm:$0xf]
  %v42 = vld [vmem:[%s0 + $0x1c] sm:$0xf]
  %v43 = vld [vmem:[%s0 + $0x20] sm:$0xf]
  %v44 = vld [vmem:[%s0 + $0x24] sm:$0xf]
  %v45 = vld [vmem:[%s0 + $0x28] sm:$0xf]
  %v46 = vld [vmem:[%s0 + $0x2c] sm:$0xf]
  %v47 = vld [vmem:[%s0 + $0x30] sm:$0xf]
  %v48 = vld [vmem:[%s0 + $0x34] sm:$0xf]
  %v49 = vld [vmem:[%s0 + $0x38] sm:$0xf]
  %v50 = vld [vmem:[%s0 + $0x3c] sm:$0xf]
  %v51 = vld [vmem:[#allocation2] sm:$0xff]
  %v52 = vld [vmem:[#allocation2 + $0x8] sm:$0xff]
  %v53 = vld [vmem:[#allocation2 + $0x10] sm:$0xff]
  %v54 = vld [vmem:[#allocation2 + $0x18] sm:$0xff]
  %v55 = vld [vmem:[#allocation2 + $0x20] sm:$0xff]
  %v56 = vld [vmem:[#allocation2 + $0x28] sm:$0xff]
  %v57 = vld [vmem:[#allocation2 + $0x30] sm:$0xff]
  %v58 = vld [vmem:[#allocation2 + $0x38] sm:$0xff]
  %v59 = vld [vmem:[#allocation2 + $0x40] sm:$0xff]
  %v60 = vld [vmem:[#allocation2 + $0x48] sm:$0xff]
  %v61 = vld [vmem:[#allocation2 + $0x50] sm:$0xff]
  %v62 = vld [vmem:[#allocation2 + $0x58] sm:$0xff]
  %v63 = vld [vmem:[#allocation2 + $0x60] sm:$0xff]
  %v64 = vld [vmem:[#allocation2 + $0x68] sm:$0xff]
  %v65 = vld [vmem:[#allocation2 + $0x70] sm:$0xff]
  %v66 = vld [vmem:[#allocation2 + $0x78] sm:$0xff]
  %v67 = vld [vmem:[%s1] sm:$0xf]
  %v68 = vld [vmem:[%s1 + $0x4] sm:$0xf]
  %v69 = vld [vmem:[%s1 + $0x8] sm:$0xf]
  %v70 = vld [vmem:[%s1 + $0xc] sm:$0xf]
  %v71 = vld [vmem:[%s1 + $0x10] sm:$0xf]
  %v72 = vld [vmem:[%s1 + $0x14] sm:$0xf]
  %v73 = vld [vmem:[%s1 + $0x18] sm:$0xf]
  %v74 = vld [vmem:[%s1 + $0x1c] sm:$0xf]
  %v75 = vld [vmem:[%s1 + $0x20] sm:$0xf]
  %v76 = vld [vmem:[%s1 + $0x24] sm:$0xf]
  %v77 = vld [vmem:[%s1 + $0x28] sm:$0xf]
  %v78 = vld [vmem:[%s1 + $0x2c] sm:$0xf]
  %v79 = vld [vmem:[%s1 + $0x30] sm:$0xf]
  %v80 = vld [vmem:[%s1 + $0x34] sm:$0xf]
  %v81 = vld [vmem:[%s1 + $0x38] sm:$0xf]
  %v82 = vld [vmem:[%s1 + $0x3c] sm:$0xf]
  %v99 = vunpack.c.l.b16 %v35
  %v100 = vunpack.c.l.b16 %v36
  %v101 = vunpack.c.l.b16 %v37
  %v102 = vunpack.c.l.b16 %v38
  %v103 = vunpack.c.l.b16 %v39
  %v104 = vunpack.c.l.b16 %v40
  %v105 = vunpack.c.l.b16 %v41
  %v106 = vunpack.c.l.b16 %v42
  %v107 = vunpack.c.l.b16 %v43
  %v108 = vunpack.c.l.b16 %v44
  %v109 = vunpack.c.l.b16 %v45
  %v110 = vunpack.c.l.b16 %v46
  %v111 = vunpack.c.l.b16 %v47
  %v112 = vunpack.c.l.b16 %v48
  %v113 = vunpack.c.l.b16 %v49
  %v114 = vunpack.c.l.b16 %v50
  %v115 = vpack.c.b16 %v100, %v99
  %v116 = vpack.c.b16 %v102, %v101
  %v117 = vpack.c.b16 %v104, %v103
  %v118 = vpack.c.b16 %v106, %v105
  %v119 = vpack.c.b16 %v108, %v107
  %v120 = vpack.c.b16 %v110, %v109
  %v121 = vpack.c.b16 %v112, %v111
  %v122 = vpack.c.b16 %v114, %v113
  %v147 = vunpack.c.l.b16 %v67
  %v148 = vunpack.c.l.b16 %v68
  %v149 = vunpack.c.l.b16 %v69
  %v150 = vunpack.c.l.b16 %v70
  %v151 = vunpack.c.l.b16 %v71
  %v152 = vunpack.c.l.b16 %v72
  %v153 = vunpack.c.l.b16 %v73
  %v154 = vunpack.c.l.b16 %v74
  %v155 = vunpack.c.l.b16 %v75
  %v156 = vunpack.c.l.b16 %v76
  %v157 = vunpack.c.l.b16 %v77
  %v158 = vunpack.c.l.b16 %v78
  %v159 = vunpack.c.l.b16 %v79
  %v160 = vunpack.c.l.b16 %v80
  %v161 = vunpack.c.l.b16 %v81
  %v162 = vunpack.c.l.b16 %v82
  %v163 = vpack.c.b16 %v148, %v147
  %v164 = vpack.c.b16 %v150, %v149
  %v165 = vpack.c.b16 %v152, %v151
  %v166 = vpack.c.b16 %v154, %v153
  %v167 = vpack.c.b16 %v156, %v155
  %v168 = vpack.c.b16 %v158, %v157
  %v169 = vpack.c.b16 %v160, %v159
  %v170 = vpack.c.b16 %v162, %v161
  %179 = vmatprep.subr.bf16.mxu0 0
  %180 = vmatpush1.bf16.msra.mxu0 %v163
  %181 = vmatprep.subr.bf16.mxu0 0
  %182 = vmatpush1.bf16.msra.mxu0 %v164
  %183 = vmatprep.subr.bf16.mxu0 0
  %184 = vmatpush1.bf16.msra.mxu0 %v165
  %185 = vmatprep.subr.bf16.mxu0 0
  %186 = vmatpush1.bf16.msra.mxu0 %v166
  %187 = vmatprep.subr.bf16.mxu0 0
  %188 = vmatpush1.bf16.msra.mxu0 %v167
  %189 = vmatprep.subr.bf16.mxu0 0
  %190 = vmatpush1.bf16.msra.mxu0 %v168
  %191 = vmatprep.subr.bf16.mxu0 0
  %192 = vmatpush1.bf16.msra.mxu0 %v169
  %193 = vmatprep.subr.bf16.mxu0 0
  %194 = vmatpush1.bf16.msra.mxu0 %v170
  %195 = vmatprep.subr.bf16.mxu0 0
  %196 = vmatpush1.bf16.msra.mxu0 0
  %197 = vmatprep.subr.bf16.mxu0 0
  %198 = vmatpush1.bf16.msra.mxu0 0
  %199 = vmatprep.subr.bf16.mxu0 0
  %200 = vmatpush1.bf16.msra.mxu0 0
  %201 = vmatprep.subr.bf16.mxu0 0
  %202 = vmatpush1.bf16.msra.mxu0 0
  %203 = vmatprep.subr.bf16.mxu0 0
  %204 = vmatpush1.bf16.msra.mxu0 0
  %205 = vmatprep.subr.bf16.mxu0 0
  %206 = vmatpush1.bf16.msra.mxu0 0
  %207 = vmatprep.subr.bf16.mxu0 0
  %208 = vmatpush1.bf16.msra.mxu0 0
  %209 = vmatprep.subr.bf16.mxu0 0
  %210 = vmatpush1.bf16.msra.mxu0 0
  %211 = vmatprep.mubr.bf16.mxu0 0
  %212 = vmatmul.mubr.bf16.gmra.mrb[0].mxu0 %v115
  %v213 = vpop.f32.mrb[0].mxu0
  %v214 = vadd.f32 0.0, %v213
  %v215 = vpop.f32.mrb[0].mxu0
  %v216 = vpop.f32.mrb[0].mxu0
  %v217 = vadd.f32 0.0, %v216
  %v218 = vpop.f32.mrb[0].mxu0
  %219 = vmatprep.mubr.bf16.mxu0 0
  %220 = vmatmul.mubr.bf16.gmra.mrb[0].mxu0 %v116
  %v221 = vpop.f32.mrb[0].mxu0
  %v222 = vadd.f32 0.0, %v221
  %v223 = vpop.f32.mrb[0].mxu0
  %v224 = vpop.f32.mrb[0].mxu0
  %v225 = vadd.f32 0.0, %v224
  %v226 = vpop.f32.mrb[0].mxu0
  %227 = vmatprep.mubr.bf16.mxu0 0
  %228 = vmatmul.mubr.bf16.gmra.mrb[0].mxu0 %v117
  %v229 = vpop.f32.mrb[0].mxu0
  %v230 = vadd.f32 0.0, %v229
  %v231 = vpop.f32.mrb[0].mxu0
  %v232 = vpop.f32.mrb[0].mxu0
  %v233 = vadd.f32 0.0, %v232
  %v234 = vpop.f32.mrb[0].mxu0
  %235 = vmatprep.mubr.bf16.mxu0 0
  %236 = vmatmul.mubr.bf16.gmra.mrb[0].mxu0 %v118
  %v237 = vpop.f32.mrb[0].mxu0
  %v238 = vadd.f32 0.0, %v237
  %v239 = vpop.f32.mrb[0].mxu0
  %v240 = vpop.f32.mrb[0].mxu0
  %v241 = vadd.f32 0.0, %v240
  %v242 = vpop.f32.mrb[0].mxu0
  %243 = vmatprep.mubr.bf16.mxu0 0
  %244 = vmatmul.mubr.bf16.gmra.mrb[0].mxu0 %v119
  %v245 = vpop.f32.mrb[0].mxu0
  %v246 = vadd.f32 0.0, %v245
  %v247 = vpop.f32.mrb[0].mxu0
  %v248 = vpop.f32.mrb[0].mxu0
  %v249 = vadd.f32 0.0, %v248
  %v250 = vpop.f32.mrb[0].mxu0
  %251 = vmatprep.mubr.bf16.mxu0 0
  %252 = vmatmul.mubr.bf16.gmra.mrb[0].mxu0 %v120
  %v253 = vpop.f32.mrb[0].mxu0
  %v254 = vadd.f32 0.0, %v253
  %v255 = vpop.f32.mrb[0].mxu0
  %v256 = vpop.f32.mrb[0].mxu0
  %v257 = vadd.f32 0.0, %v256
  %v258 = vpop.f32.mrb[0].mxu0
  %259 = vmatprep.mubr.bf16.mxu0 0
  %260 = vmatmul.mubr.bf16.gmra.mrb[0].mxu0 %v121
  %v261 = vpop.f32.mrb[0].mxu0
  %v262 = vadd.f32 0.0, %v261
  %v263 = vpop.f32.mrb[0].mxu0
  %v264 = vpop.f32.mrb[0].mxu0
  %v265 = vadd.f32 0.0, %v264
  %v266 = vpop.f32.mrb[0].mxu0
  %267 = vmatprep.mubr.bf16.mxu0 0
  %268 = vmatmul.mubr.bf16.gmra.mrb[0].mxu0 %v122
  %v269 = vpop.f32.mrb[0].mxu0
  %v270 = vadd.f32 0.0, %v269
  %v271 = vpop.f32.mrb[0].mxu0
  %v272 = vpop.f32.mrb[0].mxu0
  %v273 = vadd.f32 0.0, %v272
  %v274 = vpop.f32.mrb[0].mxu0
  %275 = vdwg.mxu0
  %v276 = vadd.f32 %v51, %v214
  %v277 = vadd.f32 %v52, %v217
  %v278 = vadd.f32 %v53, %v222
  %v279 = vadd.f32 %v54, %v225
  %v280 = vadd.f32 %v55, %v230
  %v281 = vadd.f32 %v56, %v233
  %v282 = vadd.f32 %v57, %v238
  %v283 = vadd.f32 %v58, %v241
  %v284 = vadd.f32 %v59, %v246
  %v285 = vadd.f32 %v60, %v249
  %v286 = vadd.f32 %v61, %v254
  %v287 = vadd.f32 %v62, %v257
  %v288 = vadd.f32 %v63, %v262
  %v289 = vadd.f32 %v64, %v265
  %v290 = vadd.f32 %v65, %v270
  %v291 = vadd.f32 %v66, %v273
  %292 = vst [vmem:[#allocation2] sm:$0xff] %v276
  %293 = vst [vmem:[#allocation2 + $0x8] sm:$0xff] %v277
  %294 = vst [vmem:[#allocation2 + $0x10] sm:$0xff] %v278
  %295 = vst [vmem:[#allocation2 + $0x18] sm:$0xff] %v279
  %296 = vst [vmem:[#allocation2 + $0x20] sm:$0xff] %v280
  %297 = vst [vmem:[#allocation2 + $0x28] sm:$0xff] %v281
  %298 = vst [vmem:[#allocation2 + $0x30] sm:$0xff] %v282
  %299 = vst [vmem:[#allocation2 + $0x38] sm:$0xff] %v283
  %300 = vst [vmem:[#allocation2 + $0x40] sm:$0xff] %v284
  %301 = vst [vmem:[#allocation2 + $0x48] sm:$0xff] %v285
  %302 = vst [vmem:[#allocation2 + $0x50] sm:$0xff] %v286
  %303 = vst [vmem:[#allocation2 + $0x58] sm:$0xff] %v287
  %304 = vst [vmem:[#allocation2 + $0x60] sm:$0xff] %v288
  %305 = vst [vmem:[#allocation2 + $0x68] sm:$0xff] %v289
  %306 = vst [vmem:[#allocation2 + $0x70] sm:$0xff] %v290
  %307 = vst [vmem:[#allocation2 + $0x78] sm:$0xff] %v291
  // Predicated region
  $region18: #{vqvae_forward.16} parent=0 // pred_check
    %p308 = pneg %p15
  $region19: #{vqvae_forward.16} parent=0 // pred_check_branch
    %310 = sbr.rel (%p308) target = $region21
  $region20: #{vqvae_forward.16} parent=0 // pred_region
    %v311 = vld [vmem:[#allocation2] sm:$0xff]
    %v312 = vld [vmem:[#allocation2 + $0x8] sm:$0xff]
    %v313 = vld [vmem:[#allocation2 + $0x10] sm:$0xff]
    %v314 = vld [vmem:[#allocation2 + $0x18] sm:$0xff]
    %v315 = vld [vmem:[#allocation2 + $0x20] sm:$0xff]
    %v316 = vld [vmem:[#allocation2 + $0x28] sm:$0xff]
    %v317 = vld [vmem:[#allocation2 + $0x30] sm:$0xff]
    %v318 = vld [vmem:[#allocation2 + $0x38] sm:$0xff]
    %v319 = vld [vmem:[#allocation2 + $0x40] sm:$0xff]
    %v320 = vld [vmem:[#allocation2 + $0x48] sm:$0xff]
    %v321 = vld [vmem:[#allocation2 + $0x50] sm:$0xff]
    %v322 = vld [vmem:[#allocation2 + $0x58] sm:$0xff]
    %v323 = vld [vmem:[#allocation2 + $0x60] sm:$0xff]
    %v324 = vld [vmem:[#allocation2 + $0x68] sm:$0xff]
    %v325 = vld [vmem:[#allocation2 + $0x70] sm:$0xff]
    %v326 = vld [vmem:[#allocation2 + $0x78] sm:$0xff]
    %v327 = vld [vmem:[%s2] sm:$0x1]
    %v329 = vlaneseq
    %v330 = vshrl.u32 %v329, 7
    %v331 = vsub.s32 0, %v330
    %v332 = vrot.slane %v327, %v331
    %v334 = vadd.f32 %v311, %v332
    %v335 = vadd.f32 %v312, %v332
    %v336 = vadd.f32 %v313, %v332
    %v337 = vadd.f32 %v314, %v332
    %v338 = vadd.f32 %v315, %v332
    %v339 = vadd.f32 %v316, %v332
    %v340 = vadd.f32 %v317, %v332
    %v341 = vadd.f32 %v318, %v332
    %v342 = vadd.f32 %v319, %v332
    %v343 = vadd.f32 %v320, %v332
    %v344 = vadd.f32 %v321, %v332
    %v345 = vadd.f32 %v322, %v332
    %v346 = vadd.f32 %v323, %v332
    %v347 = vadd.f32 %v324, %v332
    %v348 = vadd.f32 %v325, %v332
    %v349 = vadd.f32 %v326, %v332
    %v350 = vmax.f32 %v334, 0.0
    %v351 = vmax.f32 %v335, 0.0
    %v352 = vmax.f32 %v336, 0.0
    %v353 = vmax.f32 %v337, 0.0
    %v354 = vmax.f32 %v338, 0.0
    %v355 = vmax.f32 %v339, 0.0
    %v356 = vmax.f32 %v340, 0.0
    %v357 = vmax.f32 %v341, 0.0
    %v358 = vmax.f32 %v342, 0.0
    %v359 = vmax.f32 %v343, 0.0
    %v360 = vmax.f32 %v344, 0.0
    %v361 = vmax.f32 %v345, 0.0
    %v362 = vmax.f32 %v346, 0.0
    %v363 = vmax.f32 %v347, 0.0
    %v364 = vmax.f32 %v348, 0.0
    %v365 = vmax.f32 %v349, 0.0
    %366 = vst [vmem:[%s3] sm:$0xff] %v350
    %367 = vst [vmem:[%s3 + $0x8] sm:$0xff] %v351
    %368 = vst [vmem:[%s3 + $0x10] sm:$0xff] %v352
    %369 = vst [vmem:[%s3 + $0x18] sm:$0xff] %v353
    %370 = vst [vmem:[%s3 + $0x20] sm:$0xff] %v354
    %371 = vst [vmem:[%s3 + $0x28] sm:$0xff] %v355
    %372 = vst [vmem:[%s3 + $0x30] sm:$0xff] %v356
    %373 = vst [vmem:[%s3 + $0x38] sm:$0xff] %v357
    %374 = vst [vmem:[%s3 + $0x40] sm:$0xff] %v358
    %375 = vst [vmem:[%s3 + $0x48] sm:$0xff] %v359
    %376 = vst [vmem:[%s3 + $0x50] sm:$0xff] %v360
    %377 = vst [vmem:[%s3 + $0x58] sm:$0xff] %v361
    %378 = vst [vmem:[%s3 + $0x60] sm:$0xff] %v362
    %379 = vst [vmem:[%s3 + $0x68] sm:$0xff] %v363
    %380 = vst [vmem:[%s3 + $0x70] sm:$0xff] %v364
    %381 = vst [vmem:[%s3 + $0x78] sm:$0xff] %v365
  $region21: #{vqvae_forward.16} parent=0 // pred_fallthru
    _
  // Predicated region
  $region22: #{vqvae_forward.16} parent=0 // pred_check
    _
  $region23: #{vqvae_forward.16} parent=0 // pred_check_branch
    %383 = sbr.rel (0) target = $region25
  $region24: #{vqvae_forward.16} parent=0 // pred_region
    _
  $region25: #{vqvae_forward.16} parent=0 // pred_fallthru
    _
  // Predicated region
  $region26: #{vqvae_forward.16} parent=0 // pred_check
    _
  $region27: #{vqvae_forward.16} parent=0 // pred_check_branch
    %385 = sbr.rel (0) target = $region29
  $region28: #{vqvae_forward.16} parent=0 // pred_region
    _
  $region29: #{vqvae_forward.16} parent=0 // pred_fallthru
    _

// kernel: vqvae_forward.17
$region0: #{vqvae_forward.17}
  #allocation0 [shape = 'u32[]', space=smem, size = 0x4, offset = 0x4, fixed_abs, tag = 'smem constant byte address 0x4 - core index']
  #allocation1 [shape = 'u32[144,128]{1,0:T(1,128)}', space=vmem, size = 0x12000, scoped, tag = 'internal scratch']
  #allocation2 [shape = 'f32[32,128]{1,0:T(8,128)}', space=vmem, size = 0x4000, scoped, tag = 'scratch operand']
  %s0 = inlined_call_operand.vmem [shape: bf16[32,256], index: 0, kind: input, shape index: {}]
  %s1 = inlined_call_operand.vmem [shape: bf16[256,128], index: 1, kind: input, shape index: {}]
  %s2 = inlined_call_operand.vmem [shape: f32[1,128], index: 2, kind: input, shape index: {}]
  %s3 = inlined_call_operand.vmem [shape: f32[32,128], index: 3, kind: output, shape index: {}]
  %s4 = sld [smem:[#allocation0]]
  $region30: #{vqvae_forward.17} parent=0
    _
  %s6 = ssub.s32 1, %s4
  %s7 = scalar_select 0, %s6, %s4
  // Predicated region
  $region2: #{vqvae_forward.17} parent=0 // pred_check
    _
  $region3: #{vqvae_forward.17} parent=0 // pred_check_branch
    %9 = sbr.rel (0) target = $region5
  $region4: #{vqvae_forward.17} parent=0 // pred_region
    _
  $region5: #{vqvae_forward.17} parent=0 // pred_fallthru
    _
  // Predicated region
  $region6: #{vqvae_forward.17} parent=0 // pred_check
    _
  $region7: #{vqvae_forward.17} parent=0 // pred_check_branch
    %11 = sbr.rel (0) target = $region9
  $region8: #{vqvae_forward.17} parent=0 // pred_region
    _
  $region9: #{vqvae_forward.17} parent=0 // pred_fallthru
    _
  // Predicated region
  $region10: #{vqvae_forward.17} parent=0 // pred_check
    _
  $region11: #{vqvae_forward.17} parent=0 // pred_check_branch
    %13 = sbr.rel (0) target = $region13
  $region12: #{vqvae_forward.17} parent=0 // pred_region
    _
  $region13: #{vqvae_forward.17} parent=0 // pred_fallthru
    _
  %p15 = scmp.eq.s32.totalorder 0, 0
  // Predicated region
  $region14: #{vqvae_forward.17} parent=0 // pred_check
    %p16 = pneg %p15
  $region15: #{vqvae_forward.17} parent=0 // pred_check_branch
    %18 = sbr.rel (%p16) target = $region17
  $region16: #{vqvae_forward.17} parent=0 // pred_region
    %19 = vst [vmem:[#allocation2] sm:$0xff] 0.0
    %20 = vst [vmem:[#allocation2 + $0x8] sm:$0xff] 0.0
    %21 = vst [vmem:[#allocation2 + $0x10] sm:$0xff] 0.0
    %22 = vst [vmem:[#allocation2 + $0x18] sm:$0xff] 0.0
  $region17: #{vqvae_forward.17} parent=0 // pred_fallthru
    _
  %v23 = vld [vmem:[%s0] sm:$0xff]
  %v24 = vld [vmem:[%s0 + $0x8] sm:$0xff]
  %v25 = vld [vmem:[%s0 + $0x10] sm:$0xff]
  %v26 = vld [vmem:[%s0 + $0x18] sm:$0xff]
  %v27 = vld [vmem:[#allocation2] sm:$0xff]
  %v28 = vld [vmem:[#allocation2 + $0x8] sm:$0xff]
  %v29 = vld [vmem:[#allocation2 + $0x10] sm:$0xff]
  %v30 = vld [vmem:[#allocation2 + $0x18] sm:$0xff]
  %v31 = vld [vmem:[%s1] sm:$0xf]
  %v32 = vld [vmem:[%s1 + $0x4] sm:$0xf]
  %v33 = vld [vmem:[%s1 + $0x8] sm:$0xf]
  %v34 = vld [vmem:[%s1 + $0xc] sm:$0xf]
  %v35 = vld [vmem:[%s1 + $0x10] sm:$0xf]
  %v36 = vld [vmem:[%s1 + $0x14] sm:$0xf]
  %v37 = vld [vmem:[%s1 + $0x18] sm:$0xf]
  %v38 = vld [vmem:[%s1 + $0x1c] sm:$0xf]
  %v39 = vld [vmem:[%s1 + $0x20] sm:$0xf]
  %v40 = vld [vmem:[%s1 + $0x24] sm:$0xf]
  %v41 = vld [vmem:[%s1 + $0x28] sm:$0xf]
  %v42 = vld [vmem:[%s1 + $0x2c] sm:$0xf]
  %v43 = vld [vmem:[%s1 + $0x30] sm:$0xf]
  %v44 = vld [vmem:[%s1 + $0x34] sm:$0xf]
  %v45 = vld [vmem:[%s1 + $0x38] sm:$0xf]
  %v46 = vld [vmem:[%s1 + $0x3c] sm:$0xf]
  %v47 = vld [vmem:[%s1 + $0x40] sm:$0xf]
  %v48 = vld [vmem:[%s1 + $0x44] sm:$0xf]
  %v49 = vld [vmem:[%s1 + $0x48] sm:$0xf]
  %v50 = vld [vmem:[%s1 + $0x4c] sm:$0xf]
  %v51 = vld [vmem:[%s1 + $0x50] sm:$0xf]
  %v52 = vld [vmem:[%s1 + $0x54] sm:$0xf]
  %v53 = vld [vmem:[%s1 + $0x58] sm:$0xf]
  %v54 = vld [vmem:[%s1 + $0x5c] sm:$0xf]
  %v55 = vld [vmem:[%s1 + $0x60] sm:$0xf]
  %v56 = vld [vmem:[%s1 + $0x64] sm:$0xf]
  %v57 = vld [vmem:[%s1 + $0x68] sm:$0xf]
  %v58 = vld [vmem:[%s1 + $0x6c] sm:$0xf]
  %v59 = vld [vmem:[%s1 + $0x70] sm:$0xf]
  %v60 = vld [vmem:[%s1 + $0x74] sm:$0xf]
  %v61 = vld [vmem:[%s1 + $0x78] sm:$0xf]
  %v62 = vld [vmem:[%s1 + $0x7c] sm:$0xf]
  %v67 = vunpack.c.l.b16 %v23
  %v68 = vunpack.c.h.b16 %v23
  %v69 = vunpack.c.l.b16 %v24
  %v70 = vunpack.c.h.b16 %v24
  %v71 = vunpack.c.l.b16 %v25
  %v72 = vunpack.c.h.b16 %v25
  %v73 = vunpack.c.l.b16 %v26
  %v74 = vunpack.c.h.b16 %v26
  %v75 = vpack.c.b16 %v69, %v67
  %v76 = vpack.c.b16 %v70, %v68
  %v77 = vpack.c.b16 %v73, %v71
  %v78 = vpack.c.b16 %v74, %v72
  %v115 = vunpack.c.l.b16 %v31
  %v116 = vunpack.c.l.b16 %v32
  %v117 = vunpack.c.l.b16 %v33
  %v118 = vunpack.c.l.b16 %v34
  %v119 = vunpack.c.l.b16 %v35
  %v120 = vunpack.c.l.b16 %v36
  %v121 = vunpack.c.l.b16 %v37
  %v122 = vunpack.c.l.b16 %v38
  %v123 = vunpack.c.l.b16 %v39
  %v124 = vunpack.c.l.b16 %v40
  %v125 = vunpack.c.l.b16 %v41
  %v126 = vunpack.c.l.b16 %v42
  %v127 = vunpack.c.l.b16 %v43
  %v128 = vunpack.c.l.b16 %v44
  %v129 = vunpack.c.l.b16 %v45
  %v130 = vunpack.c.l.b16 %v46
  %v131 = vunpack.c.l.b16 %v47
  %v132 = vunpack.c.l.b16 %v48
  %v133 = vunpack.c.l.b16 %v49
  %v134 = vunpack.c.l.b16 %v50
  %v135 = vunpack.c.l.b16 %v51
  %v136 = vunpack.c.l.b16 %v52
  %v137 = vunpack.c.l.b16 %v53
  %v138 = vunpack.c.l.b16 %v54
  %v139 = vunpack.c.l.b16 %v55
  %v140 = vunpack.c.l.b16 %v56
  %v141 = vunpack.c.l.b16 %v57
  %v142 = vunpack.c.l.b16 %v58
  %v143 = vunpack.c.l.b16 %v59
  %v144 = vunpack.c.l.b16 %v60
  %v145 = vunpack.c.l.b16 %v61
  %v146 = vunpack.c.l.b16 %v62
  %v147 = vpack.c.b16 %v116, %v115
  %v148 = vpack.c.b16 %v118, %v117
  %v149 = vpack.c.b16 %v120, %v119
  %v150 = vpack.c.b16 %v122, %v121
  %v151 = vpack.c.b16 %v124, %v123
  %v152 = vpack.c.b16 %v126, %v125
  %v153 = vpack.c.b16 %v128, %v127
  %v154 = vpack.c.b16 %v130, %v129
  %v155 = vpack.c.b16 %v132, %v131
  %v156 = vpack.c.b16 %v134, %v133
  %v157 = vpack.c.b16 %v136, %v135
  %v158 = vpack.c.b16 %v138, %v137
  %v159 = vpack.c.b16 %v140, %v139
  %v160 = vpack.c.b16 %v142, %v141
  %v161 = vpack.c.b16 %v144, %v143
  %v162 = vpack.c.b16 %v146, %v145
  %179 = vmatprep.subr.bf16.mxu0 0
  %180 = vmatpush1.bf16.msra.mxu0 %v147
  %181 = vmatprep.subr.bf16.mxu0 0
  %182 = vmatpush1.bf16.msra.mxu0 %v148
  %183 = vmatprep.subr.bf16.mxu0 0
  %184 = vmatpush1.bf16.msra.mxu0 %v149
  %185 = vmatprep.subr.bf16.mxu0 0
  %186 = vmatpush1.bf16.msra.mxu0 %v150
  %187 = vmatprep.subr.bf16.mxu0 0
  %188 = vmatpush1.bf16.msra.mxu0 %v151
  %189 = vmatprep.subr.bf16.mxu0 0
  %190 = vmatpush1.bf16.msra.mxu0 %v152
  %191 = vmatprep.subr.bf16.mxu0 0
  %192 = vmatpush1.bf16.msra.mxu0 %v153
  %193 = vmatprep.subr.bf16.mxu0 0
  %194 = vmatpush1.bf16.msra.mxu0 %v154
  %195 = vmatprep.subr.bf16.mxu0 0
  %196 = vmatpush1.bf16.msra.mxu0 %v155
  %197 = vmatprep.subr.bf16.mxu0 0
  %198 = vmatpush1.bf16.msra.mxu0 %v156
  %199 = vmatprep.subr.bf16.mxu0 0
  %200 = vmatpush1.bf16.msra.mxu0 %v157
  %201 = vmatprep.subr.bf16.mxu0 0
  %202 = vmatpush1.bf16.msra.mxu0 %v158
  %203 = vmatprep.subr.bf16.mxu0 0
  %204 = vmatpush1.bf16.msra.mxu0 %v159
  %205 = vmatprep.subr.bf16.mxu0 0
  %206 = vmatpush1.bf16.msra.mxu0 %v160
  %207 = vmatprep.subr.bf16.mxu0 0
  %208 = vmatpush1.bf16.msra.mxu0 %v161
  %209 = vmatprep.subr.bf16.mxu0 0
  %210 = vmatpush1.bf16.msra.mxu0 %v162
  %211 = vmatprep.mubr.bf16.mxu0 %v76
  %212 = vmatmul.mubr.bf16.gmra.mrb[0].mxu0 %v75
  %v213 = vpop.f32.mrb[0].mxu0
  %v214 = vadd.f32 0.0, %v213
  %v215 = vpop.f32.mrb[0].mxu0
  %v216 = vpop.f32.mrb[0].mxu0
  %v217 = vadd.f32 0.0, %v216
  %v218 = vpop.f32.mrb[0].mxu0
  %219 = vmatprep.mubr.bf16.mxu0 %v78
  %220 = vmatmul.mubr.bf16.gmra.mrb[0].mxu0 %v77
  %v221 = vpop.f32.mrb[0].mxu0
  %v222 = vadd.f32 0.0, %v221
  %v223 = vpop.f32.mrb[0].mxu0
  %v224 = vpop.f32.mrb[0].mxu0
  %v225 = vadd.f32 0.0, %v224
  %v226 = vpop.f32.mrb[0].mxu0
  %227 = vdwg.mxu0
  %v228 = vadd.f32 %v27, %v214
  %v229 = vadd.f32 %v28, %v217
  %v230 = vadd.f32 %v29, %v222
  %v231 = vadd.f32 %v30, %v225
  %232 = vst [vmem:[#allocation2] sm:$0xff] %v228
  %233 = vst [vmem:[#allocation2 + $0x8] sm:$0xff] %v229
  %234 = vst [vmem:[#allocation2 + $0x10] sm:$0xff] %v230
  %235 = vst [vmem:[#allocation2 + $0x18] sm:$0xff] %v231
  // Predicated region
  $region18: #{vqvae_forward.17} parent=0 // pred_check
    %p236 = pneg %p15
  $region19: #{vqvae_forward.17} parent=0 // pred_check_branch
    %238 = sbr.rel (%p236) target = $region21
  $region20: #{vqvae_forward.17} parent=0 // pred_region
    %v239 = vld [vmem:[#allocation2] sm:$0xff]
    %v240 = vld [vmem:[#allocation2 + $0x8] sm:$0xff]
    %v241 = vld [vmem:[#allocation2 + $0x10] sm:$0xff]
    %v242 = vld [vmem:[#allocation2 + $0x18] sm:$0xff]
    %v243 = vld [vmem:[%s2] sm:$0x1]
    %v245 = vlaneseq
    %v246 = vshrl.u32 %v245, 7
    %v247 = vsub.s32 0, %v246
    %v248 = vrot.slane %v243, %v247
    %v250 = vadd.f32 %v239, %v248
    %v251 = vadd.f32 %v240, %v248
    %v252 = vadd.f32 %v241, %v248
    %v253 = vadd.f32 %v242, %v248
    %v254 = vmax.f32 %v250, 0.0
    %v255 = vmax.f32 %v251, 0.0
    %v256 = vmax.f32 %v252, 0.0
    %v257 = vmax.f32 %v253, 0.0
    %258 = vst [vmem:[%s3] sm:$0xff] %v254
    %259 = vst [vmem:[%s3 + $0x8] sm:$0xff] %v255
    %260 = vst [vmem:[%s3 + $0x10] sm:$0xff] %v256
    %261 = vst [vmem:[%s3 + $0x18] sm:$0xff] %v257
  $region21: #{vqvae_forward.17} parent=0 // pred_fallthru
    _
  // Predicated region
  $region22: #{vqvae_forward.17} parent=0 // pred_check
    _
  $region23: #{vqvae_forward.17} parent=0 // pred_check_branch
    %263 = sbr.rel (0) target = $region25
  $region24: #{vqvae_forward.17} parent=0 // pred_region
    _
  $region25: #{vqvae_forward.17} parent=0 // pred_fallthru
    _
  // Predicated region
  $region26: #{vqvae_forward.17} parent=0 // pred_check
    _
  $region27: #{vqvae_forward.17} parent=0 // pred_check_branch
    %265 = sbr.rel (0) target = $region29
  $region28: #{vqvae_forward.17} parent=0 // pred_region
    _
  $region29: #{vqvae_forward.17} parent=0 // pred_fallthru
    _

// kernel: vqvae_forward.18
$region0: #{vqvae_forward.18}
  #allocation0 [shape = 'u32[]', space=smem, size = 0x4, offset = 0x4, fixed_abs, tag = 'smem constant byte address 0x4 - core index']
  #allocation1 [shape = 'u32[144,128]{1,0:T(1,128)}', space=vmem, size = 0x12000, scoped, tag = 'internal scratch']
  #allocation2 [shape = 'f32[32,128]{1,0:T(8,128)}', space=vmem, size = 0x4000, scoped, tag = 'scratch operand']
  %s0 = inlined_call_operand.vmem [shape: bf16[32,384], index: 0, kind: input, shape index: {}]
  %s1 = inlined_call_operand.vmem [shape: bf16[384,128], index: 1, kind: input, shape index: {}]
  %s2 = inlined_call_operand.vmem [shape: f32[1,128], index: 2, kind: input, shape index: {}]
  %s3 = inlined_call_operand.vmem [shape: f32[32,128], index: 3, kind: output, shape index: {}]
  %s4 = sld [smem:[#allocation0]]
  $region30: #{vqvae_forward.18} parent=0
    _
  %s6 = ssub.s32 1, %s4
  %s7 = scalar_select 0, %s6, %s4
  // Predicated region
  $region2: #{vqvae_forward.18} parent=0 // pred_check
    _
  $region3: #{vqvae_forward.18} parent=0 // pred_check_branch
    %9 = sbr.rel (0) target = $region5
  $region4: #{vqvae_forward.18} parent=0 // pred_region
    _
  $region5: #{vqvae_forward.18} parent=0 // pred_fallthru
    _
  // Predicated region
  $region6: #{vqvae_forward.18} parent=0 // pred_check
    _
  $region7: #{vqvae_forward.18} parent=0 // pred_check_branch
    %11 = sbr.rel (0) target = $region9
  $region8: #{vqvae_forward.18} parent=0 // pred_region
    _
  $region9: #{vqvae_forward.18} parent=0 // pred_fallthru
    _
  // Predicated region
  $region10: #{vqvae_forward.18} parent=0 // pred_check
    _
  $region11: #{vqvae_forward.18} parent=0 // pred_check_branch
    %13 = sbr.rel (0) target = $region13
  $region12: #{vqvae_forward.18} parent=0 // pred_region
    _
  $region13: #{vqvae_forward.18} parent=0 // pred_fallthru
    _
  %p15 = scmp.eq.s32.totalorder 0, 0
  // Predicated region
  $region14: #{vqvae_forward.18} parent=0 // pred_check
    %p16 = pneg %p15
  $region15: #{vqvae_forward.18} parent=0 // pred_check_branch
    %18 = sbr.rel (%p16) target = $region17
  $region16: #{vqvae_forward.18} parent=0 // pred_region
    %19 = vst [vmem:[#allocation2] sm:$0xff] 0.0
    %20 = vst [vmem:[#allocation2 + $0x8] sm:$0xff] 0.0
    %21 = vst [vmem:[#allocation2 + $0x10] sm:$0xff] 0.0
    %22 = vst [vmem:[#allocation2 + $0x18] sm:$0xff] 0.0
  $region17: #{vqvae_forward.18} parent=0 // pred_fallthru
    _
  %v23 = vld [vmem:[%s0] sm:$0xff]
  %v24 = vld [vmem:[%s0 + $0x8] sm:$0xf]
  %v25 = vld [vmem:[%s0 + $0xc] sm:$0xff]
  %v26 = vld [vmem:[%s0 + $0x14] sm:$0xf]
  %v27 = vld [vmem:[%s0 + $0x18] sm:$0xff]
  %v28 = vld [vmem:[%s0 + $0x20] sm:$0xf]
  %v29 = vld [vmem:[%s0 + $0x24] sm:$0xff]
  %v30 = vld [vmem:[%s0 + $0x2c] sm:$0xf]
  %v31 = vld [vmem:[#allocation2] sm:$0xff]
  %v32 = vld [vmem:[#allocation2 + $0x8] sm:$0xff]
  %v33 = vld [vmem:[#allocation2 + $0x10] sm:$0xff]
  %v34 = vld [vmem:[#allocation2 + $0x18] sm:$0xff]
  %v35 = vld [vmem:[%s1] sm:$0xf]
  %v36 = vld [vmem:[%s1 + $0x4] sm:$0xf]
  %v37 = vld [vmem:[%s1 + $0x8] sm:$0xf]
  %v38 = vld [vmem:[%s1 + $0xc] sm:$0xf]
  %v39 = vld [vmem:[%s1 + $0x10] sm:$0xf]
  %v40 = vld [vmem:[%s1 + $0x14] sm:$0xf]
  %v41 = vld [vmem:[%s1 + $0x18] sm:$0xf]
  %v42 = vld [vmem:[%s1 + $0x1c] sm:$0xf]
  %v43 = vld [vmem:[%s1 + $0x20] sm:$0xf]
  %v44 = vld [vmem:[%s1 + $0x24] sm:$0xf]
  %v45 = vld [vmem:[%s1 + $0x28] sm:$0xf]
  %v46 = vld [vmem:[%s1 + $0x2c] sm:$0xf]
  %v47 = vld [vmem:[%s1 + $0x30] sm:$0xf]
  %v48 = vld [vmem:[%s1 + $0x34] sm:$0xf]
  %v49 = vld [vmem:[%s1 + $0x38] sm:$0xf]
  %v50 = vld [vmem:[%s1 + $0x3c] sm:$0xf]
  %v51 = vld [vmem:[%s1 + $0x40] sm:$0xf]
  %v52 = vld [vmem:[%s1 + $0x44] sm:$0xf]
  %v53 = vld [vmem:[%s1 + $0x48] sm:$0xf]
  %v54 = vld [vmem:[%s1 + $0x4c] sm:$0xf]
  %v55 = vld [vmem:[%s1 + $0x50] sm:$0xf]
  %v56 = vld [vmem:[%s1 + $0x54] sm:$0xf]
  %v57 = vld [vmem:[%s1 + $0x58] sm:$0xf]
  %v58 = vld [vmem:[%s1 + $0x5c] sm:$0xf]
  %v59 = vld [vmem:[%s1 + $0x60] sm:$0xf]
  %v60 = vld [vmem:[%s1 + $0x64] sm:$0xf]
  %v61 = vld [vmem:[%s1 + $0x68] sm:$0xf]
  %v62 = vld [vmem:[%s1 + $0x6c] sm:$0xf]
  %v63 = vld [vmem:[%s1 + $0x70] sm:$0xf]
  %v64 = vld [vmem:[%s1 + $0x74] sm:$0xf]
  %v65 = vld [vmem:[%s1 + $0x78] sm:$0xf]
  %v66 = vld [vmem:[%s1 + $0x7c] sm:$0xf]
  %v67 = vld [vmem:[%s1 + $0x80] sm:$0xf]
  %v68 = vld [vmem:[%s1 + $0x84] sm:$0xf]
  %v69 = vld [vmem:[%s1 + $0x88] sm:$0xf]
  %v70 = vld [vmem:[%s1 + $0x8c] sm:$0xf]
  %v71 = vld [vmem:[%s1 + $0x90] sm:$0xf]
  %v72 = vld [vmem:[%s1 + $0x94] sm:$0xf]
  %v73 = vld [vmem:[%s1 + $0x98] sm:$0xf]
  %v74 = vld [vmem:[%s1 + $0x9c] sm:$0xf]
  %v75 = vld [vmem:[%s1 + $0xa0] sm:$0xf]
  %v76 = vld [vmem:[%s1 + $0xa4] sm:$0xf]
  %v77 = vld [vmem:[%s1 + $0xa8] sm:$0xf]
  %v78 = vld [vmem:[%s1 + $0xac] sm:$0xf]
  %v79 = vld [vmem:[%s1 + $0xb0] sm:$0xf]
  %v80 = vld [vmem:[%s1 + $0xb4] sm:$0xf]
  %v81 = vld [vmem:[%s1 + $0xb8] sm:$0xf]
  %v82 = vld [vmem:[%s1 + $0xbc] sm:$0xf]
  %v91 = vunpack.c.l.b16 %v23
  %v92 = vunpack.c.h.b16 %v23
  %v93 = vunpack.c.l.b16 %v24
  %v94 = vunpack.c.l.b16 %v25
  %v95 = vunpack.c.h.b16 %v25
  %v96 = vunpack.c.l.b16 %v26
  %v97 = vunpack.c.l.b16 %v27
  %v98 = vunpack.c.h.b16 %v27
  %v99 = vunpack.c.l.b16 %v28
  %v100 = vunpack.c.l.b16 %v29
  %v101 = vunpack.c.h.b16 %v29
  %v102 = vunpack.c.l.b16 %v30
  %v103 = vpack.c.b16 %v94, %v91
  %v104 = vpack.c.b16 %v95, %v92
  %v105 = vpack.c.b16 %v96, %v93
  %v106 = vpack.c.b16 %v100, %v97
  %v107 = vpack.c.b16 %v101, %v98
  %v108 = vpack.c.b16 %v102, %v99
  %v163 = vunpack.c.l.b16 %v35
  %v164 = vunpack.c.l.b16 %v36
  %v165 = vunpack.c.l.b16 %v37
  %v166 = vunpack.c.l.b16 %v38
  %v167 = vunpack.c.l.b16 %v39
  %v168 = vunpack.c.l.b16 %v40
  %v169 = vunpack.c.l.b16 %v41
  %v170 = vunpack.c.l.b16 %v42
  %v171 = vunpack.c.l.b16 %v43
  %v172 = vunpack.c.l.b16 %v44
  %v173 = vunpack.c.l.b16 %v45
  %v174 = vunpack.c.l.b16 %v46
  %v175 = vunpack.c.l.b16 %v47
  %v176 = vunpack.c.l.b16 %v48
  %v177 = vunpack.c.l.b16 %v49
  %v178 = vunpack.c.l.b16 %v50
  %v179 = vunpack.c.l.b16 %v51
  %v180 = vunpack.c.l.b16 %v52
  %v181 = vunpack.c.l.b16 %v53
  %v182 = vunpack.c.l.b16 %v54
  %v183 = vunpack.c.l.b16 %v55
  %v184 = vunpack.c.l.b16 %v56
  %v185 = vunpack.c.l.b16 %v57
  %v186 = vunpack.c.l.b16 %v58
  %v187 = vunpack.c.l.b16 %v59
  %v188 = vunpack.c.l.b16 %v60
  %v189 = vunpack.c.l.b16 %v61
  %v190 = vunpack.c.l.b16 %v62
  %v191 = vunpack.c.l.b16 %v63
  %v192 = vunpack.c.l.b16 %v64
  %v193 = vunpack.c.l.b16 %v65
  %v194 = vunpack.c.l.b16 %v66
  %v195 = vunpack.c.l.b16 %v67
  %v196 = vunpack.c.l.b16 %v68
  %v197 = vunpack.c.l.b16 %v69
  %v198 = vunpack.c.l.b16 %v70
  %v199 = vunpack.c.l.b16 %v71
  %v200 = vunpack.c.l.b16 %v72
  %v201 = vunpack.c.l.b16 %v73
  %v202 = vunpack.c.l.b16 %v74
  %v203 = vunpack.c.l.b16 %v75
  %v204 = vunpack.c.l.b16 %v76
  %v205 = vunpack.c.l.b16 %v77
  %v206 = vunpack.c.l.b16 %v78
  %v207 = vunpack.c.l.b16 %v79
  %v208 = vunpack.c.l.b16 %v80
  %v209 = vunpack.c.l.b16 %v81
  %v210 = vunpack.c.l.b16 %v82
  %v211 = vpack.c.b16 %v164, %v163
  %v212 = vpack.c.b16 %v166, %v165
  %v213 = vpack.c.b16 %v168, %v167
  %v214 = vpack.c.b16 %v170, %v169
  %v215 = vpack.c.b16 %v172, %v171
  %v216 = vpack.c.b16 %v174, %v173
  %v217 = vpack.c.b16 %v176, %v175
  %v218 = vpack.c.b16 %v178, %v177
  %v219 = vpack.c.b16 %v180, %v179
  %v220 = vpack.c.b16 %v182, %v181
  %v221 = vpack.c.b16 %v184, %v183
  %v222 = vpack.c.b16 %v186, %v185
  %v223 = vpack.c.b16 %v188, %v187
  %v224 = vpack.c.b16 %v190, %v189
  %v225 = vpack.c.b16 %v192, %v191
  %v226 = vpack.c.b16 %v194, %v193
  %v227 = vpack.c.b16 %v196, %v195
  %v228 = vpack.c.b16 %v198, %v197
  %v229 = vpack.c.b16 %v200, %v199
  %v230 = vpack.c.b16 %v202, %v201
  %v231 = vpack.c.b16 %v204, %v203
  %v232 = vpack.c.b16 %v206, %v205
  %v233 = vpack.c.b16 %v208, %v207
  %v234 = vpack.c.b16 %v210, %v209
  %259 = vmatprep.subr.bf16.mxu0 0
  %260 = vmatpush1.bf16.msra.mxu0 %v211
  %261 = vmatprep.subr.bf16.mxu0 0
  %262 = vmatpush1.bf16.msra.mxu0 %v212
  %263 = vmatprep.subr.bf16.mxu0 0
  %264 = vmatpush1.bf16.msra.mxu0 %v213
  %265 = vmatprep.subr.bf16.mxu0 0
  %266 = vmatpush1.bf16.msra.mxu0 %v214
  %267 = vmatprep.subr.bf16.mxu0 0
  %268 = vmatpush1.bf16.msra.mxu0 %v215
  %269 = vmatprep.subr.bf16.mxu0 0
  %270 = vmatpush1.bf16.msra.mxu0 %v216
  %271 = vmatprep.subr.bf16.mxu0 0
  %272 = vmatpush1.bf16.msra.mxu0 %v217
  %273 = vmatprep.subr.bf16.mxu0 0
  %274 = vmatpush1.bf16.msra.mxu0 %v218
  %275 = vmatprep.subr.bf16.mxu0 0
  %276 = vmatpush1.bf16.msra.mxu0 %v219
  %277 = vmatprep.subr.bf16.mxu0 0
  %278 = vmatpush1.bf16.msra.mxu0 %v220
  %279 = vmatprep.subr.bf16.mxu0 0
  %280 = vmatpush1.bf16.msra.mxu0 %v221
  %281 = vmatprep.subr.bf16.mxu0 0
  %282 = vmatpush1.bf16.msra.mxu0 %v222
  %283 = vmatprep.subr.bf16.mxu0 0
  %284 = vmatpush1.bf16.msra.mxu0 %v223
  %285 = vmatprep.subr.bf16.mxu0 0
  %286 = vmatpush1.bf16.msra.mxu0 %v224
  %287 = vmatprep.subr.bf16.mxu0 0
  %288 = vmatpush1.bf16.msra.mxu0 %v225
  %289 = vmatprep.subr.bf16.mxu0 0
  %290 = vmatpush1.bf16.msra.mxu0 %v226
  %291 = vmatprep.mubr.bf16.mxu0 %v104
  %292 = vmatmul.mubr.bf16.gmra.mrb[0].mxu0 %v103
  %v293 = vpop.f32.mrb[0].mxu0
  %v294 = vadd.f32 0.0, %v293
  %v295 = vpop.f32.mrb[0].mxu0
  %v296 = vpop.f32.mrb[0].mxu0
  %v297 = vadd.f32 0.0, %v296
  %v298 = vpop.f32.mrb[0].mxu0
  %299 = vmatprep.mubr.bf16.mxu0 %v107
  %300 = vmatmul.mubr.bf16.gmra.mrb[0].mxu0 %v106
  %v301 = vpop.f32.mrb[0].mxu0
  %v302 = vadd.f32 0.0, %v301
  %v303 = vpop.f32.mrb[0].mxu0
  %v304 = vpop.f32.mrb[0].mxu0
  %v305 = vadd.f32 0.0, %v304
  %v306 = vpop.f32.mrb[0].mxu0
  %307 = vdwg.mxu0
  %308 = vmatprep.subr.bf16.mxu0 0
  %309 = vmatpush1.bf16.msra.mxu0 %v227
  %310 = vmatprep.subr.bf16.mxu0 0
  %311 = vmatpush1.bf16.msra.mxu0 %v228
  %312 = vmatprep.subr.bf16.mxu0 0
  %313 = vmatpush1.bf16.msra.mxu0 %v229
  %314 = vmatprep.subr.bf16.mxu0 0
  %315 = vmatpush1.bf16.msra.mxu0 %v230
  %316 = vmatprep.subr.bf16.mxu0 0
  %317 = vmatpush1.bf16.msra.mxu0 %v231
  %318 = vmatprep.subr.bf16.mxu0 0
  %319 = vmatpush1.bf16.msra.mxu0 %v232
  %320 = vmatprep.subr.bf16.mxu0 0
  %321 = vmatpush1.bf16.msra.mxu0 %v233
  %322 = vmatprep.subr.bf16.mxu0 0
  %323 = vmatpush1.bf16.msra.mxu0 %v234
  %324 = vmatprep.subr.bf16.mxu0 0
  %325 = vmatpush1.bf16.msra.mxu0 0
  %326 = vmatprep.subr.bf16.mxu0 0
  %327 = vmatpush1.bf16.msra.mxu0 0
  %328 = vmatprep.subr.bf16.mxu0 0
  %329 = vmatpush1.bf16.msra.mxu0 0
  %330 = vmatprep.subr.bf16.mxu0 0
  %331 = vmatpush1.bf16.msra.mxu0 0
  %332 = vmatprep.subr.bf16.mxu0 0
  %333 = vmatpush1.bf16.msra.mxu0 0
  %334 = vmatprep.subr.bf16.mxu0 0
  %335 = vmatpush1.bf16.msra.mxu0 0
  %336 = vmatprep.subr.bf16.mxu0 0
  %337 = vmatpush1.bf16.msra.mxu0 0
  %338 = vmatprep.subr.bf16.mxu0 0
  %339 = vmatpush1.bf16.msra.mxu0 0
  %340 = vmatprep.mubr.bf16.mxu0 0
  %341 = vmatmul.mubr.bf16.gmra.mrb[0].mxu0 %v105
  %v342 = vpop.f32.mrb[0].mxu0
  %v343 = vadd.f32 %v294, %v342
  %v344 = vpop.f32.mrb[0].mxu0
  %v345 = vpop.f32.mrb[0].mxu0
  %v346 = vadd.f32 %v297, %v345
  %v347 = vpop.f32.mrb[0].mxu0
  %348 = vmatprep.mubr.bf16.mxu0 0
  %349 = vmatmul.mubr.bf16.gmra.mrb[0].mxu0 %v108
  %v350 = vpop.f32.mrb[0].mxu0
  %v351 = vadd.f32 %v302, %v350
  %v352 = vpop.f32.mrb[0].mxu0
  %v353 = vpop.f32.mrb[0].mxu0
  %v354 = vadd.f32 %v305, %v353
  %v355 = vpop.f32.mrb[0].mxu0
  %356 = vdwg.mxu0
  %v357 = vadd.f32 %v31, %v343
  %v358 = vadd.f32 %v32, %v346
  %v359 = vadd.f32 %v33, %v351
  %v360 = vadd.f32 %v34, %v354
  %361 = vst [vmem:[#allocation2] sm:$0xff] %v357
  %362 = vst [vmem:[#allocation2 + $0x8] sm:$0xff] %v358
  %363 = vst [vmem:[#allocation2 + $0x10] sm:$0xff] %v359
  %364 = vst [vmem:[#allocation2 + $0x18] sm:$0xff] %v360
  // Predicated region
  $region18: #{vqvae_forward.18} parent=0 // pred_check
    %p365 = pneg %p15
  $region19: #{vqvae_forward.18} parent=0 // pred_check_branch
    %367 = sbr.rel (%p365) target = $region21
  $region20: #{vqvae_forward.18} parent=0 // pred_region
    %v368 = vld [vmem:[#allocation2] sm:$0xff]
    %v369 = vld [vmem:[#allocation2 + $0x8] sm:$0xff]
    %v370 = vld [vmem:[#allocation2 + $0x10] sm:$0xff]
    %v371 = vld [vmem:[#allocation2 + $0x18] sm:$0xff]
    %v372 = vld [vmem:[%s2] sm:$0x1]
    %v374 = vlaneseq
    %v375 = vshrl.u32 %v374, 7
    %v376 = vsub.s32 0, %v375
    %v377 = vrot.slane %v372, %v376
    %v379 = vadd.f32 %v368, %v377
    %v380 = vadd.f32 %v369, %v377
    %v381 = vadd.f32 %v370, %v377
    %v382 = vadd.f32 %v371, %v377
    %383 = vst [vmem:[%s3] sm:$0xff] %v379
    %384 = vst [vmem:[%s3 + $0x8] sm:$0xff] %v380
    %385 = vst [vmem:[%s3 + $0x10] sm:$0xff] %v381
    %386 = vst [vmem:[%s3 + $0x18] sm:$0xff] %v382
  $region21: #{vqvae_forward.18} parent=0 // pred_fallthru
    _
  // Predicated region
  $region22: #{vqvae_forward.18} parent=0 // pred_check
    _
  $region23: #{vqvae_forward.18} parent=0 // pred_check_branch
    %388 = sbr.rel (0) target = $region25
  $region24: #{vqvae_forward.18} parent=0 // pred_region
    _
  $region25: #{vqvae_forward.18} parent=0 // pred_fallthru
    _
  // Predicated region
  $region26: #{vqvae_forward.18} parent=0 // pred_check
    _
  $region27: #{vqvae_forward.18} parent=0 // pred_check_branch
    %390 = sbr.rel (0) target = $region29
  $region28: #{vqvae_forward.18} parent=0 // pred_region
    _
  $region29: #{vqvae_forward.18} parent=0 // pred_fallthru
    _

// kernel: vqvae_forward.20
$region0: #{vqvae_forward.20}
  #allocation0 [shape = 'u32[]', space=smem, size = 0x4, offset = 0x4, fixed_abs, tag = 'smem constant byte address 0x4 - core index']
  #allocation1 [shape = 'u32[144,128]{1,0:T(1,128)}', space=vmem, size = 0x12000, scoped, tag = 'internal scratch']
  #allocation2 [shape = 'f32[32,128]{1,0:T(8,128)}', space=vmem, size = 0x4000, scoped, tag = 'scratch operand']
  %s0 = inlined_call_operand.vmem [shape: bf16[32,128], index: 0, kind: input, shape index: {}]
  %s1 = inlined_call_operand.vmem [shape: bf16[128,128], index: 1, kind: input, shape index: {}]
  %s2 = inlined_call_operand.vmem [shape: f32[1,128], index: 2, kind: input, shape index: {}]
  %s3 = inlined_call_operand.vmem [shape: f32[32,128], index: 3, kind: input, shape index: {}]
  %s4 = inlined_call_operand.vmem [shape: f32[32,128], index: 4, kind: output, shape index: {}]
  %s5 = sld [smem:[#allocation0]]
  $region34: #{vqvae_forward.20} parent=0
    _
  %s7 = ssub.s32 1, %s5
  %s8 = scalar_select 0, %s7, %s5
  // Predicated region
  $region2: #{vqvae_forward.20} parent=0 // pred_check
    _
  $region3: #{vqvae_forward.20} parent=0 // pred_check_branch
    %10 = sbr.rel (0) target = $region5
  $region4: #{vqvae_forward.20} parent=0 // pred_region
    _
  $region5: #{vqvae_forward.20} parent=0 // pred_fallthru
    _
  // Predicated region
  $region6: #{vqvae_forward.20} parent=0 // pred_check
    _
  $region7: #{vqvae_forward.20} parent=0 // pred_check_branch
    %12 = sbr.rel (0) target = $region9
  $region8: #{vqvae_forward.20} parent=0 // pred_region
    _
  $region9: #{vqvae_forward.20} parent=0 // pred_fallthru
    _
  // Predicated region
  $region10: #{vqvae_forward.20} parent=0 // pred_check
    _
  $region11: #{vqvae_forward.20} parent=0 // pred_check_branch
    %14 = sbr.rel (0) target = $region13
  $region12: #{vqvae_forward.20} parent=0 // pred_region
    _
  $region13: #{vqvae_forward.20} parent=0 // pred_fallthru
    _
  // Predicated region
  $region14: #{vqvae_forward.20} parent=0 // pred_check
    _
  $region15: #{vqvae_forward.20} parent=0 // pred_check_branch
    %16 = sbr.rel (0) target = $region17
  $region16: #{vqvae_forward.20} parent=0 // pred_region
    _
  $region17: #{vqvae_forward.20} parent=0 // pred_fallthru
    _
  %p18 = scmp.eq.s32.totalorder 0, 0
  // Predicated region
  $region18: #{vqvae_forward.20} parent=0 // pred_check
    %p19 = pneg %p18
  $region19: #{vqvae_forward.20} parent=0 // pred_check_branch
    %21 = sbr.rel (%p19) target = $region21
  $region20: #{vqvae_forward.20} parent=0 // pred_region
    %22 = vst [vmem:[#allocation2] sm:$0xff] 0.0
    %23 = vst [vmem:[#allocation2 + $0x8] sm:$0xff] 0.0
    %24 = vst [vmem:[#allocation2 + $0x10] sm:$0xff] 0.0
    %25 = vst [vmem:[#allocation2 + $0x18] sm:$0xff] 0.0
  $region21: #{vqvae_forward.20} parent=0 // pred_fallthru
    _
  %v26 = vld [vmem:[%s0] sm:$0xf]
  %v27 = vld [vmem:[%s0 + $0x4] sm:$0xf]
  %v28 = vld [vmem:[%s0 + $0x8] sm:$0xf]
  %v29 = vld [vmem:[%s0 + $0xc] sm:$0xf]
  %v30 = vld [vmem:[#allocation2] sm:$0xff]
  %v31 = vld [vmem:[#allocation2 + $0x8] sm:$0xff]
  %v32 = vld [vmem:[#allocation2 + $0x10] sm:$0xff]
  %v33 = vld [vmem:[#allocation2 + $0x18] sm:$0xff]
  %v34 = vld [vmem:[%s1] sm:$0xf]
  %v35 = vld [vmem:[%s1 + $0x4] sm:$0xf]
  %v36 = vld [vmem:[%s1 + $0x8] sm:$0xf]
  %v37 = vld [vmem:[%s1 + $0xc] sm:$0xf]
  %v38 = vld [vmem:[%s1 + $0x10] sm:$0xf]
  %v39 = vld [vmem:[%s1 + $0x14] sm:$0xf]
  %v40 = vld [vmem:[%s1 + $0x18] sm:$0xf]
  %v41 = vld [vmem:[%s1 + $0x1c] sm:$0xf]
  %v42 = vld [vmem:[%s1 + $0x20] sm:$0xf]
  %v43 = vld [vmem:[%s1 + $0x24] sm:$0xf]
  %v44 = vld [vmem:[%s1 + $0x28] sm:$0xf]
  %v45 = vld [vmem:[%s1 + $0x2c] sm:$0xf]
  %v46 = vld [vmem:[%s1 + $0x30] sm:$0xf]
  %v47 = vld [vmem:[%s1 + $0x34] sm:$0xf]
  %v48 = vld [vmem:[%s1 + $0x38] sm:$0xf]
  %v49 = vld [vmem:[%s1 + $0x3c] sm:$0xf]
  %v54 = vunpack.c.l.b16 %v26
  %v55 = vunpack.c.l.b16 %v27
  %v56 = vunpack.c.l.b16 %v28
  %v57 = vunpack.c.l.b16 %v29
  %v58 = vpack.c.b16 %v55, %v54
  %v59 = vpack.c.b16 %v57, %v56
  %v78 = vunpack.c.l.b16 %v34
  %v79 = vunpack.c.l.b16 %v35
  %v80 = vunpack.c.l.b16 %v36
  %v81 = vunpack.c.l.b16 %v37
  %v82 = vunpack.c.l.b16 %v38
  %v83 = vunpack.c.l.b16 %v39
  %v84 = vunpack.c.l.b16 %v40
  %v85 = vunpack.c.l.b16 %v41
  %v86 = vunpack.c.l.b16 %v42
  %v87 = vunpack.c.l.b16 %v43
  %v88 = vunpack.c.l.b16 %v44
  %v89 = vunpack.c.l.b16 %v45
  %v90 = vunpack.c.l.b16 %v46
  %v91 = vunpack.c.l.b16 %v47
  %v92 = vunpack.c.l.b16 %v48
  %v93 = vunpack.c.l.b16 %v49
  %v94 = vpack.c.b16 %v79, %v78
  %v95 = vpack.c.b16 %v81, %v80
  %v96 = vpack.c.b16 %v83, %v82
  %v97 = vpack.c.b16 %v85, %v84
  %v98 = vpack.c.b16 %v87, %v86
  %v99 = vpack.c.b16 %v89, %v88
  %v100 = vpack.c.b16 %v91, %v90
  %v101 = vpack.c.b16 %v93, %v92
  %110 = vmatprep.subr.bf16.mxu0 0
  %111 = vmatpush1.bf16.msra.mxu0 %v94
  %112 = vmatprep.subr.bf16.mxu0 0
  %113 = vmatpush1.bf16.msra.mxu0 %v95
  %114 = vmatprep.subr.bf16.mxu0 0
  %115 = vmatpush1.bf16.msra.mxu0 %v96
  %116 = vmatprep.subr.bf16.mxu0 0
  %117 = vmatpush1.bf16.msra.mxu0 %v97
  %118 = vmatprep.subr.bf16.mxu0 0
  %119 = vmatpush1.bf16.msra.mxu0 %v98
  %120 = vmatprep.subr.bf16.mxu0 0
  %121 = vmatpush1.bf16.msra.mxu0 %v99
  %122 = vmatprep.subr.bf16.mxu0 0
  %123 = vmatpush1.bf16.msra.mxu0 %v100
  %124 = vmatprep.subr.bf16.mxu0 0
  %125 = vmatpush1.bf16.msra.mxu0 %v101
  %126 = vmatprep.subr.bf16.mxu0 0
  %127 = vmatpush1.bf16.msra.mxu0 0
  %128 = vmatprep.subr.bf16.mxu0 0
  %129 = vmatpush1.bf16.msra.mxu0 0
  %130 = vmatprep.subr.bf16.mxu0 0
  %131 = vmatpush1.bf16.msra.mxu0 0
  %132 = vmatprep.subr.bf16.mxu0 0
  %133 = vmatpush1.bf16.msra.mxu0 0
  %134 = vmatprep.subr.bf16.mxu0 0
  %135 = vmatpush1.bf16.msra.mxu0 0
  %136 = vmatprep.subr.bf16.mxu0 0
  %137 = vmatpush1.bf16.msra.mxu0 0
  %138 = vmatprep.subr.bf16.mxu0 0
  %139 = vmatpush1.bf16.msra.mxu0 0
  %140 = vmatprep.subr.bf16.mxu0 0
  %141 = vmatpush1.bf16.msra.mxu0 0
  %142 = vmatprep.mubr.bf16.mxu0 0
  %143 = vmatmul.mubr.bf16.gmra.mrb[0].mxu0 %v58
  %v144 = vpop.f32.mrb[0].mxu0
  %v145 = vadd.f32 0.0, %v144
  %v146 = vpop.f32.mrb[0].mxu0
  %v147 = vpop.f32.mrb[0].mxu0
  %v148 = vadd.f32 0.0, %v147
  %v149 = vpop.f32.mrb[0].mxu0
  %150 = vmatprep.mubr.bf16.mxu0 0
  %151 = vmatmul.mubr.bf16.gmra.mrb[0].mxu0 %v59
  %v152 = vpop.f32.mrb[0].mxu0
  %v153 = vadd.f32 0.0, %v152
  %v154 = vpop.f32.mrb[0].mxu0
  %v155 = vpop.f32.mrb[0].mxu0
  %v156 = vadd.f32 0.0, %v155
  %v157 = vpop.f32.mrb[0].mxu0
  %158 = vdwg.mxu0
  %v159 = vadd.f32 %v30, %v145
  %v160 = vadd.f32 %v31, %v148
  %v161 = vadd.f32 %v32, %v153
  %v162 = vadd.f32 %v33, %v156
  %163 = vst [vmem:[#allocation2] sm:$0xff] %v159
  %164 = vst [vmem:[#allocation2 + $0x8] sm:$0xff] %v160
  %165 = vst [vmem:[#allocation2 + $0x10] sm:$0xff] %v161
  %166 = vst [vmem:[#allocation2 + $0x18] sm:$0xff] %v162
  // Predicated region
  $region22: #{vqvae_forward.20} parent=0 // pred_check
    %p167 = pneg %p18
  $region23: #{vqvae_forward.20} parent=0 // pred_check_branch
    %169 = sbr.rel (%p167) target = $region25
  $region24: #{vqvae_forward.20} parent=0 // pred_region
    %v170 = vld [vmem:[#allocation2] sm:$0xff]
    %v171 = vld [vmem:[#allocation2 + $0x8] sm:$0xff]
    %v172 = vld [vmem:[#allocation2 + $0x10] sm:$0xff]
    %v173 = vld [vmem:[#allocation2 + $0x18] sm:$0xff]
    %v174 = vld [vmem:[%s2] sm:$0x1]
    %v176 = vlaneseq
    %v177 = vshrl.u32 %v176, 7
    %v178 = vsub.s32 0, %v177
    %v179 = vrot.slane %v174, %v178
    %v181 = vadd.f32 %v170, %v179
    %v182 = vadd.f32 %v171, %v179
    %v183 = vadd.f32 %v172, %v179
    %v184 = vadd.f32 %v173, %v179
    %v185 = vld [vmem:[%s3] sm:$0xff]
    %v186 = vld [vmem:[%s3 + $0x8] sm:$0xff]
    %v187 = vld [vmem:[%s3 + $0x10] sm:$0xff]
    %v188 = vld [vmem:[%s3 + $0x18] sm:$0xff]
    %v189 = vadd.f32 %v181, %v185
    %v190 = vadd.f32 %v182, %v186
    %v191 = vadd.f32 %v183, %v187
    %v192 = vadd.f32 %v184, %v188
    %193 = vst [vmem:[%s4] sm:$0xff] %v189
    %194 = vst [vmem:[%s4 + $0x8] sm:$0xff] %v190
    %195 = vst [vmem:[%s4 + $0x10] sm:$0xff] %v191
    %196 = vst [vmem:[%s4 + $0x18] sm:$0xff] %v192
  $region25: #{vqvae_forward.20} parent=0 // pred_fallthru
    _
  // Predicated region
  $region26: #{vqvae_forward.20} parent=0 // pred_check
    _
  $region27: #{vqvae_forward.20} parent=0 // pred_check_branch
    %198 = sbr.rel (0) target = $region29
  $region28: #{vqvae_forward.20} parent=0 // pred_region
    _
  $region29: #{vqvae_forward.20} parent=0 // pred_fallthru
    _
  // Predicated region
  $region30: #{vqvae_forward.20} parent=0 // pred_check
    _
  $region31: #{vqvae_forward.20} parent=0 // pred_check_branch
    %200 = sbr.rel (0) target = $region33
  $region32: #{vqvae_forward.20} parent=0 // pred_region
    _
  $region33: #{vqvae_forward.20} parent=0 // pred_fallthru
    _

// kernel: vqvae_forward.19
$region0: #{vqvae_forward.19}
  #allocation0 [shape = 'u32[]', space=smem, size = 0x4, offset = 0x4, fixed_abs, tag = 'smem constant byte address 0x4 - core index']
  #allocation1 [shape = 'u32[144,128]{1,0:T(1,128)}', space=vmem, size = 0x12000, scoped, tag = 'internal scratch']
  #allocation2 [shape = 'f32[32,128]{1,0:T(8,128)}', space=vmem, size = 0x4000, scoped, tag = 'scratch operand']
  %s0 = inlined_call_operand.vmem [shape: bf16[32,384], index: 0, kind: input, shape index: {}]
  %s1 = inlined_call_operand.vmem [shape: bf16[384,128], index: 1, kind: input, shape index: {}]
  %s2 = inlined_call_operand.vmem [shape: f32[1,128], index: 2, kind: input, shape index: {}]
  %s3 = inlined_call_operand.vmem [shape: f32[32,128], index: 3, kind: output, shape index: {}]
  %s4 = sld [smem:[#allocation0]]
  $region30: #{vqvae_forward.19} parent=0
    _
  %s6 = ssub.s32 1, %s4
  %s7 = scalar_select 0, %s6, %s4
  // Predicated region
  $region2: #{vqvae_forward.19} parent=0 // pred_check
    _
  $region3: #{vqvae_forward.19} parent=0 // pred_check_branch
    %9 = sbr.rel (0) target = $region5
  $region4: #{vqvae_forward.19} parent=0 // pred_region
    _
  $region5: #{vqvae_forward.19} parent=0 // pred_fallthru
    _
  // Predicated region
  $region6: #{vqvae_forward.19} parent=0 // pred_check
    _
  $region7: #{vqvae_forward.19} parent=0 // pred_check_branch
    %11 = sbr.rel (0) target = $region9
  $region8: #{vqvae_forward.19} parent=0 // pred_region
    _
  $region9: #{vqvae_forward.19} parent=0 // pred_fallthru
    _
  // Predicated region
  $region10: #{vqvae_forward.19} parent=0 // pred_check
    _
  $region11: #{vqvae_forward.19} parent=0 // pred_check_branch
    %13 = sbr.rel (0) target = $region13
  $region12: #{vqvae_forward.19} parent=0 // pred_region
    _
  $region13: #{vqvae_forward.19} parent=0 // pred_fallthru
    _
  %p15 = scmp.eq.s32.totalorder 0, 0
  // Predicated region
  $region14: #{vqvae_forward.19} parent=0 // pred_check
    %p16 = pneg %p15
  $region15: #{vqvae_forward.19} parent=0 // pred_check_branch
    %18 = sbr.rel (%p16) target = $region17
  $region16: #{vqvae_forward.19} parent=0 // pred_region
    %19 = vst [vmem:[#allocation2] sm:$0xff] 0.0
    %20 = vst [vmem:[#allocation2 + $0x8] sm:$0xff] 0.0
    %21 = vst [vmem:[#allocation2 + $0x10] sm:$0xff] 0.0
    %22 = vst [vmem:[#allocation2 + $0x18] sm:$0xff] 0.0
  $region17: #{vqvae_forward.19} parent=0 // pred_fallthru
    _
  %v23 = vld [vmem:[%s0] sm:$0xff]
  %v24 = vld [vmem:[%s0 + $0x8] sm:$0xf]
  %v25 = vld [vmem:[%s0 + $0xc] sm:$0xff]
  %v26 = vld [vmem:[%s0 + $0x14] sm:$0xf]
  %v27 = vld [vmem:[%s0 + $0x18] sm:$0xff]
  %v28 = vld [vmem:[%s0 + $0x20] sm:$0xf]
  %v29 = vld [vmem:[%s0 + $0x24] sm:$0xff]
  %v30 = vld [vmem:[%s0 + $0x2c] sm:$0xf]
  %v31 = vmax.bf16 %v23, 0
  %v32 = vmax.bf16 %v24, 0
  %v33 = vmax.bf16 %v25, 0
  %v34 = vmax.bf16 %v26, 0
  %v35 = vmax.bf16 %v27, 0
  %v36 = vmax.bf16 %v28, 0
  %v37 = vmax.bf16 %v29, 0
  %v38 = vmax.bf16 %v30, 0
  %v39 = vld [vmem:[#allocation2] sm:$0xff]
  %v40 = vld [vmem:[#allocation2 + $0x8] sm:$0xff]
  %v41 = vld [vmem:[#allocation2 + $0x10] sm:$0xff]
  %v42 = vld [vmem:[#allocation2 + $0x18] sm:$0xff]
  %v43 = vld [vmem:[%s1] sm:$0xf]
  %v44 = vld [vmem:[%s1 + $0x4] sm:$0xf]
  %v45 = vld [vmem:[%s1 + $0x8] sm:$0xf]
  %v46 = vld [vmem:[%s1 + $0xc] sm:$0xf]
  %v47 = vld [vmem:[%s1 + $0x10] sm:$0xf]
  %v48 = vld [vmem:[%s1 + $0x14] sm:$0xf]
  %v49 = vld [vmem:[%s1 + $0x18] sm:$0xf]
  %v50 = vld [vmem:[%s1 + $0x1c] sm:$0xf]
  %v51 = vld [vmem:[%s1 + $0x20] sm:$0xf]
  %v52 = vld [vmem:[%s1 + $0x24] sm:$0xf]
  %v53 = vld [vmem:[%s1 + $0x28] sm:$0xf]
  %v54 = vld [vmem:[%s1 + $0x2c] sm:$0xf]
  %v55 = vld [vmem:[%s1 + $0x30] sm:$0xf]
  %v56 = vld [vmem:[%s1 + $0x34] sm:$0xf]
  %v57 = vld [vmem:[%s1 + $0x38] sm:$0xf]
  %v58 = vld [vmem:[%s1 + $0x3c] sm:$0xf]
  %v59 = vld [vmem:[%s1 + $0x40] sm:$0xf]
  %v60 = vld [vmem:[%s1 + $0x44] sm:$0xf]
  %v61 = vld [vmem:[%s1 + $0x48] sm:$0xf]
  %v62 = vld [vmem:[%s1 + $0x4c] sm:$0xf]
  %v63 = vld [vmem:[%s1 + $0x50] sm:$0xf]
  %v64 = vld [vmem:[%s1 + $0x54] sm:$0xf]
  %v65 = vld [vmem:[%s1 + $0x58] sm:$0xf]
  %v66 = vld [vmem:[%s1 + $0x5c] sm:$0xf]
  %v67 = vld [vmem:[%s1 + $0x60] sm:$0xf]
  %v68 = vld [vmem:[%s1 + $0x64] sm:$0xf]
  %v69 = vld [vmem:[%s1 + $0x68] sm:$0xf]
  %v70 = vld [vmem:[%s1 + $0x6c] sm:$0xf]
  %v71 = vld [vmem:[%s1 + $0x70] sm:$0xf]
  %v72 = vld [vmem:[%s1 + $0x74] sm:$0xf]
  %v73 = vld [vmem:[%s1 + $0x78] sm:$0xf]
  %v74 = vld [vmem:[%s1 + $0x7c] sm:$0xf]
  %v75 = vld [vmem:[%s1 + $0x80] sm:$0xf]
  %v76 = vld [vmem:[%s1 + $0x84] sm:$0xf]
  %v77 = vld [vmem:[%s1 + $0x88] sm:$0xf]
  %v78 = vld [vmem:[%s1 + $0x8c] sm:$0xf]
  %v79 = vld [vmem:[%s1 + $0x90] sm:$0xf]
  %v80 = vld [vmem:[%s1 + $0x94] sm:$0xf]
  %v81 = vld [vmem:[%s1 + $0x98] sm:$0xf]
  %v82 = vld [vmem:[%s1 + $0x9c] sm:$0xf]
  %v83 = vld [vmem:[%s1 + $0xa0] sm:$0xf]
  %v84 = vld [vmem:[%s1 + $0xa4] sm:$0xf]
  %v85 = vld [vmem:[%s1 + $0xa8] sm:$0xf]
  %v86 = vld [vmem:[%s1 + $0xac] sm:$0xf]
  %v87 = vld [vmem:[%s1 + $0xb0] sm:$0xf]
  %v88 = vld [vmem:[%s1 + $0xb4] sm:$0xf]
  %v89 = vld [vmem:[%s1 + $0xb8] sm:$0xf]
  %v90 = vld [vmem:[%s1 + $0xbc] sm:$0xf]
  %v99 = vunpack.c.l.b16 %v31
  %v100 = vunpack.c.h.b16 %v31
  %v101 = vunpack.c.l.b16 %v32
  %v102 = vunpack.c.l.b16 %v33
  %v103 = vunpack.c.h.b16 %v33
  %v104 = vunpack.c.l.b16 %v34
  %v105 = vunpack.c.l.b16 %v35
  %v106 = vunpack.c.h.b16 %v35
  %v107 = vunpack.c.l.b16 %v36
  %v108 = vunpack.c.l.b16 %v37
  %v109 = vunpack.c.h.b16 %v37
  %v110 = vunpack.c.l.b16 %v38
  %v111 = vpack.c.b16 %v102, %v99
  %v112 = vpack.c.b16 %v103, %v100
  %v113 = vpack.c.b16 %v104, %v101
  %v114 = vpack.c.b16 %v108, %v105
  %v115 = vpack.c.b16 %v109, %v106
  %v116 = vpack.c.b16 %v110, %v107
  %v171 = vunpack.c.l.b16 %v43
  %v172 = vunpack.c.l.b16 %v44
  %v173 = vunpack.c.l.b16 %v45
  %v174 = vunpack.c.l.b16 %v46
  %v175 = vunpack.c.l.b16 %v47
  %v176 = vunpack.c.l.b16 %v48
  %v177 = vunpack.c.l.b16 %v49
  %v178 = vunpack.c.l.b16 %v50
  %v179 = vunpack.c.l.b16 %v51
  %v180 = vunpack.c.l.b16 %v52
  %v181 = vunpack.c.l.b16 %v53
  %v182 = vunpack.c.l.b16 %v54
  %v183 = vunpack.c.l.b16 %v55
  %v184 = vunpack.c.l.b16 %v56
  %v185 = vunpack.c.l.b16 %v57
  %v186 = vunpack.c.l.b16 %v58
  %v187 = vunpack.c.l.b16 %v59
  %v188 = vunpack.c.l.b16 %v60
  %v189 = vunpack.c.l.b16 %v61
  %v190 = vunpack.c.l.b16 %v62
  %v191 = vunpack.c.l.b16 %v63
  %v192 = vunpack.c.l.b16 %v64
  %v193 = vunpack.c.l.b16 %v65
  %v194 = vunpack.c.l.b16 %v66
  %v195 = vunpack.c.l.b16 %v67
  %v196 = vunpack.c.l.b16 %v68
  %v197 = vunpack.c.l.b16 %v69
  %v198 = vunpack.c.l.b16 %v70
  %v199 = vunpack.c.l.b16 %v71
  %v200 = vunpack.c.l.b16 %v72
  %v201 = vunpack.c.l.b16 %v73
  %v202 = vunpack.c.l.b16 %v74
  %v203 = vunpack.c.l.b16 %v75
  %v204 = vunpack.c.l.b16 %v76
  %v205 = vunpack.c.l.b16 %v77
  %v206 = vunpack.c.l.b16 %v78
  %v207 = vunpack.c.l.b16 %v79
  %v208 = vunpack.c.l.b16 %v80
  %v209 = vunpack.c.l.b16 %v81
  %v210 = vunpack.c.l.b16 %v82
  %v211 = vunpack.c.l.b16 %v83
  %v212 = vunpack.c.l.b16 %v84
  %v213 = vunpack.c.l.b16 %v85
  %v214 = vunpack.c.l.b16 %v86
  %v215 = vunpack.c.l.b16 %v87
  %v216 = vunpack.c.l.b16 %v88
  %v217 = vunpack.c.l.b16 %v89
  %v218 = vunpack.c.l.b16 %v90
  %v219 = vpack.c.b16 %v172, %v171
  %v220 = vpack.c.b16 %v174, %v173
  %v221 = vpack.c.b16 %v176, %v175
  %v222 = vpack.c.b16 %v178, %v177
  %v223 = vpack.c.b16 %v180, %v179
  %v224 = vpack.c.b16 %v182, %v181
  %v225 = vpack.c.b16 %v184, %v183
  %v226 = vpack.c.b16 %v186, %v185
  %v227 = vpack.c.b16 %v188, %v187
  %v228 = vpack.c.b16 %v190, %v189
  %v229 = vpack.c.b16 %v192, %v191
  %v230 = vpack.c.b16 %v194, %v193
  %v231 = vpack.c.b16 %v196, %v195
  %v232 = vpack.c.b16 %v198, %v197
  %v233 = vpack.c.b16 %v200, %v199
  %v234 = vpack.c.b16 %v202, %v201
  %v235 = vpack.c.b16 %v204, %v203
  %v236 = vpack.c.b16 %v206, %v205
  %v237 = vpack.c.b16 %v208, %v207
  %v238 = vpack.c.b16 %v210, %v209
  %v239 = vpack.c.b16 %v212, %v211
  %v240 = vpack.c.b16 %v214, %v213
  %v241 = vpack.c.b16 %v216, %v215
  %v242 = vpack.c.b16 %v218, %v217
  %267 = vmatprep.subr.bf16.mxu0 0
  %268 = vmatpush1.bf16.msra.mxu0 %v219
  %269 = vmatprep.subr.bf16.mxu0 0
  %270 = vmatpush1.bf16.msra.mxu0 %v220
  %271 = vmatprep.subr.bf16.mxu0 0
  %272 = vmatpush1.bf16.msra.mxu0 %v221
  %273 = vmatprep.subr.bf16.mxu0 0
  %274 = vmatpush1.bf16.msra.mxu0 %v222
  %275 = vmatprep.subr.bf16.mxu0 0
  %276 = vmatpush1.bf16.msra.mxu0 %v223
  %277 = vmatprep.subr.bf16.mxu0 0
  %278 = vmatpush1.bf16.msra.mxu0 %v224
  %279 = vmatprep.subr.bf16.mxu0 0
  %280 = vmatpush1.bf16.msra.mxu0 %v225
  %281 = vmatprep.subr.bf16.mxu0 0
  %282 = vmatpush1.bf16.msra.mxu0 %v226
  %283 = vmatprep.subr.bf16.mxu0 0
  %284 = vmatpush1.bf16.msra.mxu0 %v227
  %285 = vmatprep.subr.bf16.mxu0 0
  %286 = vmatpush1.bf16.msra.mxu0 %v228
  %287 = vmatprep.subr.bf16.mxu0 0
  %288 = vmatpush1.bf16.msra.mxu0 %v229
  %289 = vmatprep.subr.bf16.mxu0 0
  %290 = vmatpush1.bf16.msra.mxu0 %v230
  %291 = vmatprep.subr.bf16.mxu0 0
  %292 = vmatpush1.bf16.msra.mxu0 %v231
  %293 = vmatprep.subr.bf16.mxu0 0
  %294 = vmatpush1.bf16.msra.mxu0 %v232
  %295 = vmatprep.subr.bf16.mxu0 0
  %296 = vmatpush1.bf16.msra.mxu0 %v233
  %297 = vmatprep.subr.bf16.mxu0 0
  %298 = vmatpush1.bf16.msra.mxu0 %v234
  %299 = vmatprep.mubr.bf16.mxu0 %v112
  %300 = vmatmul.mubr.bf16.gmra.mrb[0].mxu0 %v111
  %v301 = vpop.f32.mrb[0].mxu0
  %v302 = vadd.f32 0.0, %v301
  %v303 = vpop.f32.mrb[0].mxu0
  %v304 = vpop.f32.mrb[0].mxu0
  %v305 = vadd.f32 0.0, %v304
  %v306 = vpop.f32.mrb[0].mxu0
  %307 = vmatprep.mubr.bf16.mxu0 %v115
  %308 = vmatmul.mubr.bf16.gmra.mrb[0].mxu0 %v114
  %v309 = vpop.f32.mrb[0].mxu0
  %v310 = vadd.f32 0.0, %v309
  %v311 = vpop.f32.mrb[0].mxu0
  %v312 = vpop.f32.mrb[0].mxu0
  %v313 = vadd.f32 0.0, %v312
  %v314 = vpop.f32.mrb[0].mxu0
  %315 = vdwg.mxu0
  %316 = vmatprep.subr.bf16.mxu0 0
  %317 = vmatpush1.bf16.msra.mxu0 %v235
  %318 = vmatprep.subr.bf16.mxu0 0
  %319 = vmatpush1.bf16.msra.mxu0 %v236
  %320 = vmatprep.subr.bf16.mxu0 0
  %321 = vmatpush1.bf16.msra.mxu0 %v237
  %322 = vmatprep.subr.bf16.mxu0 0
  %323 = vmatpush1.bf16.msra.mxu0 %v238
  %324 = vmatprep.subr.bf16.mxu0 0
  %325 = vmatpush1.bf16.msra.mxu0 %v239
  %326 = vmatprep.subr.bf16.mxu0 0
  %327 = vmatpush1.bf16.msra.mxu0 %v240
  %328 = vmatprep.subr.bf16.mxu0 0
  %329 = vmatpush1.bf16.msra.mxu0 %v241
  %330 = vmatprep.subr.bf16.mxu0 0
  %331 = vmatpush1.bf16.msra.mxu0 %v242
  %332 = vmatprep.subr.bf16.mxu0 0
  %333 = vmatpush1.bf16.msra.mxu0 0
  %334 = vmatprep.subr.bf16.mxu0 0
  %335 = vmatpush1.bf16.msra.mxu0 0
  %336 = vmatprep.subr.bf16.mxu0 0
  %337 = vmatpush1.bf16.msra.mxu0 0
  %338 = vmatprep.subr.bf16.mxu0 0
  %339 = vmatpush1.bf16.msra.mxu0 0
  %340 = vmatprep.subr.bf16.mxu0 0
  %341 = vmatpush1.bf16.msra.mxu0 0
  %342 = vmatprep.subr.bf16.mxu0 0
  %343 = vmatpush1.bf16.msra.mxu0 0
  %344 = vmatprep.subr.bf16.mxu0 0
  %345 = vmatpush1.bf16.msra.mxu0 0
  %346 = vmatprep.subr.bf16.mxu0 0
  %347 = vmatpush1.bf16.msra.mxu0 0
  %348 = vmatprep.mubr.bf16.mxu0 0
  %349 = vmatmul.mubr.bf16.gmra.mrb[0].mxu0 %v113
  %v350 = vpop.f32.mrb[0].mxu0
  %v351 = vadd.f32 %v302, %v350
  %v352 = vpop.f32.mrb[0].mxu0
  %v353 = vpop.f32.mrb[0].mxu0
  %v354 = vadd.f32 %v305, %v353
  %v355 = vpop.f32.mrb[0].mxu0
  %356 = vmatprep.mubr.bf16.mxu0 0
  %357 = vmatmul.mubr.bf16.gmra.mrb[0].mxu0 %v116
  %v358 = vpop.f32.mrb[0].mxu0
  %v359 = vadd.f32 %v310, %v358
  %v360 = vpop.f32.mrb[0].mxu0
  %v361 = vpop.f32.mrb[0].mxu0
  %v362 = vadd.f32 %v313, %v361
  %v363 = vpop.f32.mrb[0].mxu0
  %364 = vdwg.mxu0
  %v365 = vadd.f32 %v39, %v351
  %v366 = vadd.f32 %v40, %v354
  %v367 = vadd.f32 %v41, %v359
  %v368 = vadd.f32 %v42, %v362
  %369 = vst [vmem:[#allocation2] sm:$0xff] %v365
  %370 = vst [vmem:[#allocation2 + $0x8] sm:$0xff] %v366
  %371 = vst [vmem:[#allocation2 + $0x10] sm:$0xff] %v367
  %372 = vst [vmem:[#allocation2 + $0x18] sm:$0xff] %v368
  // Predicated region
  $region18: #{vqvae_forward.19} parent=0 // pred_check
    %p373 = pneg %p15
  $region19: #{vqvae_forward.19} parent=0 // pred_check_branch
    %375 = sbr.rel (%p373) target = $region21
  $region20: #{vqvae_forward.19} parent=0 // pred_region
    %v376 = vld [vmem:[#allocation2] sm:$0xff]
    %v377 = vld [vmem:[#allocation2 + $0x8] sm:$0xff]
    %v378 = vld [vmem:[#allocation2 + $0x10] sm:$0xff]
    %v379 = vld [vmem:[#allocation2 + $0x18] sm:$0xff]
    %v380 = vld [vmem:[%s2] sm:$0x1]
    %v382 = vlaneseq
    %v383 = vshrl.u32 %v382, 7
    %v384 = vsub.s32 0, %v383
    %v385 = vrot.slane %v380, %v384
    %v387 = vadd.f32 %v376, %v385
    %v388 = vadd.f32 %v377, %v385
    %v389 = vadd.f32 %v378, %v385
    %v390 = vadd.f32 %v379, %v385
    %v391 = vmax.f32 %v387, 0.0
    %v392 = vmax.f32 %v388, 0.0
    %v393 = vmax.f32 %v389, 0.0
    %v394 = vmax.f32 %v390, 0.0
    %395 = vst [vmem:[%s3] sm:$0xff] %v391
    %396 = vst [vmem:[%s3 + $0x8] sm:$0xff] %v392
    %397 = vst [vmem:[%s3 + $0x10] sm:$0xff] %v393
    %398 = vst [vmem:[%s3 + $0x18] sm:$0xff] %v394
  $region21: #{vqvae_forward.19} parent=0 // pred_fallthru
    _
  // Predicated region
  $region22: #{vqvae_forward.19} parent=0 // pred_check
    _
  $region23: #{vqvae_forward.19} parent=0 // pred_check_branch
    %400 = sbr.rel (0) target = $region25
  $region24: #{vqvae_forward.19} parent=0 // pred_region
    _
  $region25: #{vqvae_forward.19} parent=0 // pred_fallthru
    _
  // Predicated region
  $region26: #{vqvae_forward.19} parent=0 // pred_check
    _
  $region27: #{vqvae_forward.19} parent=0 // pred_check_branch
    %402 = sbr.rel (0) target = $region29
  $region28: #{vqvae_forward.19} parent=0 // pred_region
    _
  $region29: #{vqvae_forward.19} parent=0 // pred_fallthru
    _

// kernel: vqvae_forward.23
$region0: #{vqvae_forward.23}
  #allocation0 [shape = 'u32[]', space=smem, size = 0x4, offset = 0x4, fixed_abs, tag = 'smem constant byte address 0x4 - core index']
  #allocation1 [shape = 'u32[144,128]{1,0:T(1,128)}', space=vmem, size = 0x12000, scoped, tag = 'internal scratch']
  #allocation2 [shape = 'f32[32,128]{1,0:T(8,128)}', space=vmem, size = 0x4000, scoped, tag = 'scratch operand']
  %s0 = inlined_call_operand.vmem [shape: bf16[32,128], index: 0, kind: input, shape index: {}]
  %s1 = inlined_call_operand.vmem [shape: bf16[128,128], index: 1, kind: input, shape index: {}]
  %s2 = inlined_call_operand.vmem [shape: f32[1,128], index: 2, kind: input, shape index: {}]
  %s3 = inlined_call_operand.vmem [shape: f32[32,128], index: 3, kind: output, shape index: {}]
  %s4 = sld [smem:[#allocation0]]
  $region30: #{vqvae_forward.23} parent=0
    _
  %s6 = ssub.s32 1, %s4
  %s7 = scalar_select 0, %s6, %s4
  // Predicated region
  $region2: #{vqvae_forward.23} parent=0 // pred_check
    _
  $region3: #{vqvae_forward.23} parent=0 // pred_check_branch
    %9 = sbr.rel (0) target = $region5
  $region4: #{vqvae_forward.23} parent=0 // pred_region
    _
  $region5: #{vqvae_forward.23} parent=0 // pred_fallthru
    _
  // Predicated region
  $region6: #{vqvae_forward.23} parent=0 // pred_check
    _
  $region7: #{vqvae_forward.23} parent=0 // pred_check_branch
    %11 = sbr.rel (0) target = $region9
  $region8: #{vqvae_forward.23} parent=0 // pred_region
    _
  $region9: #{vqvae_forward.23} parent=0 // pred_fallthru
    _
  // Predicated region
  $region10: #{vqvae_forward.23} parent=0 // pred_check
    _
  $region11: #{vqvae_forward.23} parent=0 // pred_check_branch
    %13 = sbr.rel (0) target = $region13
  $region12: #{vqvae_forward.23} parent=0 // pred_region
    _
  $region13: #{vqvae_forward.23} parent=0 // pred_fallthru
    _
  %p15 = scmp.eq.s32.totalorder 0, 0
  // Predicated region
  $region14: #{vqvae_forward.23} parent=0 // pred_check
    %p16 = pneg %p15
  $region15: #{vqvae_forward.23} parent=0 // pred_check_branch
    %18 = sbr.rel (%p16) target = $region17
  $region16: #{vqvae_forward.23} parent=0 // pred_region
    %19 = vst [vmem:[#allocation2] sm:$0xff] 0.0
    %20 = vst [vmem:[#allocation2 + $0x8] sm:$0xff] 0.0
    %21 = vst [vmem:[#allocation2 + $0x10] sm:$0xff] 0.0
    %22 = vst [vmem:[#allocation2 + $0x18] sm:$0xff] 0.0
  $region17: #{vqvae_forward.23} parent=0 // pred_fallthru
    _
  %v23 = vld [vmem:[%s0] sm:$0xf]
  %v24 = vld [vmem:[%s0 + $0x4] sm:$0xf]
  %v25 = vld [vmem:[%s0 + $0x8] sm:$0xf]
  %v26 = vld [vmem:[%s0 + $0xc] sm:$0xf]
  %v27 = vmax.bf16 %v23, 0
  %v28 = vmax.bf16 %v24, 0
  %v29 = vmax.bf16 %v25, 0
  %v30 = vmax.bf16 %v26, 0
  %v31 = vld [vmem:[#allocation2] sm:$0xff]
  %v32 = vld [vmem:[#allocation2 + $0x8] sm:$0xff]
  %v33 = vld [vmem:[#allocation2 + $0x10] sm:$0xff]
  %v34 = vld [vmem:[#allocation2 + $0x18] sm:$0xff]
  %v35 = vld [vmem:[%s1] sm:$0xf]
  %v36 = vld [vmem:[%s1 + $0x4] sm:$0xf]
  %v37 = vld [vmem:[%s1 + $0x8] sm:$0xf]
  %v38 = vld [vmem:[%s1 + $0xc] sm:$0xf]
  %v39 = vld [vmem:[%s1 + $0x10] sm:$0xf]
  %v40 = vld [vmem:[%s1 + $0x14] sm:$0xf]
  %v41 = vld [vmem:[%s1 + $0x18] sm:$0xf]
  %v42 = vld [vmem:[%s1 + $0x1c] sm:$0xf]
  %v43 = vld [vmem:[%s1 + $0x20] sm:$0xf]
  %v44 = vld [vmem:[%s1 + $0x24] sm:$0xf]
  %v45 = vld [vmem:[%s1 + $0x28] sm:$0xf]
  %v46 = vld [vmem:[%s1 + $0x2c] sm:$0xf]
  %v47 = vld [vmem:[%s1 + $0x30] sm:$0xf]
  %v48 = vld [vmem:[%s1 + $0x34] sm:$0xf]
  %v49 = vld [vmem:[%s1 + $0x38] sm:$0xf]
  %v50 = vld [vmem:[%s1 + $0x3c] sm:$0xf]
  %v55 = vunpack.c.l.b16 %v27
  %v56 = vunpack.c.l.b16 %v28
  %v57 = vunpack.c.l.b16 %v29
  %v58 = vunpack.c.l.b16 %v30
  %v59 = vpack.c.b16 %v56, %v55
  %v60 = vpack.c.b16 %v58, %v57
  %v79 = vunpack.c.l.b16 %v35
  %v80 = vunpack.c.l.b16 %v36
  %v81 = vunpack.c.l.b16 %v37
  %v82 = vunpack.c.l.b16 %v38
  %v83 = vunpack.c.l.b16 %v39
  %v84 = vunpack.c.l.b16 %v40
  %v85 = vunpack.c.l.b16 %v41
  %v86 = vunpack.c.l.b16 %v42
  %v87 = vunpack.c.l.b16 %v43
  %v88 = vunpack.c.l.b16 %v44
  %v89 = vunpack.c.l.b16 %v45
  %v90 = vunpack.c.l.b16 %v46
  %v91 = vunpack.c.l.b16 %v47
  %v92 = vunpack.c.l.b16 %v48
  %v93 = vunpack.c.l.b16 %v49
  %v94 = vunpack.c.l.b16 %v50
  %v95 = vpack.c.b16 %v80, %v79
  %v96 = vpack.c.b16 %v82, %v81
  %v97 = vpack.c.b16 %v84, %v83
  %v98 = vpack.c.b16 %v86, %v85
  %v99 = vpack.c.b16 %v88, %v87
  %v100 = vpack.c.b16 %v90, %v89
  %v101 = vpack.c.b16 %v92, %v91
  %v102 = vpack.c.b16 %v94, %v93
  %111 = vmatprep.subr.bf16.mxu0 0
  %112 = vmatpush1.bf16.msra.mxu0 %v95
  %113 = vmatprep.subr.bf16.mxu0 0
  %114 = vmatpush1.bf16.msra.mxu0 %v96
  %115 = vmatprep.subr.bf16.mxu0 0
  %116 = vmatpush1.bf16.msra.mxu0 %v97
  %117 = vmatprep.subr.bf16.mxu0 0
  %118 = vmatpush1.bf16.msra.mxu0 %v98
  %119 = vmatprep.subr.bf16.mxu0 0
  %120 = vmatpush1.bf16.msra.mxu0 %v99
  %121 = vmatprep.subr.bf16.mxu0 0
  %122 = vmatpush1.bf16.msra.mxu0 %v100
  %123 = vmatprep.subr.bf16.mxu0 0
  %124 = vmatpush1.bf16.msra.mxu0 %v101
  %125 = vmatprep.subr.bf16.mxu0 0
  %126 = vmatpush1.bf16.msra.mxu0 %v102
  %127 = vmatprep.subr.bf16.mxu0 0
  %128 = vmatpush1.bf16.msra.mxu0 0
  %129 = vmatprep.subr.bf16.mxu0 0
  %130 = vmatpush1.bf16.msra.mxu0 0
  %131 = vmatprep.subr.bf16.mxu0 0
  %132 = vmatpush1.bf16.msra.mxu0 0
  %133 = vmatprep.subr.bf16.mxu0 0
  %134 = vmatpush1.bf16.msra.mxu0 0
  %135 = vmatprep.subr.bf16.mxu0 0
  %136 = vmatpush1.bf16.msra.mxu0 0
  %137 = vmatprep.subr.bf16.mxu0 0
  %138 = vmatpush1.bf16.msra.mxu0 0
  %139 = vmatprep.subr.bf16.mxu0 0
  %140 = vmatpush1.bf16.msra.mxu0 0
  %141 = vmatprep.subr.bf16.mxu0 0
  %142 = vmatpush1.bf16.msra.mxu0 0
  %143 = vmatprep.mubr.bf16.mxu0 0
  %144 = vmatmul.mubr.bf16.gmra.mrb[0].mxu0 %v59
  %v145 = vpop.f32.mrb[0].mxu0
  %v146 = vadd.f32 0.0, %v145
  %v147 = vpop.f32.mrb[0].mxu0
  %v148 = vpop.f32.mrb[0].mxu0
  %v149 = vadd.f32 0.0, %v148
  %v150 = vpop.f32.mrb[0].mxu0
  %151 = vmatprep.mubr.bf16.mxu0 0
  %152 = vmatmul.mubr.bf16.gmra.mrb[0].mxu0 %v60
  %v153 = vpop.f32.mrb[0].mxu0
  %v154 = vadd.f32 0.0, %v153
  %v155 = vpop.f32.mrb[0].mxu0
  %v156 = vpop.f32.mrb[0].mxu0
  %v157 = vadd.f32 0.0, %v156
  %v158 = vpop.f32.mrb[0].mxu0
  %159 = vdwg.mxu0
  %v160 = vadd.f32 %v31, %v146
  %v161 = vadd.f32 %v32, %v149
  %v162 = vadd.f32 %v33, %v154
  %v163 = vadd.f32 %v34, %v157
  %164 = vst [vmem:[#allocation2] sm:$0xff] %v160
  %165 = vst [vmem:[#allocation2 + $0x8] sm:$0xff] %v161
  %166 = vst [vmem:[#allocation2 + $0x10] sm:$0xff] %v162
  %167 = vst [vmem:[#allocation2 + $0x18] sm:$0xff] %v163
  // Predicated region
  $region18: #{vqvae_forward.23} parent=0 // pred_check
    %p168 = pneg %p15
  $region19: #{vqvae_forward.23} parent=0 // pred_check_branch
    %170 = sbr.rel (%p168) target = $region21
  $region20: #{vqvae_forward.23} parent=0 // pred_region
    %v171 = vld [vmem:[#allocation2] sm:$0xff]
    %v172 = vld [vmem:[#allocation2 + $0x8] sm:$0xff]
    %v173 = vld [vmem:[#allocation2 + $0x10] sm:$0xff]
    %v174 = vld [vmem:[#allocation2 + $0x18] sm:$0xff]
    %v175 = vld [vmem:[%s2] sm:$0x1]
    %v177 = vlaneseq
    %v178 = vshrl.u32 %v177, 7
    %v179 = vsub.s32 0, %v178
    %v180 = vrot.slane %v175, %v179
    %v182 = vadd.f32 %v171, %v180
    %v183 = vadd.f32 %v172, %v180
    %v184 = vadd.f32 %v173, %v180
    %v185 = vadd.f32 %v174, %v180
    %186 = vst [vmem:[%s3] sm:$0xff] %v182
    %187 = vst [vmem:[%s3 + $0x8] sm:$0xff] %v183
    %188 = vst [vmem:[%s3 + $0x10] sm:$0xff] %v184
    %189 = vst [vmem:[%s3 + $0x18] sm:$0xff] %v185
  $region21: #{vqvae_forward.23} parent=0 // pred_fallthru
    _
  // Predicated region
  $region22: #{vqvae_forward.23} parent=0 // pred_check
    _
  $region23: #{vqvae_forward.23} parent=0 // pred_check_branch
    %191 = sbr.rel (0) target = $region25
  $region24: #{vqvae_forward.23} parent=0 // pred_region
    _
  $region25: #{vqvae_forward.23} parent=0 // pred_fallthru
    _
  // Predicated region
  $region26: #{vqvae_forward.23} parent=0 // pred_check
    _
  $region27: #{vqvae_forward.23} parent=0 // pred_check_branch
    %193 = sbr.rel (0) target = $region29
  $region28: #{vqvae_forward.23} parent=0 // pred_region
    _
  $region29: #{vqvae_forward.23} parent=0 // pred_fallthru
    _

// kernel: vqvae_forward.24
$region0: #{vqvae_forward.24}
  #allocation0 [shape = 'u32[]', space=smem, size = 0x4, offset = 0x4, fixed_abs, tag = 'smem constant byte address 0x4 - core index']
  #allocation1 [shape = 'u32[144,128]{1,0:T(1,128)}', space=vmem, size = 0x12000, scoped, tag = 'internal scratch']
  %s0 = inlined_call_operand.vmem [shape: f32[32,128], index: 0, kind: input, shape index: {}]
  %s1 = inlined_call_operand.vmem [shape: f32[128,128], index: 1, kind: input, shape index: {}]
  %s2 = inlined_call_operand.vmem [shape: f32[1,128], index: 2, kind: input, shape index: {}]
  %s3 = inlined_call_operand.vmem [shape: f32[32,128], index: 3, kind: output, shape index: {0}]
  %s4 = inlined_call_operand.vmem [shape: f32[1,128], index: 4, kind: output, shape index: {1}]
  %5 = xla_tuple %s3, %s4
  %s6 = sld [smem:[#allocation0]]
  $region34: #{vqvae_forward.24} parent=0
    _
  %s8 = ssub.s32 1, %s6
  %s9 = scalar_select 0, %s8, %s6
  // Predicated region
  $region2: #{vqvae_forward.24} parent=0 // pred_check
    _
  $region3: #{vqvae_forward.24} parent=0 // pred_check_branch
    %11 = sbr.rel (0) target = $region5
  $region4: #{vqvae_forward.24} parent=0 // pred_region
    _
  $region5: #{vqvae_forward.24} parent=0 // pred_fallthru
    _
  // Predicated region
  $region6: #{vqvae_forward.24} parent=0 // pred_check
    _
  $region7: #{vqvae_forward.24} parent=0 // pred_check_branch
    %13 = sbr.rel (0) target = $region9
  $region8: #{vqvae_forward.24} parent=0 // pred_region
    _
  $region9: #{vqvae_forward.24} parent=0 // pred_fallthru
    _
  // Predicated region
  $region10: #{vqvae_forward.24} parent=0 // pred_check
    _
  $region11: #{vqvae_forward.24} parent=0 // pred_check_branch
    %15 = sbr.rel (0) target = $region13
  $region12: #{vqvae_forward.24} parent=0 // pred_region
    _
  $region13: #{vqvae_forward.24} parent=0 // pred_fallthru
    _
  %p16 = scmp.eq.s32.totalorder 0, 0
  // Predicated region
  $region14: #{vqvae_forward.24} parent=0 // pred_check
    %p17 = pneg %p16
  $region15: #{vqvae_forward.24} parent=0 // pred_check_branch
    %19 = sbr.rel (%p17) target = $region17
  $region16: #{vqvae_forward.24} parent=0 // pred_region
    %20 = vst [vmem:[%s4] sm:$0x1] 0.0
  $region17: #{vqvae_forward.24} parent=0 // pred_fallthru
    _
  %v21 = vld [vmem:[%s0] sm:$0xff]
  %v22 = vld [vmem:[%s0 + $0x8] sm:$0xff]
  %v23 = vld [vmem:[%s0 + $0x10] sm:$0xff]
  %v24 = vld [vmem:[%s0 + $0x18] sm:$0xff]
  %v25 = vld [vmem:[%s1] sm:$0xff]
  %v26 = vld [vmem:[%s1 + $0x8] sm:$0xff]
  %v27 = vld [vmem:[%s1 + $0x10] sm:$0xff]
  %v28 = vld [vmem:[%s1 + $0x18] sm:$0xff]
  %v29 = vld [vmem:[%s1 + $0x20] sm:$0xff]
  %v30 = vld [vmem:[%s1 + $0x28] sm:$0xff]
  %v31 = vld [vmem:[%s1 + $0x30] sm:$0xff]
  %v32 = vld [vmem:[%s1 + $0x38] sm:$0xff]
  %v33 = vld [vmem:[%s1 + $0x40] sm:$0xff]
  %v34 = vld [vmem:[%s1 + $0x48] sm:$0xff]
  %v35 = vld [vmem:[%s1 + $0x50] sm:$0xff]
  %v36 = vld [vmem:[%s1 + $0x58] sm:$0xff]
  %v37 = vld [vmem:[%s1 + $0x60] sm:$0xff]
  %v38 = vld [vmem:[%s1 + $0x68] sm:$0xff]
  %v39 = vld [vmem:[%s1 + $0x70] sm:$0xff]
  %v40 = vld [vmem:[%s1 + $0x78] sm:$0xff]
  %v41 = vmul.f32 %v21, %v21
  %v42 = vmul.f32 %v22, %v22
  %v43 = vmul.f32 %v23, %v23
  %v44 = vmul.f32 %v24, %v24
  %45 = vadd.xlane.f32.xlu0 %v41
  %v46 = vpop.xlane.xlu0 %45
  %47 = vadd.xlane.f32.xlu0 %v42
  %v48 = vpop.xlane.xlu0 %47
  %49 = vadd.xlane.f32.xlu0 %v43
  %v50 = vpop.xlane.xlu0 %49
  %51 = vadd.xlane.f32.xlu0 %v44
  %v52 = vpop.xlane.xlu0 %51
  %53 = vmatprep.subr.mxu0 0.0
  %54 = vmatpush1.xpose.msra.mxu0 %v25
  %55 = vmatprep.subr.mxu0 0.0
  %56 = vmatpush1.xpose.msra.mxu0 %v26
  %57 = vmatprep.subr.mxu0 0.0
  %58 = vmatpush1.xpose.msra.mxu0 %v27
  %59 = vmatprep.subr.mxu0 0.0
  %60 = vmatpush1.xpose.msra.mxu0 %v28
  %61 = vmatprep.subr.mxu0 0.0
  %62 = vmatpush1.xpose.msra.mxu0 %v29
  %63 = vmatprep.subr.mxu0 0.0
  %64 = vmatpush1.xpose.msra.mxu0 %v30
  %65 = vmatprep.subr.mxu0 0.0
  %66 = vmatpush1.xpose.msra.mxu0 %v31
  %67 = vmatprep.subr.mxu0 0.0
  %68 = vmatpush1.xpose.msra.mxu0 %v32
  %69 = vmatprep.subr.mxu0 0.0
  %70 = vmatpush1.xpose.msra.mxu0 %v33
  %71 = vmatprep.subr.mxu0 0.0
  %72 = vmatpush1.xpose.msra.mxu0 %v34
  %73 = vmatprep.subr.mxu0 0.0
  %74 = vmatpush1.xpose.msra.mxu0 %v35
  %75 = vmatprep.subr.mxu0 0.0
  %76 = vmatpush1.xpose.msra.mxu0 %v36
  %77 = vmatprep.subr.mxu0 0.0
  %78 = vmatpush1.xpose.msra.mxu0 %v37
  %79 = vmatprep.subr.mxu0 0.0
  %80 = vmatpush1.xpose.msra.mxu0 %v38
  %81 = vmatprep.subr.mxu0 0.0
  %82 = vmatpush1.xpose.msra.mxu0 %v39
  %83 = vmatprep.subr.mxu0 0.0
  %84 = vmatpush1.xpose.msra.mxu0 %v40
  %85 = vmatprep.subr.mxu0 0.0
  %86 = vmatpush1.xpose.msra.mxu0 0.0
  %87 = vmatprep.subr.mxu0 0.0
  %88 = vmatpush1.xpose.msra.mxu0 0.0
  %89 = vmatprep.subr.mxu0 0.0
  %90 = vmatpush1.xpose.msra.mxu0 0.0
  %91 = vmatprep.subr.mxu0 0.0
  %92 = vmatpush1.xpose.msra.mxu0 0.0
  %93 = vmatprep.subr.mxu0 0.0
  %94 = vmatpush1.xpose.msra.mxu0 0.0
  %95 = vmatprep.subr.mxu0 0.0
  %96 = vmatpush1.xpose.msra.mxu0 0.0
  %97 = vmatprep.subr.mxu0 0.0
  %98 = vmatpush1.xpose.msra.mxu0 0.0
  %99 = vmatprep.subr.mxu0 0.0
  %100 = vmatpush1.xpose.msra.mxu0 0.0
  %101 = vmatprep.subr.mxu0 0.0
  %102 = vmatpush1.xpose.msra.mxu0 0.0
  %103 = vmatprep.subr.mxu0 0.0
  %104 = vmatpush1.xpose.msra.mxu0 0.0
  %105 = vmatprep.subr.mxu0 0.0
  %106 = vmatpush1.xpose.msra.mxu0 0.0
  %107 = vmatprep.subr.mxu0 0.0
  %108 = vmatpush1.xpose.msra.mxu0 0.0
  %109 = vmatprep.subr.mxu0 0.0
  %110 = vmatpush1.xpose.msra.mxu0 0.0
  %111 = vmatprep.subr.mxu0 0.0
  %112 = vmatpush1.xpose.msra.mxu0 0.0
  %113 = vmatprep.subr.mxu0 0.0
  %114 = vmatpush1.xpose.msra.mxu0 0.0
  %115 = vmatprep.subr.mxu0 0.0
  %116 = vmatpush1.xpose.msra.mxu0 0.0
  %117 = vmatprep.mubr.f32.mxu0 0.0
  %118 = vmatmul.mubr.f32.gmra.mrb[0].mxu0 %v21
  %v119 = vpop.f32.mrb[0].mxu0
  %v120 = vadd.f32 0.0, %v119
  %v121 = vpop.f32.mrb[0].mxu0
  %122 = vmatprep.mubr.f32.mxu0 0.0
  %123 = vmatmul.mubr.f32.gmra.mrb[0].mxu0 %v22
  %v124 = vpop.f32.mrb[0].mxu0
  %v125 = vadd.f32 0.0, %v124
  %v126 = vpop.f32.mrb[0].mxu0
  %127 = vmatprep.mubr.f32.mxu0 0.0
  %128 = vmatmul.mubr.f32.gmra.mrb[0].mxu0 %v23
  %v129 = vpop.f32.mrb[0].mxu0
  %v130 = vadd.f32 0.0, %v129
  %v131 = vpop.f32.mrb[0].mxu0
  %132 = vmatprep.mubr.f32.mxu0 0.0
  %133 = vmatmul.mubr.f32.gmra.mrb[0].mxu0 %v24
  %v134 = vpop.f32.mrb[0].mxu0
  %v135 = vadd.f32 0.0, %v134
  %v136 = vpop.f32.mrb[0].mxu0
  %137 = vdwg.mxu0
  %v138 = vld [vmem:[%s2] sm:$0x1]
  %v140 = vlaneseq
  %v141 = vshrl.u32 %v140, 7
  %v142 = vsub.s32 0, %v141
  %v143 = vrot.slane %v138, %v142
  %v145 = vadd.f32 %v46, %v143
  %v146 = vadd.f32 %v48, %v143
  %v147 = vadd.f32 %v50, %v143
  %v148 = vadd.f32 %v52, %v143
  %v149 = vmul.f32 %v120, 2.0
  %v150 = vmul.f32 %v125, 2.0
  %v151 = vmul.f32 %v130, 2.0
  %v152 = vmul.f32 %v135, 2.0
  %v153 = vsub.f32 %v145, %v149
  %v154 = vsub.f32 %v146, %v150
  %v155 = vsub.f32 %v147, %v151
  %v156 = vsub.f32 %v148, %v152
  %157 = vmin.xlane.f32.xlu0 %v153
  %v158 = vpop.xlane.xlu0 %157
  %159 = vmin.xlane.f32.xlu0 %v154
  %v160 = vpop.xlane.xlu0 %159
  %161 = vmin.xlane.f32.xlu0 %v155
  %v162 = vpop.xlane.xlu0 %161
  %163 = vmin.xlane.f32.xlu0 %v156
  %v164 = vpop.xlane.xlu0 %163
  %v165 = vlaneseq
  %v166 = vand.u32 %v165, 127
  %vm167 = vcmp.eq.f32.partialorder %v153, %v158
  %vm168 = vcmp.eq.f32.partialorder %v154, %v160
  %vm169 = vcmp.eq.f32.partialorder %v155, %v162
  %vm170 = vcmp.eq.f32.partialorder %v156, %v164
  %v171 = vsel %vm167, %v166, 128
  %v172 = vsel %vm168, %v166, 128
  %v173 = vsel %vm169, %v166, 128
  %v174 = vsel %vm170, %v166, 128
  %v175 = vand.u32 %v171, 65535
  %v176 = vshra.s32 %v171, 16
  %v177 = vcvt.s32.f32 %v175
  %v178 = vcvt.s32.f32 %v176
  %179 = vmin.xlane.f32.xlu0 %v178
  %v180 = vpop.xlane.xlu0 %179
  %vm181 = vcmp.eq.f32.partialorder %v178, %v180
  %v182 = vsel %vm181, %v177, inf
  %183 = vmin.xlane.f32.xlu0 %v182
  %v184 = vpop.xlane.xlu0 %183
  %v185 = vcvt.f32.s32 %v184
  %v186 = vcvt.f32.s32 %v180
  %v187 = vshll.u32 %v186, 16
  %v188 = vadd.s32 %v187, %v185
  %v189 = vand.u32 %v172, 65535
  %v190 = vshra.s32 %v172, 16
  %v191 = vcvt.s32.f32 %v189
  %v192 = vcvt.s32.f32 %v190
  %193 = vmin.xlane.f32.xlu0 %v192
  %v194 = vpop.xlane.xlu0 %193
  %vm195 = vcmp.eq.f32.partialorder %v192, %v194
  %v196 = vsel %vm195, %v191, inf
  %197 = vmin.xlane.f32.xlu0 %v196
  %v198 = vpop.xlane.xlu0 %197
  %v199 = vcvt.f32.s32 %v198
  %v200 = vcvt.f32.s32 %v194
  %v201 = vshll.u32 %v200, 16
  %v202 = vadd.s32 %v201, %v199
  %v203 = vand.u32 %v173, 65535
  %v204 = vshra.s32 %v173, 16
  %v205 = vcvt.s32.f32 %v203
  %v206 = vcvt.s32.f32 %v204
  %207 = vmin.xlane.f32.xlu0 %v206
  %v208 = vpop.xlane.xlu0 %207
  %vm209 = vcmp.eq.f32.partialorder %v206, %v208
  %v210 = vsel %vm209, %v205, inf
  %211 = vmin.xlane.f32.xlu0 %v210
  %v212 = vpop.xlane.xlu0 %211
  %v213 = vcvt.f32.s32 %v212
  %v214 = vcvt.f32.s32 %v208
  %v215 = vshll.u32 %v214, 16
  %v216 = vadd.s32 %v215, %v213
  %v217 = vand.u32 %v174, 65535
  %v218 = vshra.s32 %v174, 16
  %v219 = vcvt.s32.f32 %v217
  %v220 = vcvt.s32.f32 %v218
  %221 = vmin.xlane.f32.xlu0 %v220
  %v222 = vpop.xlane.xlu0 %221
  %vm223 = vcmp.eq.f32.partialorder %v220, %v222
  %v224 = vsel %vm223, %v219, inf
  %225 = vmin.xlane.f32.xlu0 %v224
  %v226 = vpop.xlane.xlu0 %225
  %v227 = vcvt.f32.s32 %v226
  %v228 = vcvt.f32.s32 %v222
  %v229 = vshll.u32 %v228, 16
  %v230 = vadd.s32 %v229, %v227
  %vm231 = vcmp.eq.s32.totalorder %v166, %v188
  %vm232 = vcmp.eq.s32.totalorder %v166, %v202
  %vm233 = vcmp.eq.s32.totalorder %v166, %v216
  %vm234 = vcmp.eq.s32.totalorder %v166, %v230
  %v235 = vsel %vm231, 1, 0
  %v236 = vsel %vm232, 1, 0
  %v237 = vsel %vm233, 1, 0
  %v238 = vsel %vm234, 1, 0
  %v239 = vcvt.s32.f32 %v235
  %v240 = vcvt.s32.f32 %v236
  %v241 = vcvt.s32.f32 %v237
  %v242 = vcvt.s32.f32 %v238
  %243 = vmatprep.subr.mxu0 0.0
  %244 = vmatpush1.msra.mxu0 %v25
  %245 = vmatprep.subr.mxu0 0.0
  %246 = vmatpush1.msra.mxu0 %v26
  %247 = vmatprep.subr.mxu0 0.0
  %248 = vmatpush1.msra.mxu0 %v27
  %249 = vmatprep.subr.mxu0 0.0
  %250 = vmatpush1.msra.mxu0 %v28
  %251 = vmatprep.subr.mxu0 0.0
  %252 = vmatpush1.msra.mxu0 %v29
  %253 = vmatprep.subr.mxu0 0.0
  %254 = vmatpush1.msra.mxu0 %v30
  %255 = vmatprep.subr.mxu0 0.0
  %256 = vmatpush1.msra.mxu0 %v31
  %257 = vmatprep.subr.mxu0 0.0
  %258 = vmatpush1.msra.mxu0 %v32
  %259 = vmatprep.subr.mxu0 0.0
  %260 = vmatpush1.msra.mxu0 %v33
  %261 = vmatprep.subr.mxu0 0.0
  %262 = vmatpush1.msra.mxu0 %v34
  %263 = vmatprep.subr.mxu0 0.0
  %264 = vmatpush1.msra.mxu0 %v35
  %265 = vmatprep.subr.mxu0 0.0
  %266 = vmatpush1.msra.mxu0 %v36
  %267 = vmatprep.subr.mxu0 0.0
  %268 = vmatpush1.msra.mxu0 %v37
  %269 = vmatprep.subr.mxu0 0.0
  %270 = vmatpush1.msra.mxu0 %v38
  %271 = vmatprep.subr.mxu0 0.0
  %272 = vmatpush1.msra.mxu0 %v39
  %273 = vmatprep.subr.mxu0 0.0
  %274 = vmatpush1.msra.mxu0 %v40
  %275 = vmatprep.subr.mxu0 0.0
  %276 = vmatpush1.msra.mxu0 0.0
  %277 = vmatprep.subr.mxu0 0.0
  %278 = vmatpush1.msra.mxu0 0.0
  %279 = vmatprep.subr.mxu0 0.0
  %280 = vmatpush1.msra.mxu0 0.0
  %281 = vmatprep.subr.mxu0 0.0
  %282 = vmatpush1.msra.mxu0 0.0
  %283 = vmatprep.subr.mxu0 0.0
  %284 = vmatpush1.msra.mxu0 0.0
  %285 = vmatprep.subr.mxu0 0.0
  %286 = vmatpush1.msra.mxu0 0.0
  %287 = vmatprep.subr.mxu0 0.0
  %288 = vmatpush1.msra.mxu0 0.0
  %289 = vmatprep.subr.mxu0 0.0
  %290 = vmatpush1.msra.mxu0 0.0
  %291 = vmatprep.subr.mxu0 0.0
  %292 = vmatpush1.msra.mxu0 0.0
  %293 = vmatprep.subr.mxu0 0.0
  %294 = vmatpush1.msra.mxu0 0.0
  %295 = vmatprep.subr.mxu0 0.0
  %296 = vmatpush1.msra.mxu0 0.0
  %297 = vmatprep.subr.mxu0 0.0
  %298 = vmatpush1.msra.mxu0 0.0
  %299 = vmatprep.subr.mxu0 0.0
  %300 = vmatpush1.msra.mxu0 0.0
  %301 = vmatprep.subr.mxu0 0.0
  %302 = vmatpush1.msra.mxu0 0.0
  %303 = vmatprep.subr.mxu0 0.0
  %304 = vmatpush1.msra.mxu0 0.0
  %305 = vmatprep.subr.mxu0 0.0
  %306 = vmatpush1.msra.mxu0 0.0
  %307 = vmatprep.mubr.f32.mxu0 0.0
  %308 = vmatmul.mubr.f32.gmra.mrb[0].mxu0 %v239
  %v309 = vpop.f32.mrb[0].mxu0
  %v310 = vadd.f32 0.0, %v309
  %v311 = vpop.f32.mrb[0].mxu0
  %312 = vmatprep.mubr.f32.mxu0 0.0
  %313 = vmatmul.mubr.f32.gmra.mrb[0].mxu0 %v240
  %v314 = vpop.f32.mrb[0].mxu0
  %v315 = vadd.f32 0.0, %v314
  %v316 = vpop.f32.mrb[0].mxu0
  %317 = vmatprep.mubr.f32.mxu0 0.0
  %318 = vmatmul.mubr.f32.gmra.mrb[0].mxu0 %v241
  %v319 = vpop.f32.mrb[0].mxu0
  %v320 = vadd.f32 0.0, %v319
  %v321 = vpop.f32.mrb[0].mxu0
  %322 = vmatprep.mubr.f32.mxu0 0.0
  %323 = vmatmul.mubr.f32.gmra.mrb[0].mxu0 %v242
  %v324 = vpop.f32.mrb[0].mxu0
  %v325 = vadd.f32 0.0, %v324
  %v326 = vpop.f32.mrb[0].mxu0
  %327 = vdwg.mxu0
  %328 = vst [vmem:[%s3] sm:$0xff] %v310
  %329 = vst [vmem:[%s3 + $0x8] sm:$0xff] %v315
  %330 = vst [vmem:[%s3 + $0x10] sm:$0xff] %v320
  %331 = vst [vmem:[%s3 + $0x18] sm:$0xff] %v325
  %v332 = vlaneseq
  %v333 = vshrl.u32 %v332, 7
  %v334 = vadd.s32 %v333, 8
  %v335 = vadd.s32 %v333, 16
  %v336 = vadd.s32 %v333, 24
  %s337 = smul.u32 0, 32
  %v338 = vstv %s337
  %v339 = vadd.s32 %v333, %v338
  %v340 = vadd.s32 %v334, %v338
  %v341 = vadd.s32 %v335, %v338
  %v342 = vadd.s32 %v336, %v338
  %vm343 = vcmp.lt.s32.totalorder %v339, 32
  %vm344 = vcmp.lt.s32.totalorder %v340, 32
  %vm345 = vcmp.lt.s32.totalorder %v341, 32
  %vm346 = vcmp.lt.s32.totalorder %v342, 32
  %v347 = vsel %vm343, 1, 0
  %v348 = vsel %vm344, 1, 0
  %v349 = vsel %vm345, 1, 0
  %v350 = vsel %vm346, 1, 0
  %v351 = vcvt.s32.f32 %v347
  %v352 = vcvt.s32.f32 %v348
  %v353 = vcvt.s32.f32 %v349
  %v354 = vcvt.s32.f32 %v350
  %v355 = vld [vmem:[%s4] sm:$0x1]
  %v356 = vmul.f32 %v239, %v351
  %v357 = vmul.f32 %v240, %v352
  %v358 = vmul.f32 %v241, %v353
  %v359 = vmul.f32 %v242, %v354
  %v360 = vadd.f32 %v356, %v357
  %v361 = vadd.f32 %v360, %v358
  %v362 = vadd.f32 %v361, %v359
  %v363 = vrot.slane %v362, 4
  %v364 = vadd.f32 %v362, %v363
  %v365 = vrot.slane %v364, 2
  %v366 = vadd.f32 %v364, %v365
  %v367 = vrot.slane %v366, 1
  %v368 = vadd.f32 %v366, %v367
  %v369 = vadd.f32 %v355, %v368
  %370 = vst [vmem:[%s4] sm:$0x1] %v369
  // Predicated region
  $region18: #{vqvae_forward.24} parent=0 // pred_check
    _
  $region19: #{vqvae_forward.24} parent=0 // pred_check_branch
    %372 = sbr.rel (0) target = $region21
  $region20: #{vqvae_forward.24} parent=0 // pred_region
    _
  $region21: #{vqvae_forward.24} parent=0 // pred_fallthru
    _
  // Predicated region
  $region22: #{vqvae_forward.24} parent=0 // pred_check
    _
  $region23: #{vqvae_forward.24} parent=0 // pred_check_branch
    %374 = sbr.rel (0) target = $region25
  $region24: #{vqvae_forward.24} parent=0 // pred_region
    _
  $region25: #{vqvae_forward.24} parent=0 // pred_fallthru
    _
  // Predicated region
  $region26: #{vqvae_forward.24} parent=0 // pred_check
    _
  $region27: #{vqvae_forward.24} parent=0 // pred_check_branch
    %376 = sbr.rel (0) target = $region29
  $region28: #{vqvae_forward.24} parent=0 // pred_region
    _
  $region29: #{vqvae_forward.24} parent=0 // pred_fallthru
    _
  // Predicated region
  $region30: #{vqvae_forward.24} parent=0 // pred_check
    _
  $region31: #{vqvae_forward.24} parent=0 // pred_check_branch
    %378 = sbr.rel (0) target = $region33
  $region32: #{vqvae_forward.24} parent=0 // pred_region
    _
  $region33: #{vqvae_forward.24} parent=0 // pred_fallthru
    _

// kernel: vqvae_forward.25
$region0: #{vqvae_forward.25}
  #allocation0 [shape = 'u32[]', space=smem, size = 0x4, offset = 0x4, fixed_abs, tag = 'smem constant byte address 0x4 - core index']
  #allocation1 [shape = 'u32[144,128]{1,0:T(1,128)}', space=vmem, size = 0x12000, scoped, tag = 'internal scratch']
  #allocation2 [shape = 'f32[32,128]{1,0:T(8,128)}', space=vmem, size = 0x4000, scoped, tag = 'scratch operand']
  %s0 = inlined_call_operand.vmem [shape: bf16[32,128], index: 0, kind: input, shape index: {}]
  %s1 = inlined_call_operand.vmem [shape: bf16[128,128], index: 1, kind: input, shape index: {}]
  %s2 = inlined_call_operand.vmem [shape: f32[1,128], index: 2, kind: input, shape index: {}]
  %s3 = inlined_call_operand.vmem [shape: f32[32,128], index: 3, kind: output, shape index: {}]
  %s4 = sld [smem:[#allocation0]]
  $region30: #{vqvae_forward.25} parent=0
    _
  %s6 = ssub.s32 1, %s4
  %s7 = scalar_select 0, %s6, %s4
  // Predicated region
  $region2: #{vqvae_forward.25} parent=0 // pred_check
    _
  $region3: #{vqvae_forward.25} parent=0 // pred_check_branch
    %9 = sbr.rel (0) target = $region5
  $region4: #{vqvae_forward.25} parent=0 // pred_region
    _
  $region5: #{vqvae_forward.25} parent=0 // pred_fallthru
    _
  // Predicated region
  $region6: #{vqvae_forward.25} parent=0 // pred_check
    _
  $region7: #{vqvae_forward.25} parent=0 // pred_check_branch
    %11 = sbr.rel (0) target = $region9
  $region8: #{vqvae_forward.25} parent=0 // pred_region
    _
  $region9: #{vqvae_forward.25} parent=0 // pred_fallthru
    _
  // Predicated region
  $region10: #{vqvae_forward.25} parent=0 // pred_check
    _
  $region11: #{vqvae_forward.25} parent=0 // pred_check_branch
    %13 = sbr.rel (0) target = $region13
  $region12: #{vqvae_forward.25} parent=0 // pred_region
    _
  $region13: #{vqvae_forward.25} parent=0 // pred_fallthru
    _
  %p15 = scmp.eq.s32.totalorder 0, 0
  // Predicated region
  $region14: #{vqvae_forward.25} parent=0 // pred_check
    %p16 = pneg %p15
  $region15: #{vqvae_forward.25} parent=0 // pred_check_branch
    %18 = sbr.rel (%p16) target = $region17
  $region16: #{vqvae_forward.25} parent=0 // pred_region
    %19 = vst [vmem:[#allocation2] sm:$0xff] 0.0
    %20 = vst [vmem:[#allocation2 + $0x8] sm:$0xff] 0.0
    %21 = vst [vmem:[#allocation2 + $0x10] sm:$0xff] 0.0
    %22 = vst [vmem:[#allocation2 + $0x18] sm:$0xff] 0.0
  $region17: #{vqvae_forward.25} parent=0 // pred_fallthru
    _
  %v23 = vld [vmem:[%s0] sm:$0xf]
  %v24 = vld [vmem:[%s0 + $0x4] sm:$0xf]
  %v25 = vld [vmem:[%s0 + $0x8] sm:$0xf]
  %v26 = vld [vmem:[%s0 + $0xc] sm:$0xf]
  %v27 = vld [vmem:[#allocation2] sm:$0xff]
  %v28 = vld [vmem:[#allocation2 + $0x8] sm:$0xff]
  %v29 = vld [vmem:[#allocation2 + $0x10] sm:$0xff]
  %v30 = vld [vmem:[#allocation2 + $0x18] sm:$0xff]
  %v31 = vld [vmem:[%s1] sm:$0xf]
  %v32 = vld [vmem:[%s1 + $0x4] sm:$0xf]
  %v33 = vld [vmem:[%s1 + $0x8] sm:$0xf]
  %v34 = vld [vmem:[%s1 + $0xc] sm:$0xf]
  %v35 = vld [vmem:[%s1 + $0x10] sm:$0xf]
  %v36 = vld [vmem:[%s1 + $0x14] sm:$0xf]
  %v37 = vld [vmem:[%s1 + $0x18] sm:$0xf]
  %v38 = vld [vmem:[%s1 + $0x1c] sm:$0xf]
  %v39 = vld [vmem:[%s1 + $0x20] sm:$0xf]
  %v40 = vld [vmem:[%s1 + $0x24] sm:$0xf]
  %v41 = vld [vmem:[%s1 + $0x28] sm:$0xf]
  %v42 = vld [vmem:[%s1 + $0x2c] sm:$0xf]
  %v43 = vld [vmem:[%s1 + $0x30] sm:$0xf]
  %v44 = vld [vmem:[%s1 + $0x34] sm:$0xf]
  %v45 = vld [vmem:[%s1 + $0x38] sm:$0xf]
  %v46 = vld [vmem:[%s1 + $0x3c] sm:$0xf]
  %v51 = vunpack.c.l.b16 %v23
  %v52 = vunpack.c.l.b16 %v24
  %v53 = vunpack.c.l.b16 %v25
  %v54 = vunpack.c.l.b16 %v26
  %v55 = vpack.c.b16 %v52, %v51
  %v56 = vpack.c.b16 %v54, %v53
  %v75 = vunpack.c.l.b16 %v31
  %v76 = vunpack.c.l.b16 %v32
  %v77 = vunpack.c.l.b16 %v33
  %v78 = vunpack.c.l.b16 %v34
  %v79 = vunpack.c.l.b16 %v35
  %v80 = vunpack.c.l.b16 %v36
  %v81 = vunpack.c.l.b16 %v37
  %v82 = vunpack.c.l.b16 %v38
  %v83 = vunpack.c.l.b16 %v39
  %v84 = vunpack.c.l.b16 %v40
  %v85 = vunpack.c.l.b16 %v41
  %v86 = vunpack.c.l.b16 %v42
  %v87 = vunpack.c.l.b16 %v43
  %v88 = vunpack.c.l.b16 %v44
  %v89 = vunpack.c.l.b16 %v45
  %v90 = vunpack.c.l.b16 %v46
  %v91 = vpack.c.b16 %v76, %v75
  %v92 = vpack.c.b16 %v78, %v77
  %v93 = vpack.c.b16 %v80, %v79
  %v94 = vpack.c.b16 %v82, %v81
  %v95 = vpack.c.b16 %v84, %v83
  %v96 = vpack.c.b16 %v86, %v85
  %v97 = vpack.c.b16 %v88, %v87
  %v98 = vpack.c.b16 %v90, %v89
  %107 = vmatprep.subr.bf16.mxu0 0
  %108 = vmatpush1.bf16.msra.mxu0 %v91
  %109 = vmatprep.subr.bf16.mxu0 0
  %110 = vmatpush1.bf16.msra.mxu0 %v92
  %111 = vmatprep.subr.bf16.mxu0 0
  %112 = vmatpush1.bf16.msra.mxu0 %v93
  %113 = vmatprep.subr.bf16.mxu0 0
  %114 = vmatpush1.bf16.msra.mxu0 %v94
  %115 = vmatprep.subr.bf16.mxu0 0
  %116 = vmatpush1.bf16.msra.mxu0 %v95
  %117 = vmatprep.subr.bf16.mxu0 0
  %118 = vmatpush1.bf16.msra.mxu0 %v96
  %119 = vmatprep.subr.bf16.mxu0 0
  %120 = vmatpush1.bf16.msra.mxu0 %v97
  %121 = vmatprep.subr.bf16.mxu0 0
  %122 = vmatpush1.bf16.msra.mxu0 %v98
  %123 = vmatprep.subr.bf16.mxu0 0
  %124 = vmatpush1.bf16.msra.mxu0 0
  %125 = vmatprep.subr.bf16.mxu0 0
  %126 = vmatpush1.bf16.msra.mxu0 0
  %127 = vmatprep.subr.bf16.mxu0 0
  %128 = vmatpush1.bf16.msra.mxu0 0
  %129 = vmatprep.subr.bf16.mxu0 0
  %130 = vmatpush1.bf16.msra.mxu0 0
  %131 = vmatprep.subr.bf16.mxu0 0
  %132 = vmatpush1.bf16.msra.mxu0 0
  %133 = vmatprep.subr.bf16.mxu0 0
  %134 = vmatpush1.bf16.msra.mxu0 0
  %135 = vmatprep.subr.bf16.mxu0 0
  %136 = vmatpush1.bf16.msra.mxu0 0
  %137 = vmatprep.subr.bf16.mxu0 0
  %138 = vmatpush1.bf16.msra.mxu0 0
  %139 = vmatprep.mubr.bf16.mxu0 0
  %140 = vmatmul.mubr.bf16.gmra.mrb[0].mxu0 %v55
  %v141 = vpop.f32.mrb[0].mxu0
  %v142 = vadd.f32 0.0, %v141
  %v143 = vpop.f32.mrb[0].mxu0
  %v144 = vpop.f32.mrb[0].mxu0
  %v145 = vadd.f32 0.0, %v144
  %v146 = vpop.f32.mrb[0].mxu0
  %147 = vmatprep.mubr.bf16.mxu0 0
  %148 = vmatmul.mubr.bf16.gmra.mrb[0].mxu0 %v56
  %v149 = vpop.f32.mrb[0].mxu0
  %v150 = vadd.f32 0.0, %v149
  %v151 = vpop.f32.mrb[0].mxu0
  %v152 = vpop.f32.mrb[0].mxu0
  %v153 = vadd.f32 0.0, %v152
  %v154 = vpop.f32.mrb[0].mxu0
  %155 = vdwg.mxu0
  %v156 = vadd.f32 %v27, %v142
  %v157 = vadd.f32 %v28, %v145
  %v158 = vadd.f32 %v29, %v150
  %v159 = vadd.f32 %v30, %v153
  %160 = vst [vmem:[#allocation2] sm:$0xff] %v156
  %161 = vst [vmem:[#allocation2 + $0x8] sm:$0xff] %v157
  %162 = vst [vmem:[#allocation2 + $0x10] sm:$0xff] %v158
  %163 = vst [vmem:[#allocation2 + $0x18] sm:$0xff] %v159
  // Predicated region
  $region18: #{vqvae_forward.25} parent=0 // pred_check
    %p164 = pneg %p15
  $region19: #{vqvae_forward.25} parent=0 // pred_check_branch
    %166 = sbr.rel (%p164) target = $region21
  $region20: #{vqvae_forward.25} parent=0 // pred_region
    %v167 = vld [vmem:[#allocation2] sm:$0xff]
    %v168 = vld [vmem:[#allocation2 + $0x8] sm:$0xff]
    %v169 = vld [vmem:[#allocation2 + $0x10] sm:$0xff]
    %v170 = vld [vmem:[#allocation2 + $0x18] sm:$0xff]
    %v171 = vld [vmem:[%s2] sm:$0x1]
    %v173 = vlaneseq
    %v174 = vshrl.u32 %v173, 7
    %v175 = vsub.s32 0, %v174
    %v176 = vrot.slane %v171, %v175
    %v178 = vadd.f32 %v167, %v176
    %v179 = vadd.f32 %v168, %v176
    %v180 = vadd.f32 %v169, %v176
    %v181 = vadd.f32 %v170, %v176
    %182 = vst [vmem:[%s3] sm:$0xff] %v178
    %183 = vst [vmem:[%s3 + $0x8] sm:$0xff] %v179
    %184 = vst [vmem:[%s3 + $0x10] sm:$0xff] %v180
    %185 = vst [vmem:[%s3 + $0x18] sm:$0xff] %v181
  $region21: #{vqvae_forward.25} parent=0 // pred_fallthru
    _
  // Predicated region
  $region22: #{vqvae_forward.25} parent=0 // pred_check
    _
  $region23: #{vqvae_forward.25} parent=0 // pred_check_branch
    %187 = sbr.rel (0) target = $region25
  $region24: #{vqvae_forward.25} parent=0 // pred_region
    _
  $region25: #{vqvae_forward.25} parent=0 // pred_fallthru
    _
  // Predicated region
  $region26: #{vqvae_forward.25} parent=0 // pred_check
    _
  $region27: #{vqvae_forward.25} parent=0 // pred_check_branch
    %189 = sbr.rel (0) target = $region29
  $region28: #{vqvae_forward.25} parent=0 // pred_region
    _
  $region29: #{vqvae_forward.25} parent=0 // pred_fallthru
    _

// kernel: vqvae_forward.30
$region0: #{vqvae_forward.30}
  #allocation0 [shape = 'u32[]', space=smem, size = 0x4, offset = 0x4, fixed_abs, tag = 'smem constant byte address 0x4 - core index']
  #allocation1 [shape = 'u32[144,128]{1,0:T(1,128)}', space=vmem, size = 0x12000, scoped, tag = 'internal scratch']
  #allocation2 [shape = 'f32[128,128]{1,0:T(8,128)}', space=vmem, size = 0x10000, scoped, tag = 'scratch operand']
  %s0 = inlined_call_operand.vmem [shape: bf16[128,512], index: 0, kind: input, shape index: {}]
  %s1 = inlined_call_operand.vmem [shape: bf16[512,128], index: 1, kind: input, shape index: {}]
  %s2 = inlined_call_operand.vmem [shape: f32[1,128], index: 2, kind: input, shape index: {}]
  %s3 = inlined_call_operand.vmem [shape: f32[128,128], index: 3, kind: output, shape index: {}]
  %s4 = sld [smem:[#allocation0]]
  $region30: #{vqvae_forward.30} parent=0
    _
  %s6 = ssub.s32 1, %s4
  %s7 = scalar_select 0, %s6, %s4
  // Predicated region
  $region2: #{vqvae_forward.30} parent=0 // pred_check
    _
  $region3: #{vqvae_forward.30} parent=0 // pred_check_branch
    %9 = sbr.rel (0) target = $region5
  $region4: #{vqvae_forward.30} parent=0 // pred_region
    _
  $region5: #{vqvae_forward.30} parent=0 // pred_fallthru
    _
  // Predicated region
  $region6: #{vqvae_forward.30} parent=0 // pred_check
    _
  $region7: #{vqvae_forward.30} parent=0 // pred_check_branch
    %11 = sbr.rel (0) target = $region9
  $region8: #{vqvae_forward.30} parent=0 // pred_region
    _
  $region9: #{vqvae_forward.30} parent=0 // pred_fallthru
    _
  // Predicated region
  $region10: #{vqvae_forward.30} parent=0 // pred_check
    _
  $region11: #{vqvae_forward.30} parent=0 // pred_check_branch
    %13 = sbr.rel (0) target = $region13
  $region12: #{vqvae_forward.30} parent=0 // pred_region
    _
  $region13: #{vqvae_forward.30} parent=0 // pred_fallthru
    _
  %p15 = scmp.eq.s32.totalorder 0, 0
  // Predicated region
  $region14: #{vqvae_forward.30} parent=0 // pred_check
    %p16 = pneg %p15
  $region15: #{vqvae_forward.30} parent=0 // pred_check_branch
    %18 = sbr.rel (%p16) target = $region17
  $region16: #{vqvae_forward.30} parent=0 // pred_region
    %19 = vst [vmem:[#allocation2] sm:$0xff] 0.0
    %20 = vst [vmem:[#allocation2 + $0x8] sm:$0xff] 0.0
    %21 = vst [vmem:[#allocation2 + $0x10] sm:$0xff] 0.0
    %22 = vst [vmem:[#allocation2 + $0x18] sm:$0xff] 0.0
    %23 = vst [vmem:[#allocation2 + $0x20] sm:$0xff] 0.0
    %24 = vst [vmem:[#allocation2 + $0x28] sm:$0xff] 0.0
    %25 = vst [vmem:[#allocation2 + $0x30] sm:$0xff] 0.0
    %26 = vst [vmem:[#allocation2 + $0x38] sm:$0xff] 0.0
    %27 = vst [vmem:[#allocation2 + $0x40] sm:$0xff] 0.0
    %28 = vst [vmem:[#allocation2 + $0x48] sm:$0xff] 0.0
    %29 = vst [vmem:[#allocation2 + $0x50] sm:$0xff] 0.0
    %30 = vst [vmem:[#allocation2 + $0x58] sm:$0xff] 0.0
    %31 = vst [vmem:[#allocation2 + $0x60] sm:$0xff] 0.0
    %32 = vst [vmem:[#allocation2 + $0x68] sm:$0xff] 0.0
    %33 = vst [vmem:[#allocation2 + $0x70] sm:$0xff] 0.0
    %34 = vst [vmem:[#allocation2 + $0x78] sm:$0xff] 0.0
  $region17: #{vqvae_forward.30} parent=0 // pred_fallthru
    _
  %v35 = vld [vmem:[%s0] sm:$0xff]
  %v36 = vld [vmem:[%s0 + $0x8] sm:$0xff]
  %v37 = vld [vmem:[%s0 + $0x10] sm:$0xff]
  %v38 = vld [vmem:[%s0 + $0x18] sm:$0xff]
  %v39 = vld [vmem:[%s0 + $0x20] sm:$0xff]
  %v40 = vld [vmem:[%s0 + $0x28] sm:$0xff]
  %v41 = vld [vmem:[%s0 + $0x30] sm:$0xff]
  %v42 = vld [vmem:[%s0 + $0x38] sm:$0xff]
  %v43 = vld [vmem:[%s0 + $0x40] sm:$0xff]
  %v44 = vld [vmem:[%s0 + $0x48] sm:$0xff]
  %v45 = vld [vmem:[%s0 + $0x50] sm:$0xff]
  %v46 = vld [vmem:[%s0 + $0x58] sm:$0xff]
  %v47 = vld [vmem:[%s0 + $0x60] sm:$0xff]
  %v48 = vld [vmem:[%s0 + $0x68] sm:$0xff]
  %v49 = vld [vmem:[%s0 + $0x70] sm:$0xff]
  %v50 = vld [vmem:[%s0 + $0x78] sm:$0xff]
  %v51 = vld [vmem:[%s0 + $0x80] sm:$0xff]
  %v52 = vld [vmem:[%s0 + $0x88] sm:$0xff]
  %v53 = vld [vmem:[%s0 + $0x90] sm:$0xff]
  %v54 = vld [vmem:[%s0 + $0x98] sm:$0xff]
  %v55 = vld [vmem:[%s0 + $0xa0] sm:$0xff]
  %v56 = vld [vmem:[%s0 + $0xa8] sm:$0xff]
  %v57 = vld [vmem:[%s0 + $0xb0] sm:$0xff]
  %v58 = vld [vmem:[%s0 + $0xb8] sm:$0xff]
  %v59 = vld [vmem:[%s0 + $0xc0] sm:$0xff]
  %v60 = vld [vmem:[%s0 + $0xc8] sm:$0xff]
  %v61 = vld [vmem:[%s0 + $0xd0] sm:$0xff]
  %v62 = vld [vmem:[%s0 + $0xd8] sm:$0xff]
  %v63 = vld [vmem:[%s0 + $0xe0] sm:$0xff]
  %v64 = vld [vmem:[%s0 + $0xe8] sm:$0xff]
  %v65 = vld [vmem:[%s0 + $0xf0] sm:$0xff]
  %v66 = vld [vmem:[%s0 + $0xf8] sm:$0xff]
  %v67 = vmax.bf16 %v35, 0
  %v68 = vmax.bf16 %v36, 0
  %v69 = vmax.bf16 %v37, 0
  %v70 = vmax.bf16 %v38, 0
  %v71 = vmax.bf16 %v39, 0
  %v72 = vmax.bf16 %v40, 0
  %v73 = vmax.bf16 %v41, 0
  %v74 = vmax.bf16 %v42, 0
  %v75 = vmax.bf16 %v43, 0
  %v76 = vmax.bf16 %v44, 0
  %v77 = vmax.bf16 %v45, 0
  %v78 = vmax.bf16 %v46, 0
  %v79 = vmax.bf16 %v47, 0
  %v80 = vmax.bf16 %v48, 0
  %v81 = vmax.bf16 %v49, 0
  %v82 = vmax.bf16 %v50, 0
  %v83 = vmax.bf16 %v51, 0
  %v84 = vmax.bf16 %v52, 0
  %v85 = vmax.bf16 %v53, 0
  %v86 = vmax.bf16 %v54, 0
  %v87 = vmax.bf16 %v55, 0
  %v88 = vmax.bf16 %v56, 0
  %v89 = vmax.bf16 %v57, 0
  %v90 = vmax.bf16 %v58, 0
  %v91 = vmax.bf16 %v59, 0
  %v92 = vmax.bf16 %v60, 0
  %v93 = vmax.bf16 %v61, 0
  %v94 = vmax.bf16 %v62, 0
  %v95 = vmax.bf16 %v63, 0
  %v96 = vmax.bf16 %v64, 0
  %v97 = vmax.bf16 %v65, 0
  %v98 = vmax.bf16 %v66, 0
  %v99 = vld [vmem:[#allocation2] sm:$0xff]
  %v100 = vld [vmem:[#allocation2 + $0x8] sm:$0xff]
  %v101 = vld [vmem:[#allocation2 + $0x10] sm:$0xff]
  %v102 = vld [vmem:[#allocation2 + $0x18] sm:$0xff]
  %v103 = vld [vmem:[#allocation2 + $0x20] sm:$0xff]
  %v104 = vld [vmem:[#allocation2 + $0x28] sm:$0xff]
  %v105 = vld [vmem:[#allocation2 + $0x30] sm:$0xff]
  %v106 = vld [vmem:[#allocation2 + $0x38] sm:$0xff]
  %v107 = vld [vmem:[#allocation2 + $0x40] sm:$0xff]
  %v108 = vld [vmem:[#allocation2 + $0x48] sm:$0xff]
  %v109 = vld [vmem:[#allocation2 + $0x50] sm:$0xff]
  %v110 = vld [vmem:[#allocation2 + $0x58] sm:$0xff]
  %v111 = vld [vmem:[#allocation2 + $0x60] sm:$0xff]
  %v112 = vld [vmem:[#allocation2 + $0x68] sm:$0xff]
  %v113 = vld [vmem:[#allocation2 + $0x70] sm:$0xff]
  %v114 = vld [vmem:[#allocation2 + $0x78] sm:$0xff]
  %v115 = vld [vmem:[%s1] sm:$0xf]
  %v116 = vld [vmem:[%s1 + $0x4] sm:$0xf]
  %v117 = vld [vmem:[%s1 + $0x8] sm:$0xf]
  %v118 = vld [vmem:[%s1 + $0xc] sm:$0xf]
  %v119 = vld [vmem:[%s1 + $0x10] sm:$0xf]
  %v120 = vld [vmem:[%s1 + $0x14] sm:$0xf]
  %v121 = vld [vmem:[%s1 + $0x18] sm:$0xf]
  %v122 = vld [vmem:[%s1 + $0x1c] sm:$0xf]
  %v123 = vld [vmem:[%s1 + $0x20] sm:$0xf]
  %v124 = vld [vmem:[%s1 + $0x24] sm:$0xf]
  %v125 = vld [vmem:[%s1 + $0x28] sm:$0xf]
  %v126 = vld [vmem:[%s1 + $0x2c] sm:$0xf]
  %v127 = vld [vmem:[%s1 + $0x30] sm:$0xf]
  %v128 = vld [vmem:[%s1 + $0x34] sm:$0xf]
  %v129 = vld [vmem:[%s1 + $0x38] sm:$0xf]
  %v130 = vld [vmem:[%s1 + $0x3c] sm:$0xf]
  %v131 = vld [vmem:[%s1 + $0x40] sm:$0xf]
  %v132 = vld [vmem:[%s1 + $0x44] sm:$0xf]
  %v133 = vld [vmem:[%s1 + $0x48] sm:$0xf]
  %v134 = vld [vmem:[%s1 + $0x4c] sm:$0xf]
  %v135 = vld [vmem:[%s1 + $0x50] sm:$0xf]
  %v136 = vld [vmem:[%s1 + $0x54] sm:$0xf]
  %v137 = vld [vmem:[%s1 + $0x58] sm:$0xf]
  %v138 = vld [vmem:[%s1 + $0x5c] sm:$0xf]
  %v139 = vld [vmem:[%s1 + $0x60] sm:$0xf]
  %v140 = vld [vmem:[%s1 + $0x64] sm:$0xf]
  %v141 = vld [vmem:[%s1 + $0x68] sm:$0xf]
  %v142 = vld [vmem:[%s1 + $0x6c] sm:$0xf]
  %v143 = vld [vmem:[%s1 + $0x70] sm:$0xf]
  %v144 = vld [vmem:[%s1 + $0x74] sm:$0xf]
  %v145 = vld [vmem:[%s1 + $0x78] sm:$0xf]
  %v146 = vld [vmem:[%s1 + $0x7c] sm:$0xf]
  %v147 = vld [vmem:[%s1 + $0x80] sm:$0xf]
  %v148 = vld [vmem:[%s1 + $0x84] sm:$0xf]
  %v149 = vld [vmem:[%s1 + $0x88] sm:$0xf]
  %v150 = vld [vmem:[%s1 + $0x8c] sm:$0xf]
  %v151 = vld [vmem:[%s1 + $0x90] sm:$0xf]
  %v152 = vld [vmem:[%s1 + $0x94] sm:$0xf]
  %v153 = vld [vmem:[%s1 + $0x98] sm:$0xf]
  %v154 = vld [vmem:[%s1 + $0x9c] sm:$0xf]
  %v155 = vld [vmem:[%s1 + $0xa0] sm:$0xf]
  %v156 = vld [vmem:[%s1 + $0xa4] sm:$0xf]
  %v157 = vld [vmem:[%s1 + $0xa8] sm:$0xf]
  %v158 = vld [vmem:[%s1 + $0xac] sm:$0xf]
  %v159 = vld [vmem:[%s1 + $0xb0] sm:$0xf]
  %v160 = vld [vmem:[%s1 + $0xb4] sm:$0xf]
  %v161 = vld [vmem:[%s1 + $0xb8] sm:$0xf]
  %v162 = vld [vmem:[%s1 + $0xbc] sm:$0xf]
  %v163 = vld [vmem:[%s1 + $0xc0] sm:$0xf]
  %v164 = vld [vmem:[%s1 + $0xc4] sm:$0xf]
  %v165 = vld [vmem:[%s1 + $0xc8] sm:$0xf]
  %v166 = vld [vmem:[%s1 + $0xcc] sm:$0xf]
  %v167 = vld [vmem:[%s1 + $0xd0] sm:$0xf]
  %v168 = vld [vmem:[%s1 + $0xd4] sm:$0xf]
  %v169 = vld [vmem:[%s1 + $0xd8] sm:$0xf]
  %v170 = vld [vmem:[%s1 + $0xdc] sm:$0xf]
  %v171 = vld [vmem:[%s1 + $0xe0] sm:$0xf]
  %v172 = vld [vmem:[%s1 + $0xe4] sm:$0xf]
  %v173 = vld [vmem:[%s1 + $0xe8] sm:$0xf]
  %v174 = vld [vmem:[%s1 + $0xec] sm:$0xf]
  %v175 = vld [vmem:[%s1 + $0xf0] sm:$0xf]
  %v176 = vld [vmem:[%s1 + $0xf4] sm:$0xf]
  %v177 = vld [vmem:[%s1 + $0xf8] sm:$0xf]
  %v178 = vld [vmem:[%s1 + $0xfc] sm:$0xf]
  %v211 = vunpack.c.l.b16 %v67
  %v212 = vunpack.c.h.b16 %v67
  %v213 = vunpack.c.l.b16 %v68
  %v214 = vunpack.c.h.b16 %v68
  %v215 = vunpack.c.l.b16 %v69
  %v216 = vunpack.c.h.b16 %v69
  %v217 = vunpack.c.l.b16 %v70
  %v218 = vunpack.c.h.b16 %v70
  %v219 = vunpack.c.l.b16 %v71
  %v220 = vunpack.c.h.b16 %v71
  %v221 = vunpack.c.l.b16 %v72
  %v222 = vunpack.c.h.b16 %v72
  %v223 = vunpack.c.l.b16 %v73
  %v224 = vunpack.c.h.b16 %v73
  %v225 = vunpack.c.l.b16 %v74
  %v226 = vunpack.c.h.b16 %v74
  %v227 = vunpack.c.l.b16 %v75
  %v228 = vunpack.c.h.b16 %v75
  %v229 = vunpack.c.l.b16 %v76
  %v230 = vunpack.c.h.b16 %v76
  %v231 = vunpack.c.l.b16 %v77
  %v232 = vunpack.c.h.b16 %v77
  %v233 = vunpack.c.l.b16 %v78
  %v234 = vunpack.c.h.b16 %v78
  %v235 = vunpack.c.l.b16 %v79
  %v236 = vunpack.c.h.b16 %v79
  %v237 = vunpack.c.l.b16 %v80
  %v238 = vunpack.c.h.b16 %v80
  %v239 = vunpack.c.l.b16 %v81
  %v240 = vunpack.c.h.b16 %v81
  %v241 = vunpack.c.l.b16 %v82
  %v242 = vunpack.c.h.b16 %v82
  %v243 = vunpack.c.l.b16 %v83
  %v244 = vunpack.c.h.b16 %v83
  %v245 = vunpack.c.l.b16 %v84
  %v246 = vunpack.c.h.b16 %v84
  %v247 = vunpack.c.l.b16 %v85
  %v248 = vunpack.c.h.b16 %v85
  %v249 = vunpack.c.l.b16 %v86
  %v250 = vunpack.c.h.b16 %v86
  %v251 = vunpack.c.l.b16 %v87
  %v252 = vunpack.c.h.b16 %v87
  %v253 = vunpack.c.l.b16 %v88
  %v254 = vunpack.c.h.b16 %v88
  %v255 = vunpack.c.l.b16 %v89
  %v256 = vunpack.c.h.b16 %v89
  %v257 = vunpack.c.l.b16 %v90
  %v258 = vunpack.c.h.b16 %v90
  %v259 = vunpack.c.l.b16 %v91
  %v260 = vunpack.c.h.b16 %v91
  %v261 = vunpack.c.l.b16 %v92
  %v262 = vunpack.c.h.b16 %v92
  %v263 = vunpack.c.l.b16 %v93
  %v264 = vunpack.c.h.b16 %v93
  %v265 = vunpack.c.l.b16 %v94
  %v266 = vunpack.c.h.b16 %v94
  %v267 = vunpack.c.l.b16 %v95
  %v268 = vunpack.c.h.b16 %v95
  %v269 = vunpack.c.l.b16 %v96
  %v270 = vunpack.c.h.b16 %v96
  %v271 = vunpack.c.l.b16 %v97
  %v272 = vunpack.c.h.b16 %v97
  %v273 = vunpack.c.l.b16 %v98
  %v274 = vunpack.c.h.b16 %v98
  %v275 = vpack.c.b16 %v215, %v211
  %v276 = vpack.c.b16 %v216, %v212
  %v277 = vpack.c.b16 %v217, %v213
  %v278 = vpack.c.b16 %v218, %v214
  %v279 = vpack.c.b16 %v223, %v219
  %v280 = vpack.c.b16 %v224, %v220
  %v281 = vpack.c.b16 %v225, %v221
  %v282 = vpack.c.b16 %v226, %v222
  %v283 = vpack.c.b16 %v231, %v227
  %v284 = vpack.c.b16 %v232, %v228
  %v285 = vpack.c.b16 %v233, %v229
  %v286 = vpack.c.b16 %v234, %v230
  %v287 = vpack.c.b16 %v239, %v235
  %v288 = vpack.c.b16 %v240, %v236
  %v289 = vpack.c.b16 %v241, %v237
  %v290 = vpack.c.b16 %v242, %v238
  %v291 = vpack.c.b16 %v247, %v243
  %v292 = vpack.c.b16 %v248, %v244
  %v293 = vpack.c.b16 %v249, %v245
  %v294 = vpack.c.b16 %v250, %v246
  %v295 = vpack.c.b16 %v255, %v251
  %v296 = vpack.c.b16 %v256, %v252
  %v297 = vpack.c.b16 %v257, %v253
  %v298 = vpack.c.b16 %v258, %v254
  %v299 = vpack.c.b16 %v263, %v259
  %v300 = vpack.c.b16 %v264, %v260
  %v301 = vpack.c.b16 %v265, %v261
  %v302 = vpack.c.b16 %v266, %v262
  %v303 = vpack.c.b16 %v271, %v267
  %v304 = vpack.c.b16 %v272, %v268
  %v305 = vpack.c.b16 %v273, %v269
  %v306 = vpack.c.b16 %v274, %v270
  %v403 = vunpack.c.l.b16 %v115
  %v404 = vunpack.c.l.b16 %v116
  %v405 = vunpack.c.l.b16 %v117
  %v406 = vunpack.c.l.b16 %v118
  %v407 = vunpack.c.l.b16 %v119
  %v408 = vunpack.c.l.b16 %v120
  %v409 = vunpack.c.l.b16 %v121
  %v410 = vunpack.c.l.b16 %v122
  %v411 = vunpack.c.l.b16 %v123
  %v412 = vunpack.c.l.b16 %v124
  %v413 = vunpack.c.l.b16 %v125
  %v414 = vunpack.c.l.b16 %v126
  %v415 = vunpack.c.l.b16 %v127
  %v416 = vunpack.c.l.b16 %v128
  %v417 = vunpack.c.l.b16 %v129
  %v418 = vunpack.c.l.b16 %v130
  %v419 = vunpack.c.l.b16 %v131
  %v420 = vunpack.c.l.b16 %v132
  %v421 = vunpack.c.l.b16 %v133
  %v422 = vunpack.c.l.b16 %v134
  %v423 = vunpack.c.l.b16 %v135
  %v424 = vunpack.c.l.b16 %v136
  %v425 = vunpack.c.l.b16 %v137
  %v426 = vunpack.c.l.b16 %v138
  %v427 = vunpack.c.l.b16 %v139
  %v428 = vunpack.c.l.b16 %v140
  %v429 = vunpack.c.l.b16 %v141
  %v430 = vunpack.c.l.b16 %v142
  %v431 = vunpack.c.l.b16 %v143
  %v432 = vunpack.c.l.b16 %v144
  %v433 = vunpack.c.l.b16 %v145
  %v434 = vunpack.c.l.b16 %v146
  %v435 = vunpack.c.l.b16 %v147
  %v436 = vunpack.c.l.b16 %v148
  %v437 = vunpack.c.l.b16 %v149
  %v438 = vunpack.c.l.b16 %v150
  %v439 = vunpack.c.l.b16 %v151
  %v440 = vunpack.c.l.b16 %v152
  %v441 = vunpack.c.l.b16 %v153
  %v442 = vunpack.c.l.b16 %v154
  %v443 = vunpack.c.l.b16 %v155
  %v444 = vunpack.c.l.b16 %v156
  %v445 = vunpack.c.l.b16 %v157
  %v446 = vunpack.c.l.b16 %v158
  %v447 = vunpack.c.l.b16 %v159
  %v448 = vunpack.c.l.b16 %v160
  %v449 = vunpack.c.l.b16 %v161
  %v450 = vunpack.c.l.b16 %v162
  %v451 = vunpack.c.l.b16 %v163
  %v452 = vunpack.c.l.b16 %v164
  %v453 = vunpack.c.l.b16 %v165
  %v454 = vunpack.c.l.b16 %v166
  %v455 = vunpack.c.l.b16 %v167
  %v456 = vunpack.c.l.b16 %v168
  %v457 = vunpack.c.l.b16 %v169
  %v458 = vunpack.c.l.b16 %v170
  %v459 = vunpack.c.l.b16 %v171
  %v460 = vunpack.c.l.b16 %v172
  %v461 = vunpack.c.l.b16 %v173
  %v462 = vunpack.c.l.b16 %v174
  %v463 = vunpack.c.l.b16 %v175
  %v464 = vunpack.c.l.b16 %v176
  %v465 = vunpack.c.l.b16 %v177
  %v466 = vunpack.c.l.b16 %v178
  %v467 = vpack.c.b16 %v404, %v403
  %v468 = vpack.c.b16 %v406, %v405
  %v469 = vpack.c.b16 %v408, %v407
  %v470 = vpack.c.b16 %v410, %v409
  %v471 = vpack.c.b16 %v412, %v411
  %v472 = vpack.c.b16 %v414, %v413
  %v473 = vpack.c.b16 %v416, %v415
  %v474 = vpack.c.b16 %v418, %v417
  %v475 = vpack.c.b16 %v420, %v419
  %v476 = vpack.c.b16 %v422, %v421
  %v477 = vpack.c.b16 %v424, %v423
  %v478 = vpack.c.b16 %v426, %v425
  %v479 = vpack.c.b16 %v428, %v427
  %v480 = vpack.c.b16 %v430, %v429
  %v481 = vpack.c.b16 %v432, %v431
  %v482 = vpack.c.b16 %v434, %v433
  %v483 = vpack.c.b16 %v436, %v435
  %v484 = vpack.c.b16 %v438, %v437
  %v485 = vpack.c.b16 %v440, %v439
  %v486 = vpack.c.b16 %v442, %v441
  %v487 = vpack.c.b16 %v444, %v443
  %v488 = vpack.c.b16 %v446, %v445
  %v489 = vpack.c.b16 %v448, %v447
  %v490 = vpack.c.b16 %v450, %v449
  %v491 = vpack.c.b16 %v452, %v451
  %v492 = vpack.c.b16 %v454, %v453
  %v493 = vpack.c.b16 %v456, %v455
  %v494 = vpack.c.b16 %v458, %v457
  %v495 = vpack.c.b16 %v460, %v459
  %v496 = vpack.c.b16 %v462, %v461
  %v497 = vpack.c.b16 %v464, %v463
  %v498 = vpack.c.b16 %v466, %v465
  %531 = vmatprep.subr.bf16.mxu0 0
  %532 = vmatpush1.bf16.msra.mxu0 %v467
  %533 = vmatprep.subr.bf16.mxu0 0
  %534 = vmatpush1.bf16.msra.mxu0 %v468
  %535 = vmatprep.subr.bf16.mxu0 0
  %536 = vmatpush1.bf16.msra.mxu0 %v469
  %537 = vmatprep.subr.bf16.mxu0 0
  %538 = vmatpush1.bf16.msra.mxu0 %v470
  %539 = vmatprep.subr.bf16.mxu0 0
  %540 = vmatpush1.bf16.msra.mxu0 %v471
  %541 = vmatprep.subr.bf16.mxu0 0
  %542 = vmatpush1.bf16.msra.mxu0 %v472
  %543 = vmatprep.subr.bf16.mxu0 0
  %544 = vmatpush1.bf16.msra.mxu0 %v473
  %545 = vmatprep.subr.bf16.mxu0 0
  %546 = vmatpush1.bf16.msra.mxu0 %v474
  %547 = vmatprep.subr.bf16.mxu0 0
  %548 = vmatpush1.bf16.msra.mxu0 %v475
  %549 = vmatprep.subr.bf16.mxu0 0
  %550 = vmatpush1.bf16.msra.mxu0 %v476
  %551 = vmatprep.subr.bf16.mxu0 0
  %552 = vmatpush1.bf16.msra.mxu0 %v477
  %553 = vmatprep.subr.bf16.mxu0 0
  %554 = vmatpush1.bf16.msra.mxu0 %v478
  %555 = vmatprep.subr.bf16.mxu0 0
  %556 = vmatpush1.bf16.msra.mxu0 %v479
  %557 = vmatprep.subr.bf16.mxu0 0
  %558 = vmatpush1.bf16.msra.mxu0 %v480
  %559 = vmatprep.subr.bf16.mxu0 0
  %560 = vmatpush1.bf16.msra.mxu0 %v481
  %561 = vmatprep.subr.bf16.mxu0 0
  %562 = vmatpush1.bf16.msra.mxu0 %v482
  %563 = vmatprep.mubr.bf16.mxu0 %v276
  %564 = vmatmul.mubr.bf16.gmra.mrb[0].mxu0 %v275
  %v565 = vpop.f32.mrb[0].mxu0
  %v566 = vadd.f32 0.0, %v565
  %v567 = vpop.f32.mrb[0].mxu0
  %v568 = vpop.f32.mrb[0].mxu0
  %v569 = vadd.f32 0.0, %v568
  %v570 = vpop.f32.mrb[0].mxu0
  %571 = vmatprep.mubr.bf16.mxu0 %v280
  %572 = vmatmul.mubr.bf16.gmra.mrb[0].mxu0 %v279
  %v573 = vpop.f32.mrb[0].mxu0
  %v574 = vadd.f32 0.0, %v573
  %v575 = vpop.f32.mrb[0].mxu0
  %v576 = vpop.f32.mrb[0].mxu0
  %v577 = vadd.f32 0.0, %v576
  %v578 = vpop.f32.mrb[0].mxu0
  %579 = vmatprep.mubr.bf16.mxu0 %v284
  %580 = vmatmul.mubr.bf16.gmra.mrb[0].mxu0 %v283
  %v581 = vpop.f32.mrb[0].mxu0
  %v582 = vadd.f32 0.0, %v581
  %v583 = vpop.f32.mrb[0].mxu0
  %v584 = vpop.f32.mrb[0].mxu0
  %v585 = vadd.f32 0.0, %v584
  %v586 = vpop.f32.mrb[0].mxu0
  %587 = vmatprep.mubr.bf16.mxu0 %v288
  %588 = vmatmul.mubr.bf16.gmra.mrb[0].mxu0 %v287
  %v589 = vpop.f32.mrb[0].mxu0
  %v590 = vadd.f32 0.0, %v589
  %v591 = vpop.f32.mrb[0].mxu0
  %v592 = vpop.f32.mrb[0].mxu0
  %v593 = vadd.f32 0.0, %v592
  %v594 = vpop.f32.mrb[0].mxu0
  %595 = vmatprep.mubr.bf16.mxu0 %v292
  %596 = vmatmul.mubr.bf16.gmra.mrb[0].mxu0 %v291
  %v597 = vpop.f32.mrb[0].mxu0
  %v598 = vadd.f32 0.0, %v597
  %v599 = vpop.f32.mrb[0].mxu0
  %v600 = vpop.f32.mrb[0].mxu0
  %v601 = vadd.f32 0.0, %v600
  %v602 = vpop.f32.mrb[0].mxu0
  %603 = vmatprep.mubr.bf16.mxu0 %v296
  %604 = vmatmul.mubr.bf16.gmra.mrb[0].mxu0 %v295
  %v605 = vpop.f32.mrb[0].mxu0
  %v606 = vadd.f32 0.0, %v605
  %v607 = vpop.f32.mrb[0].mxu0
  %v608 = vpop.f32.mrb[0].mxu0
  %v609 = vadd.f32 0.0, %v608
  %v610 = vpop.f32.mrb[0].mxu0
  %611 = vmatprep.mubr.bf16.mxu0 %v300
  %612 = vmatmul.mubr.bf16.gmra.mrb[0].mxu0 %v299
  %v613 = vpop.f32.mrb[0].mxu0
  %v614 = vadd.f32 0.0, %v613
  %v615 = vpop.f32.mrb[0].mxu0
  %v616 = vpop.f32.mrb[0].mxu0
  %v617 = vadd.f32 0.0, %v616
  %v618 = vpop.f32.mrb[0].mxu0
  %619 = vmatprep.mubr.bf16.mxu0 %v304
  %620 = vmatmul.mubr.bf16.gmra.mrb[0].mxu0 %v303
  %v621 = vpop.f32.mrb[0].mxu0
  %v622 = vadd.f32 0.0, %v621
  %v623 = vpop.f32.mrb[0].mxu0
  %v624 = vpop.f32.mrb[0].mxu0
  %v625 = vadd.f32 0.0, %v624
  %v626 = vpop.f32.mrb[0].mxu0
  %627 = vdwg.mxu0
  %628 = vmatprep.subr.bf16.mxu0 0
  %629 = vmatpush1.bf16.msra.mxu0 %v483
  %630 = vmatprep.subr.bf16.mxu0 0
  %631 = vmatpush1.bf16.msra.mxu0 %v484
  %632 = vmatprep.subr.bf16.mxu0 0
  %633 = vmatpush1.bf16.msra.mxu0 %v485
  %634 = vmatprep.subr.bf16.mxu0 0
  %635 = vmatpush1.bf16.msra.mxu0 %v486
  %636 = vmatprep.subr.bf16.mxu0 0
  %637 = vmatpush1.bf16.msra.mxu0 %v487
  %638 = vmatprep.subr.bf16.mxu0 0
  %639 = vmatpush1.bf16.msra.mxu0 %v488
  %640 = vmatprep.subr.bf16.mxu0 0
  %641 = vmatpush1.bf16.msra.mxu0 %v489
  %642 = vmatprep.subr.bf16.mxu0 0
  %643 = vmatpush1.bf16.msra.mxu0 %v490
  %644 = vmatprep.subr.bf16.mxu0 0
  %645 = vmatpush1.bf16.msra.mxu0 %v491
  %646 = vmatprep.subr.bf16.mxu0 0
  %647 = vmatpush1.bf16.msra.mxu0 %v492
  %648 = vmatprep.subr.bf16.mxu0 0
  %649 = vmatpush1.bf16.msra.mxu0 %v493
  %650 = vmatprep.subr.bf16.mxu0 0
  %651 = vmatpush1.bf16.msra.mxu0 %v494
  %652 = vmatprep.subr.bf16.mxu0 0
  %653 = vmatpush1.bf16.msra.mxu0 %v495
  %654 = vmatprep.subr.bf16.mxu0 0
  %655 = vmatpush1.bf16.msra.mxu0 %v496
  %656 = vmatprep.subr.bf16.mxu0 0
  %657 = vmatpush1.bf16.msra.mxu0 %v497
  %658 = vmatprep.subr.bf16.mxu0 0
  %659 = vmatpush1.bf16.msra.mxu0 %v498
  %660 = vmatprep.mubr.bf16.mxu0 %v278
  %661 = vmatmul.mubr.bf16.gmra.mrb[0].mxu0 %v277
  %v662 = vpop.f32.mrb[0].mxu0
  %v663 = vadd.f32 %v566, %v662
  %v664 = vpop.f32.mrb[0].mxu0
  %v665 = vpop.f32.mrb[0].mxu0
  %v666 = vadd.f32 %v569, %v665
  %v667 = vpop.f32.mrb[0].mxu0
  %668 = vmatprep.mubr.bf16.mxu0 %v282
  %669 = vmatmul.mubr.bf16.gmra.mrb[0].mxu0 %v281
  %v670 = vpop.f32.mrb[0].mxu0
  %v671 = vadd.f32 %v574, %v670
  %v672 = vpop.f32.mrb[0].mxu0
  %v673 = vpop.f32.mrb[0].mxu0
  %v674 = vadd.f32 %v577, %v673
  %v675 = vpop.f32.mrb[0].mxu0
  %676 = vmatprep.mubr.bf16.mxu0 %v286
  %677 = vmatmul.mubr.bf16.gmra.mrb[0].mxu0 %v285
  %v678 = vpop.f32.mrb[0].mxu0
  %v679 = vadd.f32 %v582, %v678
  %v680 = vpop.f32.mrb[0].mxu0
  %v681 = vpop.f32.mrb[0].mxu0
  %v682 = vadd.f32 %v585, %v681
  %v683 = vpop.f32.mrb[0].mxu0
  %684 = vmatprep.mubr.bf16.mxu0 %v290
  %685 = vmatmul.mubr.bf16.gmra.mrb[0].mxu0 %v289
  %v686 = vpop.f32.mrb[0].mxu0
  %v687 = vadd.f32 %v590, %v686
  %v688 = vpop.f32.mrb[0].mxu0
  %v689 = vpop.f32.mrb[0].mxu0
  %v690 = vadd.f32 %v593, %v689
  %v691 = vpop.f32.mrb[0].mxu0
  %692 = vmatprep.mubr.bf16.mxu0 %v294
  %693 = vmatmul.mubr.bf16.gmra.mrb[0].mxu0 %v293
  %v694 = vpop.f32.mrb[0].mxu0
  %v695 = vadd.f32 %v598, %v694
  %v696 = vpop.f32.mrb[0].mxu0
  %v697 = vpop.f32.mrb[0].mxu0
  %v698 = vadd.f32 %v601, %v697
  %v699 = vpop.f32.mrb[0].mxu0
  %700 = vmatprep.mubr.bf16.mxu0 %v298
  %701 = vmatmul.mubr.bf16.gmra.mrb[0].mxu0 %v297
  %v702 = vpop.f32.mrb[0].mxu0
  %v703 = vadd.f32 %v606, %v702
  %v704 = vpop.f32.mrb[0].mxu0
  %v705 = vpop.f32.mrb[0].mxu0
  %v706 = vadd.f32 %v609, %v705
  %v707 = vpop.f32.mrb[0].mxu0
  %708 = vmatprep.mubr.bf16.mxu0 %v302
  %709 = vmatmul.mubr.bf16.gmra.mrb[0].mxu0 %v301
  %v710 = vpop.f32.mrb[0].mxu0
  %v711 = vadd.f32 %v614, %v710
  %v712 = vpop.f32.mrb[0].mxu0
  %v713 = vpop.f32.mrb[0].mxu0
  %v714 = vadd.f32 %v617, %v713
  %v715 = vpop.f32.mrb[0].mxu0
  %716 = vmatprep.mubr.bf16.mxu0 %v306
  %717 = vmatmul.mubr.bf16.gmra.mrb[0].mxu0 %v305
  %v718 = vpop.f32.mrb[0].mxu0
  %v719 = vadd.f32 %v622, %v718
  %v720 = vpop.f32.mrb[0].mxu0
  %v721 = vpop.f32.mrb[0].mxu0
  %v722 = vadd.f32 %v625, %v721
  %v723 = vpop.f32.mrb[0].mxu0
  %724 = vdwg.mxu0
  %v725 = vadd.f32 %v99, %v663
  %v726 = vadd.f32 %v100, %v666
  %v727 = vadd.f32 %v101, %v671
  %v728 = vadd.f32 %v102, %v674
  %v729 = vadd.f32 %v103, %v679
  %v730 = vadd.f32 %v104, %v682
  %v731 = vadd.f32 %v105, %v687
  %v732 = vadd.f32 %v106, %v690
  %v733 = vadd.f32 %v107, %v695
  %v734 = vadd.f32 %v108, %v698
  %v735 = vadd.f32 %v109, %v703
  %v736 = vadd.f32 %v110, %v706
  %v737 = vadd.f32 %v111, %v711
  %v738 = vadd.f32 %v112, %v714
  %v739 = vadd.f32 %v113, %v719
  %v740 = vadd.f32 %v114, %v722
  %741 = vst [vmem:[#allocation2] sm:$0xff] %v725
  %742 = vst [vmem:[#allocation2 + $0x8] sm:$0xff] %v726
  %743 = vst [vmem:[#allocation2 + $0x10] sm:$0xff] %v727
  %744 = vst [vmem:[#allocation2 + $0x18] sm:$0xff] %v728
  %745 = vst [vmem:[#allocation2 + $0x20] sm:$0xff] %v729
  %746 = vst [vmem:[#allocation2 + $0x28] sm:$0xff] %v730
  %747 = vst [vmem:[#allocation2 + $0x30] sm:$0xff] %v731
  %748 = vst [vmem:[#allocation2 + $0x38] sm:$0xff] %v732
  %749 = vst [vmem:[#allocation2 + $0x40] sm:$0xff] %v733
  %750 = vst [vmem:[#allocation2 + $0x48] sm:$0xff] %v734
  %751 = vst [vmem:[#allocation2 + $0x50] sm:$0xff] %v735
  %752 = vst [vmem:[#allocation2 + $0x58] sm:$0xff] %v736
  %753 = vst [vmem:[#allocation2 + $0x60] sm:$0xff] %v737
  %754 = vst [vmem:[#allocation2 + $0x68] sm:$0xff] %v738
  %755 = vst [vmem:[#allocation2 + $0x70] sm:$0xff] %v739
  %756 = vst [vmem:[#allocation2 + $0x78] sm:$0xff] %v740
  // Predicated region
  $region18: #{vqvae_forward.30} parent=0 // pred_check
    %p757 = pneg %p15
  $region19: #{vqvae_forward.30} parent=0 // pred_check_branch
    %759 = sbr.rel (%p757) target = $region21
  $region20: #{vqvae_forward.30} parent=0 // pred_region
    %v760 = vld [vmem:[#allocation2] sm:$0xff]
    %v761 = vld [vmem:[#allocation2 + $0x8] sm:$0xff]
    %v762 = vld [vmem:[#allocation2 + $0x10] sm:$0xff]
    %v763 = vld [vmem:[#allocation2 + $0x18] sm:$0xff]
    %v764 = vld [vmem:[#allocation2 + $0x20] sm:$0xff]
    %v765 = vld [vmem:[#allocation2 + $0x28] sm:$0xff]
    %v766 = vld [vmem:[#allocation2 + $0x30] sm:$0xff]
    %v767 = vld [vmem:[#allocation2 + $0x38] sm:$0xff]
    %v768 = vld [vmem:[#allocation2 + $0x40] sm:$0xff]
    %v769 = vld [vmem:[#allocation2 + $0x48] sm:$0xff]
    %v770 = vld [vmem:[#allocation2 + $0x50] sm:$0xff]
    %v771 = vld [vmem:[#allocation2 + $0x58] sm:$0xff]
    %v772 = vld [vmem:[#allocation2 + $0x60] sm:$0xff]
    %v773 = vld [vmem:[#allocation2 + $0x68] sm:$0xff]
    %v774 = vld [vmem:[#allocation2 + $0x70] sm:$0xff]
    %v775 = vld [vmem:[#allocation2 + $0x78] sm:$0xff]
    %v776 = vld [vmem:[%s2] sm:$0x1]
    %v778 = vlaneseq
    %v779 = vshrl.u32 %v778, 7
    %v780 = vsub.s32 0, %v779
    %v781 = vrot.slane %v776, %v780
    %v783 = vadd.f32 %v760, %v781
    %v784 = vadd.f32 %v761, %v781
    %v785 = vadd.f32 %v762, %v781
    %v786 = vadd.f32 %v763, %v781
    %v787 = vadd.f32 %v764, %v781
    %v788 = vadd.f32 %v765, %v781
    %v789 = vadd.f32 %v766, %v781
    %v790 = vadd.f32 %v767, %v781
    %v791 = vadd.f32 %v768, %v781
    %v792 = vadd.f32 %v769, %v781
    %v793 = vadd.f32 %v770, %v781
    %v794 = vadd.f32 %v771, %v781
    %v795 = vadd.f32 %v772, %v781
    %v796 = vadd.f32 %v773, %v781
    %v797 = vadd.f32 %v774, %v781
    %v798 = vadd.f32 %v775, %v781
    %v799 = vmax.f32 %v783, 0.0
    %v800 = vmax.f32 %v784, 0.0
    %v801 = vmax.f32 %v785, 0.0
    %v802 = vmax.f32 %v786, 0.0
    %v803 = vmax.f32 %v787, 0.0
    %v804 = vmax.f32 %v788, 0.0
    %v805 = vmax.f32 %v789, 0.0
    %v806 = vmax.f32 %v790, 0.0
    %v807 = vmax.f32 %v791, 0.0
    %v808 = vmax.f32 %v792, 0.0
    %v809 = vmax.f32 %v793, 0.0
    %v810 = vmax.f32 %v794, 0.0
    %v811 = vmax.f32 %v795, 0.0
    %v812 = vmax.f32 %v796, 0.0
    %v813 = vmax.f32 %v797, 0.0
    %v814 = vmax.f32 %v798, 0.0
    %815 = vst [vmem:[%s3] sm:$0xff] %v799
    %816 = vst [vmem:[%s3 + $0x8] sm:$0xff] %v800
    %817 = vst [vmem:[%s3 + $0x10] sm:$0xff] %v801
    %818 = vst [vmem:[%s3 + $0x18] sm:$0xff] %v802
    %819 = vst [vmem:[%s3 + $0x20] sm:$0xff] %v803
    %820 = vst [vmem:[%s3 + $0x28] sm:$0xff] %v804
    %821 = vst [vmem:[%s3 + $0x30] sm:$0xff] %v805
    %822 = vst [vmem:[%s3 + $0x38] sm:$0xff] %v806
    %823 = vst [vmem:[%s3 + $0x40] sm:$0xff] %v807
    %824 = vst [vmem:[%s3 + $0x48] sm:$0xff] %v808
    %825 = vst [vmem:[%s3 + $0x50] sm:$0xff] %v809
    %826 = vst [vmem:[%s3 + $0x58] sm:$0xff] %v810
    %827 = vst [vmem:[%s3 + $0x60] sm:$0xff] %v811
    %828 = vst [vmem:[%s3 + $0x68] sm:$0xff] %v812
    %829 = vst [vmem:[%s3 + $0x70] sm:$0xff] %v813
    %830 = vst [vmem:[%s3 + $0x78] sm:$0xff] %v814
  $region21: #{vqvae_forward.30} parent=0 // pred_fallthru
    _
  // Predicated region
  $region22: #{vqvae_forward.30} parent=0 // pred_check
    _
  $region23: #{vqvae_forward.30} parent=0 // pred_check_branch
    %832 = sbr.rel (0) target = $region25
  $region24: #{vqvae_forward.30} parent=0 // pred_region
    _
  $region25: #{vqvae_forward.30} parent=0 // pred_fallthru
    _
  // Predicated region
  $region26: #{vqvae_forward.30} parent=0 // pred_check
    _
  $region27: #{vqvae_forward.30} parent=0 // pred_check_branch
    %834 = sbr.rel (0) target = $region29
  $region28: #{vqvae_forward.30} parent=0 // pred_region
    _
  $region29: #{vqvae_forward.30} parent=0 // pred_fallthru
    _

// kernel: vqvae_forward.31
$region0: #{vqvae_forward.31}
  #allocation0 [shape = 'u32[]', space=smem, size = 0x4, offset = 0x4, fixed_abs, tag = 'smem constant byte address 0x4 - core index']
  #allocation1 [shape = 'u32[144,128]{1,0:T(1,128)}', space=vmem, size = 0x12000, scoped, tag = 'internal scratch']
  #allocation2 [shape = 'f32[512,128]{1,0:T(8,128)}', space=vmem, size = 0x40000, scoped, tag = 'scratch operand']
  %s0 = inlined_call_operand.vmem [shape: bf16[512,256], index: 0, kind: input, shape index: {}]
  %s1 = inlined_call_operand.vmem [shape: bf16[256,128], index: 1, kind: input, shape index: {}]
  %s2 = inlined_call_operand.vmem [shape: f32[1,128], index: 2, kind: input, shape index: {}]
  %s3 = inlined_call_operand.vmem [shape: f32[512,128], index: 3, kind: output, shape index: {}]
  %s4 = sld [smem:[#allocation0]]
  $region30: #{vqvae_forward.31} parent=0
    _
  %s6 = ssub.s32 1, %s4
  %s7 = scalar_select 0, %s6, %s4
  // Predicated region
  $region2: #{vqvae_forward.31} parent=0 // pred_check
    _
  $region3: #{vqvae_forward.31} parent=0 // pred_check_branch
    %9 = sbr.rel (0) target = $region5
  $region4: #{vqvae_forward.31} parent=0 // pred_region
    _
  $region5: #{vqvae_forward.31} parent=0 // pred_fallthru
    _
  // Predicated region
  $region6: #{vqvae_forward.31} parent=0 // pred_check
    _
  $region7: #{vqvae_forward.31} parent=0 // pred_check_branch
    %11 = sbr.rel (0) target = $region9
  $region8: #{vqvae_forward.31} parent=0 // pred_region
    _
  $region9: #{vqvae_forward.31} parent=0 // pred_fallthru
    _
  // Predicated region
  $region10: #{vqvae_forward.31} parent=0 // pred_check
    _
  $region11: #{vqvae_forward.31} parent=0 // pred_check_branch
    %13 = sbr.rel (0) target = $region13
  $region12: #{vqvae_forward.31} parent=0 // pred_region
    _
  $region13: #{vqvae_forward.31} parent=0 // pred_fallthru
    _
  %p15 = scmp.eq.s32.totalorder 0, 0
  // Predicated region
  $region14: #{vqvae_forward.31} parent=0 // pred_check
    %p16 = pneg %p15
  $region15: #{vqvae_forward.31} parent=0 // pred_check_branch
    %18 = sbr.rel (%p16) target = $region17
  $region16: #{vqvae_forward.31} parent=0 // pred_region
    %19 = vst [vmem:[#allocation2] sm:$0xff] 0.0
    %20 = vst [vmem:[#allocation2 + $0x8] sm:$0xff] 0.0
    %21 = vst [vmem:[#allocation2 + $0x10] sm:$0xff] 0.0
    %22 = vst [vmem:[#allocation2 + $0x18] sm:$0xff] 0.0
    %23 = vst [vmem:[#allocation2 + $0x20] sm:$0xff] 0.0
    %24 = vst [vmem:[#allocation2 + $0x28] sm:$0xff] 0.0
    %25 = vst [vmem:[#allocation2 + $0x30] sm:$0xff] 0.0
    %26 = vst [vmem:[#allocation2 + $0x38] sm:$0xff] 0.0
    %27 = vst [vmem:[#allocation2 + $0x40] sm:$0xff] 0.0
    %28 = vst [vmem:[#allocation2 + $0x48] sm:$0xff] 0.0
    %29 = vst [vmem:[#allocation2 + $0x50] sm:$0xff] 0.0
    %30 = vst [vmem:[#allocation2 + $0x58] sm:$0xff] 0.0
    %31 = vst [vmem:[#allocation2 + $0x60] sm:$0xff] 0.0
    %32 = vst [vmem:[#allocation2 + $0x68] sm:$0xff] 0.0
    %33 = vst [vmem:[#allocation2 + $0x70] sm:$0xff] 0.0
    %34 = vst [vmem:[#allocation2 + $0x78] sm:$0xff] 0.0
    %35 = vst [vmem:[#allocation2 + $0x80] sm:$0xff] 0.0
    %36 = vst [vmem:[#allocation2 + $0x88] sm:$0xff] 0.0
    %37 = vst [vmem:[#allocation2 + $0x90] sm:$0xff] 0.0
    %38 = vst [vmem:[#allocation2 + $0x98] sm:$0xff] 0.0
    %39 = vst [vmem:[#allocation2 + $0xa0] sm:$0xff] 0.0
    %40 = vst [vmem:[#allocation2 + $0xa8] sm:$0xff] 0.0
    %41 = vst [vmem:[#allocation2 + $0xb0] sm:$0xff] 0.0
    %42 = vst [vmem:[#allocation2 + $0xb8] sm:$0xff] 0.0
    %43 = vst [vmem:[#allocation2 + $0xc0] sm:$0xff] 0.0
    %44 = vst [vmem:[#allocation2 + $0xc8] sm:$0xff] 0.0
    %45 = vst [vmem:[#allocation2 + $0xd0] sm:$0xff] 0.0
    %46 = vst [vmem:[#allocation2 + $0xd8] sm:$0xff] 0.0
    %47 = vst [vmem:[#allocation2 + $0xe0] sm:$0xff] 0.0
    %48 = vst [vmem:[#allocation2 + $0xe8] sm:$0xff] 0.0
    %49 = vst [vmem:[#allocation2 + $0xf0] sm:$0xff] 0.0
    %50 = vst [vmem:[#allocation2 + $0xf8] sm:$0xff] 0.0
    %51 = vst [vmem:[#allocation2 + $0x100] sm:$0xff] 0.0
    %52 = vst [vmem:[#allocation2 + $0x108] sm:$0xff] 0.0
    %53 = vst [vmem:[#allocation2 + $0x110] sm:$0xff] 0.0
    %54 = vst [vmem:[#allocation2 + $0x118] sm:$0xff] 0.0
    %55 = vst [vmem:[#allocation2 + $0x120] sm:$0xff] 0.0
    %56 = vst [vmem:[#allocation2 + $0x128] sm:$0xff] 0.0
    %57 = vst [vmem:[#allocation2 + $0x130] sm:$0xff] 0.0
    %58 = vst [vmem:[#allocation2 + $0x138] sm:$0xff] 0.0
    %59 = vst [vmem:[#allocation2 + $0x140] sm:$0xff] 0.0
    %60 = vst [vmem:[#allocation2 + $0x148] sm:$0xff] 0.0
    %61 = vst [vmem:[#allocation2 + $0x150] sm:$0xff] 0.0
    %62 = vst [vmem:[#allocation2 + $0x158] sm:$0xff] 0.0
    %63 = vst [vmem:[#allocation2 + $0x160] sm:$0xff] 0.0
    %64 = vst [vmem:[#allocation2 + $0x168] sm:$0xff] 0.0
    %65 = vst [vmem:[#allocation2 + $0x170] sm:$0xff] 0.0
    %66 = vst [vmem:[#allocation2 + $0x178] sm:$0xff] 0.0
    %67 = vst [vmem:[#allocation2 + $0x180] sm:$0xff] 0.0
    %68 = vst [vmem:[#allocation2 + $0x188] sm:$0xff] 0.0
    %69 = vst [vmem:[#allocation2 + $0x190] sm:$0xff] 0.0
    %70 = vst [vmem:[#allocation2 + $0x198] sm:$0xff] 0.0
    %71 = vst [vmem:[#allocation2 + $0x1a0] sm:$0xff] 0.0
    %72 = vst [vmem:[#allocation2 + $0x1a8] sm:$0xff] 0.0
    %73 = vst [vmem:[#allocation2 + $0x1b0] sm:$0xff] 0.0
    %74 = vst [vmem:[#allocation2 + $0x1b8] sm:$0xff] 0.0
    %75 = vst [vmem:[#allocation2 + $0x1c0] sm:$0xff] 0.0
    %76 = vst [vmem:[#allocation2 + $0x1c8] sm:$0xff] 0.0
    %77 = vst [vmem:[#allocation2 + $0x1d0] sm:$0xff] 0.0
    %78 = vst [vmem:[#allocation2 + $0x1d8] sm:$0xff] 0.0
    %79 = vst [vmem:[#allocation2 + $0x1e0] sm:$0xff] 0.0
    %80 = vst [vmem:[#allocation2 + $0x1e8] sm:$0xff] 0.0
    %81 = vst [vmem:[#allocation2 + $0x1f0] sm:$0xff] 0.0
    %82 = vst [vmem:[#allocation2 + $0x1f8] sm:$0xff] 0.0
  $region17: #{vqvae_forward.31} parent=0 // pred_fallthru
    _
  %v83 = vld [vmem:[%s0] sm:$0xff]
  %v84 = vld [vmem:[%s0 + $0x8] sm:$0xff]
  %v85 = vld [vmem:[%s0 + $0x10] sm:$0xff]
  %v86 = vld [vmem:[%s0 + $0x18] sm:$0xff]
  %v87 = vld [vmem:[%s0 + $0x20] sm:$0xff]
  %v88 = vld [vmem:[%s0 + $0x28] sm:$0xff]
  %v89 = vld [vmem:[%s0 + $0x30] sm:$0xff]
  %v90 = vld [vmem:[%s0 + $0x38] sm:$0xff]
  %v91 = vld [vmem:[%s0 + $0x40] sm:$0xff]
  %v92 = vld [vmem:[%s0 + $0x48] sm:$0xff]
  %v93 = vld [vmem:[%s0 + $0x50] sm:$0xff]
  %v94 = vld [vmem:[%s0 + $0x58] sm:$0xff]
  %v95 = vld [vmem:[%s0 + $0x60] sm:$0xff]
  %v96 = vld [vmem:[%s0 + $0x68] sm:$0xff]
  %v97 = vld [vmem:[%s0 + $0x70] sm:$0xff]
  %v98 = vld [vmem:[%s0 + $0x78] sm:$0xff]
  %v99 = vld [vmem:[%s0 + $0x80] sm:$0xff]
  %v100 = vld [vmem:[%s0 + $0x88] sm:$0xff]
  %v101 = vld [vmem:[%s0 + $0x90] sm:$0xff]
  %v102 = vld [vmem:[%s0 + $0x98] sm:$0xff]
  %v103 = vld [vmem:[%s0 + $0xa0] sm:$0xff]
  %v104 = vld [vmem:[%s0 + $0xa8] sm:$0xff]
  %v105 = vld [vmem:[%s0 + $0xb0] sm:$0xff]
  %v106 = vld [vmem:[%s0 + $0xb8] sm:$0xff]
  %v107 = vld [vmem:[%s0 + $0xc0] sm:$0xff]
  %v108 = vld [vmem:[%s0 + $0xc8] sm:$0xff]
  %v109 = vld [vmem:[%s0 + $0xd0] sm:$0xff]
  %v110 = vld [vmem:[%s0 + $0xd8] sm:$0xff]
  %v111 = vld [vmem:[%s0 + $0xe0] sm:$0xff]
  %v112 = vld [vmem:[%s0 + $0xe8] sm:$0xff]
  %v113 = vld [vmem:[%s0 + $0xf0] sm:$0xff]
  %v114 = vld [vmem:[%s0 + $0xf8] sm:$0xff]
  %v115 = vld [vmem:[%s0 + $0x100] sm:$0xff]
  %v116 = vld [vmem:[%s0 + $0x108] sm:$0xff]
  %v117 = vld [vmem:[%s0 + $0x110] sm:$0xff]
  %v118 = vld [vmem:[%s0 + $0x118] sm:$0xff]
  %v119 = vld [vmem:[%s0 + $0x120] sm:$0xff]
  %v120 = vld [vmem:[%s0 + $0x128] sm:$0xff]
  %v121 = vld [vmem:[%s0 + $0x130] sm:$0xff]
  %v122 = vld [vmem:[%s0 + $0x138] sm:$0xff]
  %v123 = vld [vmem:[%s0 + $0x140] sm:$0xff]
  %v124 = vld [vmem:[%s0 + $0x148] sm:$0xff]
  %v125 = vld [vmem:[%s0 + $0x150] sm:$0xff]
  %v126 = vld [vmem:[%s0 + $0x158] sm:$0xff]
  %v127 = vld [vmem:[%s0 + $0x160] sm:$0xff]
  %v128 = vld [vmem:[%s0 + $0x168] sm:$0xff]
  %v129 = vld [vmem:[%s0 + $0x170] sm:$0xff]
  %v130 = vld [vmem:[%s0 + $0x178] sm:$0xff]
  %v131 = vld [vmem:[%s0 + $0x180] sm:$0xff]
  %v132 = vld [vmem:[%s0 + $0x188] sm:$0xff]
  %v133 = vld [vmem:[%s0 + $0x190] sm:$0xff]
  %v134 = vld [vmem:[%s0 + $0x198] sm:$0xff]
  %v135 = vld [vmem:[%s0 + $0x1a0] sm:$0xff]
  %v136 = vld [vmem:[%s0 + $0x1a8] sm:$0xff]
  %v137 = vld [vmem:[%s0 + $0x1b0] sm:$0xff]
  %v138 = vld [vmem:[%s0 + $0x1b8] sm:$0xff]
  %v139 = vld [vmem:[%s0 + $0x1c0] sm:$0xff]
  %v140 = vld [vmem:[%s0 + $0x1c8] sm:$0xff]
  %v141 = vld [vmem:[%s0 + $0x1d0] sm:$0xff]
  %v142 = vld [vmem:[%s0 + $0x1d8] sm:$0xff]
  %v143 = vld [vmem:[%s0 + $0x1e0] sm:$0xff]
  %v144 = vld [vmem:[%s0 + $0x1e8] sm:$0xff]
  %v145 = vld [vmem:[%s0 + $0x1f0] sm:$0xff]
  %v146 = vld [vmem:[%s0 + $0x1f8] sm:$0xff]
  %v147 = vld [vmem:[#allocation2] sm:$0xff]
  %v148 = vld [vmem:[#allocation2 + $0x8] sm:$0xff]
  %v149 = vld [vmem:[#allocation2 + $0x10] sm:$0xff]
  %v150 = vld [vmem:[#allocation2 + $0x18] sm:$0xff]
  %v151 = vld [vmem:[#allocation2 + $0x20] sm:$0xff]
  %v152 = vld [vmem:[#allocation2 + $0x28] sm:$0xff]
  %v153 = vld [vmem:[#allocation2 + $0x30] sm:$0xff]
  %v154 = vld [vmem:[#allocation2 + $0x38] sm:$0xff]
  %v155 = vld [vmem:[#allocation2 + $0x40] sm:$0xff]
  %v156 = vld [vmem:[#allocation2 + $0x48] sm:$0xff]
  %v157 = vld [vmem:[#allocation2 + $0x50] sm:$0xff]
  %v158 = vld [vmem:[#allocation2 + $0x58] sm:$0xff]
  %v159 = vld [vmem:[#allocation2 + $0x60] sm:$0xff]
  %v160 = vld [vmem:[#allocation2 + $0x68] sm:$0xff]
  %v161 = vld [vmem:[#allocation2 + $0x70] sm:$0xff]
  %v162 = vld [vmem:[#allocation2 + $0x78] sm:$0xff]
  %v163 = vld [vmem:[#allocation2 + $0x80] sm:$0xff]
  %v164 = vld [vmem:[#allocation2 + $0x88] sm:$0xff]
  %v165 = vld [vmem:[#allocation2 + $0x90] sm:$0xff]
  %v166 = vld [vmem:[#allocation2 + $0x98] sm:$0xff]
  %v167 = vld [vmem:[#allocation2 + $0xa0] sm:$0xff]
  %v168 = vld [vmem:[#allocation2 + $0xa8] sm:$0xff]
  %v169 = vld [vmem:[#allocation2 + $0xb0] sm:$0xff]
  %v170 = vld [vmem:[#allocation2 + $0xb8] sm:$0xff]
  %v171 = vld [vmem:[#allocation2 + $0xc0] sm:$0xff]
  %v172 = vld [vmem:[#allocation2 + $0xc8] sm:$0xff]
  %v173 = vld [vmem:[#allocation2 + $0xd0] sm:$0xff]
  %v174 = vld [vmem:[#allocation2 + $0xd8] sm:$0xff]
  %v175 = vld [vmem:[#allocation2 + $0xe0] sm:$0xff]
  %v176 = vld [vmem:[#allocation2 + $0xe8] sm:$0xff]
  %v177 = vld [vmem:[#allocation2 + $0xf0] sm:$0xff]
  %v178 = vld [vmem:[#allocation2 + $0xf8] sm:$0xff]
  %v179 = vld [vmem:[#allocation2 + $0x100] sm:$0xff]
  %v180 = vld [vmem:[#allocation2 + $0x108] sm:$0xff]
  %v181 = vld [vmem:[#allocation2 + $0x110] sm:$0xff]
  %v182 = vld [vmem:[#allocation2 + $0x118] sm:$0xff]
  %v183 = vld [vmem:[#allocation2 + $0x120] sm:$0xff]
  %v184 = vld [vmem:[#allocation2 + $0x128] sm:$0xff]
  %v185 = vld [vmem:[#allocation2 + $0x130] sm:$0xff]
  %v186 = vld [vmem:[#allocation2 + $0x138] sm:$0xff]
  %v187 = vld [vmem:[#allocation2 + $0x140] sm:$0xff]
  %v188 = vld [vmem:[#allocation2 + $0x148] sm:$0xff]
  %v189 = vld [vmem:[#allocation2 + $0x150] sm:$0xff]
  %v190 = vld [vmem:[#allocation2 + $0x158] sm:$0xff]
  %v191 = vld [vmem:[#allocation2 + $0x160] sm:$0xff]
  %v192 = vld [vmem:[#allocation2 + $0x168] sm:$0xff]
  %v193 = vld [vmem:[#allocation2 + $0x170] sm:$0xff]
  %v194 = vld [vmem:[#allocation2 + $0x178] sm:$0xff]
  %v195 = vld [vmem:[#allocation2 + $0x180] sm:$0xff]
  %v196 = vld [vmem:[#allocation2 + $0x188] sm:$0xff]
  %v197 = vld [vmem:[#allocation2 + $0x190] sm:$0xff]
  %v198 = vld [vmem:[#allocation2 + $0x198] sm:$0xff]
  %v199 = vld [vmem:[#allocation2 + $0x1a0] sm:$0xff]
  %v200 = vld [vmem:[#allocation2 + $0x1a8] sm:$0xff]
  %v201 = vld [vmem:[#allocation2 + $0x1b0] sm:$0xff]
  %v202 = vld [vmem:[#allocation2 + $0x1b8] sm:$0xff]
  %v203 = vld [vmem:[#allocation2 + $0x1c0] sm:$0xff]
  %v204 = vld [vmem:[#allocation2 + $0x1c8] sm:$0xff]
  %v205 = vld [vmem:[#allocation2 + $0x1d0] sm:$0xff]
  %v206 = vld [vmem:[#allocation2 + $0x1d8] sm:$0xff]
  %v207 = vld [vmem:[#allocation2 + $0x1e0] sm:$0xff]
  %v208 = vld [vmem:[#allocation2 + $0x1e8] sm:$0xff]
  %v209 = vld [vmem:[#allocation2 + $0x1f0] sm:$0xff]
  %v210 = vld [vmem:[#allocation2 + $0x1f8] sm:$0xff]
  %v211 = vld [vmem:[%s1] sm:$0xf]
  %v212 = vld [vmem:[%s1 + $0x4] sm:$0xf]
  %v213 = vld [vmem:[%s1 + $0x8] sm:$0xf]
  %v214 = vld [vmem:[%s1 + $0xc] sm:$0xf]
  %v215 = vld [vmem:[%s1 + $0x10] sm:$0xf]
  %v216 = vld [vmem:[%s1 + $0x14] sm:$0xf]
  %v217 = vld [vmem:[%s1 + $0x18] sm:$0xf]
  %v218 = vld [vmem:[%s1 + $0x1c] sm:$0xf]
  %v219 = vld [vmem:[%s1 + $0x20] sm:$0xf]
  %v220 = vld [vmem:[%s1 + $0x24] sm:$0xf]
  %v221 = vld [vmem:[%s1 + $0x28] sm:$0xf]
  %v222 = vld [vmem:[%s1 + $0x2c] sm:$0xf]
  %v223 = vld [vmem:[%s1 + $0x30] sm:$0xf]
  %v224 = vld [vmem:[%s1 + $0x34] sm:$0xf]
  %v225 = vld [vmem:[%s1 + $0x38] sm:$0xf]
  %v226 = vld [vmem:[%s1 + $0x3c] sm:$0xf]
  %v227 = vld [vmem:[%s1 + $0x40] sm:$0xf]
  %v228 = vld [vmem:[%s1 + $0x44] sm:$0xf]
  %v229 = vld [vmem:[%s1 + $0x48] sm:$0xf]
  %v230 = vld [vmem:[%s1 + $0x4c] sm:$0xf]
  %v231 = vld [vmem:[%s1 + $0x50] sm:$0xf]
  %v232 = vld [vmem:[%s1 + $0x54] sm:$0xf]
  %v233 = vld [vmem:[%s1 + $0x58] sm:$0xf]
  %v234 = vld [vmem:[%s1 + $0x5c] sm:$0xf]
  %v235 = vld [vmem:[%s1 + $0x60] sm:$0xf]
  %v236 = vld [vmem:[%s1 + $0x64] sm:$0xf]
  %v237 = vld [vmem:[%s1 + $0x68] sm:$0xf]
  %v238 = vld [vmem:[%s1 + $0x6c] sm:$0xf]
  %v239 = vld [vmem:[%s1 + $0x70] sm:$0xf]
  %v240 = vld [vmem:[%s1 + $0x74] sm:$0xf]
  %v241 = vld [vmem:[%s1 + $0x78] sm:$0xf]
  %v242 = vld [vmem:[%s1 + $0x7c] sm:$0xf]
  %v307 = vunpack.c.l.b16 %v83
  %v308 = vunpack.c.h.b16 %v83
  %v309 = vunpack.c.l.b16 %v84
  %v310 = vunpack.c.h.b16 %v84
  %v311 = vunpack.c.l.b16 %v85
  %v312 = vunpack.c.h.b16 %v85
  %v313 = vunpack.c.l.b16 %v86
  %v314 = vunpack.c.h.b16 %v86
  %v315 = vunpack.c.l.b16 %v87
  %v316 = vunpack.c.h.b16 %v87
  %v317 = vunpack.c.l.b16 %v88
  %v318 = vunpack.c.h.b16 %v88
  %v319 = vunpack.c.l.b16 %v89
  %v320 = vunpack.c.h.b16 %v89
  %v321 = vunpack.c.l.b16 %v90
  %v322 = vunpack.c.h.b16 %v90
  %v323 = vunpack.c.l.b16 %v91
  %v324 = vunpack.c.h.b16 %v91
  %v325 = vunpack.c.l.b16 %v92
  %v326 = vunpack.c.h.b16 %v92
  %v327 = vunpack.c.l.b16 %v93
  %v328 = vunpack.c.h.b16 %v93
  %v329 = vunpack.c.l.b16 %v94
  %v330 = vunpack.c.h.b16 %v94
  %v331 = vunpack.c.l.b16 %v95
  %v332 = vunpack.c.h.b16 %v95
  %v333 = vunpack.c.l.b16 %v96
  %v334 = vunpack.c.h.b16 %v96
  %v335 = vunpack.c.l.b16 %v97
  %v336 = vunpack.c.h.b16 %v97
  %v337 = vunpack.c.l.b16 %v98
  %v338 = vunpack.c.h.b16 %v98
  %v339 = vunpack.c.l.b16 %v99
  %v340 = vunpack.c.h.b16 %v99
  %v341 = vunpack.c.l.b16 %v100
  %v342 = vunpack.c.h.b16 %v100
  %v343 = vunpack.c.l.b16 %v101
  %v344 = vunpack.c.h.b16 %v101
  %v345 = vunpack.c.l.b16 %v102
  %v346 = vunpack.c.h.b16 %v102
  %v347 = vunpack.c.l.b16 %v103
  %v348 = vunpack.c.h.b16 %v103
  %v349 = vunpack.c.l.b16 %v104
  %v350 = vunpack.c.h.b16 %v104
  %v351 = vunpack.c.l.b16 %v105
  %v352 = vunpack.c.h.b16 %v105
  %v353 = vunpack.c.l.b16 %v106
  %v354 = vunpack.c.h.b16 %v106
  %v355 = vunpack.c.l.b16 %v107
  %v356 = vunpack.c.h.b16 %v107
  %v357 = vunpack.c.l.b16 %v108
  %v358 = vunpack.c.h.b16 %v108
  %v359 = vunpack.c.l.b16 %v109
  %v360 = vunpack.c.h.b16 %v109
  %v361 = vunpack.c.l.b16 %v110
  %v362 = vunpack.c.h.b16 %v110
  %v363 = vunpack.c.l.b16 %v111
  %v364 = vunpack.c.h.b16 %v111
  %v365 = vunpack.c.l.b16 %v112
  %v366 = vunpack.c.h.b16 %v112
  %v367 = vunpack.c.l.b16 %v113
  %v368 = vunpack.c.h.b16 %v113
  %v369 = vunpack.c.l.b16 %v114
  %v370 = vunpack.c.h.b16 %v114
  %v371 = vunpack.c.l.b16 %v115
  %v372 = vunpack.c.h.b16 %v115
  %v373 = vunpack.c.l.b16 %v116
  %v374 = vunpack.c.h.b16 %v116
  %v375 = vunpack.c.l.b16 %v117
  %v376 = vunpack.c.h.b16 %v117
  %v377 = vunpack.c.l.b16 %v118
  %v378 = vunpack.c.h.b16 %v118
  %v379 = vunpack.c.l.b16 %v119
  %v380 = vunpack.c.h.b16 %v119
  %v381 = vunpack.c.l.b16 %v120
  %v382 = vunpack.c.h.b16 %v120
  %v383 = vunpack.c.l.b16 %v121
  %v384 = vunpack.c.h.b16 %v121
  %v385 = vunpack.c.l.b16 %v122
  %v386 = vunpack.c.h.b16 %v122
  %v387 = vunpack.c.l.b16 %v123
  %v388 = vunpack.c.h.b16 %v123
  %v389 = vunpack.c.l.b16 %v124
  %v390 = vunpack.c.h.b16 %v124
  %v391 = vunpack.c.l.b16 %v125
  %v392 = vunpack.c.h.b16 %v125
  %v393 = vunpack.c.l.b16 %v126
  %v394 = vunpack.c.h.b16 %v126
  %v395 = vunpack.c.l.b16 %v127
  %v396 = vunpack.c.h.b16 %v127
  %v397 = vunpack.c.l.b16 %v128
  %v398 = vunpack.c.h.b16 %v128
  %v399 = vunpack.c.l.b16 %v129
  %v400 = vunpack.c.h.b16 %v129
  %v401 = vunpack.c.l.b16 %v130
  %v402 = vunpack.c.h.b16 %v130
  %v403 = vunpack.c.l.b16 %v131
  %v404 = vunpack.c.h.b16 %v131
  %v405 = vunpack.c.l.b16 %v132
  %v406 = vunpack.c.h.b16 %v132
  %v407 = vunpack.c.l.b16 %v133
  %v408 = vunpack.c.h.b16 %v133
  %v409 = vunpack.c.l.b16 %v134
  %v410 = vunpack.c.h.b16 %v134
  %v411 = vunpack.c.l.b16 %v135
  %v412 = vunpack.c.h.b16 %v135
  %v413 = vunpack.c.l.b16 %v136
  %v414 = vunpack.c.h.b16 %v136
  %v415 = vunpack.c.l.b16 %v137
  %v416 = vunpack.c.h.b16 %v137
  %v417 = vunpack.c.l.b16 %v138
  %v418 = vunpack.c.h.b16 %v138
  %v419 = vunpack.c.l.b16 %v139
  %v420 = vunpack.c.h.b16 %v139
  %v421 = vunpack.c.l.b16 %v140
  %v422 = vunpack.c.h.b16 %v140
  %v423 = vunpack.c.l.b16 %v141
  %v424 = vunpack.c.h.b16 %v141
  %v425 = vunpack.c.l.b16 %v142
  %v426 = vunpack.c.h.b16 %v142
  %v427 = vunpack.c.l.b16 %v143
  %v428 = vunpack.c.h.b16 %v143
  %v429 = vunpack.c.l.b16 %v144
  %v430 = vunpack.c.h.b16 %v144
  %v431 = vunpack.c.l.b16 %v145
  %v432 = vunpack.c.h.b16 %v145
  %v433 = vunpack.c.l.b16 %v146
  %v434 = vunpack.c.h.b16 %v146
  %v435 = vpack.c.b16 %v309, %v307
  %v436 = vpack.c.b16 %v310, %v308
  %v437 = vpack.c.b16 %v313, %v311
  %v438 = vpack.c.b16 %v314, %v312
  %v439 = vpack.c.b16 %v317, %v315
  %v440 = vpack.c.b16 %v318, %v316
  %v441 = vpack.c.b16 %v321, %v319
  %v442 = vpack.c.b16 %v322, %v320
  %v443 = vpack.c.b16 %v325, %v323
  %v444 = vpack.c.b16 %v326, %v324
  %v445 = vpack.c.b16 %v329, %v327
  %v446 = vpack.c.b16 %v330, %v328
  %v447 = vpack.c.b16 %v333, %v331
  %v448 = vpack.c.b16 %v334, %v332
  %v449 = vpack.c.b16 %v337, %v335
  %v450 = vpack.c.b16 %v338, %v336
  %v451 = vpack.c.b16 %v341, %v339
  %v452 = vpack.c.b16 %v342, %v340
  %v453 = vpack.c.b16 %v345, %v343
  %v454 = vpack.c.b16 %v346, %v344
  %v455 = vpack.c.b16 %v349, %v347
  %v456 = vpack.c.b16 %v350, %v348
  %v457 = vpack.c.b16 %v353, %v351
  %v458 = vpack.c.b16 %v354, %v352
  %v459 = vpack.c.b16 %v357, %v355
  %v460 = vpack.c.b16 %v358, %v356
  %v461 = vpack.c.b16 %v361, %v359
  %v462 = vpack.c.b16 %v362, %v360
  %v463 = vpack.c.b16 %v365, %v363
  %v464 = vpack.c.b16 %v366, %v364
  %v465 = vpack.c.b16 %v369, %v367
  %v466 = vpack.c.b16 %v370, %v368
  %v467 = vpack.c.b16 %v373, %v371
  %v468 = vpack.c.b16 %v374, %v372
  %v469 = vpack.c.b16 %v377, %v375
  %v470 = vpack.c.b16 %v378, %v376
  %v471 = vpack.c.b16 %v381, %v379
  %v472 = vpack.c.b16 %v382, %v380
  %v473 = vpack.c.b16 %v385, %v383
  %v474 = vpack.c.b16 %v386, %v384
  %v475 = vpack.c.b16 %v389, %v387
  %v476 = vpack.c.b16 %v390, %v388
  %v477 = vpack.c.b16 %v393, %v391
  %v478 = vpack.c.b16 %v394, %v392
  %v479 = vpack.c.b16 %v397, %v395
  %v480 = vpack.c.b16 %v398, %v396
  %v481 = vpack.c.b16 %v401, %v399
  %v482 = vpack.c.b16 %v402, %v400
  %v483 = vpack.c.b16 %v405, %v403
  %v484 = vpack.c.b16 %v406, %v404
  %v485 = vpack.c.b16 %v409, %v407
  %v486 = vpack.c.b16 %v410, %v408
  %v487 = vpack.c.b16 %v413, %v411
  %v488 = vpack.c.b16 %v414, %v412
  %v489 = vpack.c.b16 %v417, %v415
  %v490 = vpack.c.b16 %v418, %v416
  %v491 = vpack.c.b16 %v421, %v419
  %v492 = vpack.c.b16 %v422, %v420
  %v493 = vpack.c.b16 %v425, %v423
  %v494 = vpack.c.b16 %v426, %v424
  %v495 = vpack.c.b16 %v429, %v427
  %v496 = vpack.c.b16 %v430, %v428
  %v497 = vpack.c.b16 %v433, %v431
  %v498 = vpack.c.b16 %v434, %v432
  %v595 = vunpack.c.l.b16 %v211
  %v596 = vunpack.c.l.b16 %v212
  %v597 = vunpack.c.l.b16 %v213
  %v598 = vunpack.c.l.b16 %v214
  %v599 = vunpack.c.l.b16 %v215
  %v600 = vunpack.c.l.b16 %v216
  %v601 = vunpack.c.l.b16 %v217
  %v602 = vunpack.c.l.b16 %v218
  %v603 = vunpack.c.l.b16 %v219
  %v604 = vunpack.c.l.b16 %v220
  %v605 = vunpack.c.l.b16 %v221
  %v606 = vunpack.c.l.b16 %v222
  %v607 = vunpack.c.l.b16 %v223
  %v608 = vunpack.c.l.b16 %v224
  %v609 = vunpack.c.l.b16 %v225
  %v610 = vunpack.c.l.b16 %v226
  %v611 = vunpack.c.l.b16 %v227
  %v612 = vunpack.c.l.b16 %v228
  %v613 = vunpack.c.l.b16 %v229
  %v614 = vunpack.c.l.b16 %v230
  %v615 = vunpack.c.l.b16 %v231
  %v616 = vunpack.c.l.b16 %v232
  %v617 = vunpack.c.l.b16 %v233
  %v618 = vunpack.c.l.b16 %v234
  %v619 = vunpack.c.l.b16 %v235
  %v620 = vunpack.c.l.b16 %v236
  %v621 = vunpack.c.l.b16 %v237
  %v622 = vunpack.c.l.b16 %v238
  %v623 = vunpack.c.l.b16 %v239
  %v624 = vunpack.c.l.b16 %v240
  %v625 = vunpack.c.l.b16 %v241
  %v626 = vunpack.c.l.b16 %v242
  %v627 = vpack.c.b16 %v596, %v595
  %v628 = vpack.c.b16 %v598, %v597
  %v629 = vpack.c.b16 %v600, %v599
  %v630 = vpack.c.b16 %v602, %v601
  %v631 = vpack.c.b16 %v604, %v603
  %v632 = vpack.c.b16 %v606, %v605
  %v633 = vpack.c.b16 %v608, %v607
  %v634 = vpack.c.b16 %v610, %v609
  %v635 = vpack.c.b16 %v612, %v611
  %v636 = vpack.c.b16 %v614, %v613
  %v637 = vpack.c.b16 %v616, %v615
  %v638 = vpack.c.b16 %v618, %v617
  %v639 = vpack.c.b16 %v620, %v619
  %v640 = vpack.c.b16 %v622, %v621
  %v641 = vpack.c.b16 %v624, %v623
  %v642 = vpack.c.b16 %v626, %v625
  %659 = vmatprep.subr.bf16.mxu0 0
  %660 = vmatpush1.bf16.msra.mxu0 %v627
  %661 = vmatprep.subr.bf16.mxu0 0
  %662 = vmatpush1.bf16.msra.mxu0 %v628
  %663 = vmatprep.subr.bf16.mxu0 0
  %664 = vmatpush1.bf16.msra.mxu0 %v629
  %665 = vmatprep.subr.bf16.mxu0 0
  %666 = vmatpush1.bf16.msra.mxu0 %v630
  %667 = vmatprep.subr.bf16.mxu0 0
  %668 = vmatpush1.bf16.msra.mxu0 %v631
  %669 = vmatprep.subr.bf16.mxu0 0
  %670 = vmatpush1.bf16.msra.mxu0 %v632
  %671 = vmatprep.subr.bf16.mxu0 0
  %672 = vmatpush1.bf16.msra.mxu0 %v633
  %673 = vmatprep.subr.bf16.mxu0 0
  %674 = vmatpush1.bf16.msra.mxu0 %v634
  %675 = vmatprep.subr.bf16.mxu0 0
  %676 = vmatpush1.bf16.msra.mxu0 %v635
  %677 = vmatprep.subr.bf16.mxu0 0
  %678 = vmatpush1.bf16.msra.mxu0 %v636
  %679 = vmatprep.subr.bf16.mxu0 0
  %680 = vmatpush1.bf16.msra.mxu0 %v637
  %681 = vmatprep.subr.bf16.mxu0 0
  %682 = vmatpush1.bf16.msra.mxu0 %v638
  %683 = vmatprep.subr.bf16.mxu0 0
  %684 = vmatpush1.bf16.msra.mxu0 %v639
  %685 = vmatprep.subr.bf16.mxu0 0
  %686 = vmatpush1.bf16.msra.mxu0 %v640
  %687 = vmatprep.subr.bf16.mxu0 0
  %688 = vmatpush1.bf16.msra.mxu0 %v641
  %689 = vmatprep.subr.bf16.mxu0 0
  %690 = vmatpush1.bf16.msra.mxu0 %v642
  %691 = vmatprep.mubr.bf16.mxu0 %v436
  %692 = vmatmul.mubr.bf16.gmra.mrb[0].mxu0 %v435
  %v693 = vpop.f32.mrb[0].mxu0
  %v694 = vadd.f32 0.0, %v693
  %v695 = vpop.f32.mrb[0].mxu0
  %v696 = vpop.f32.mrb[0].mxu0
  %v697 = vadd.f32 0.0, %v696
  %v698 = vpop.f32.mrb[0].mxu0
  %699 = vmatprep.mubr.bf16.mxu0 %v438
  %700 = vmatmul.mubr.bf16.gmra.mrb[0].mxu0 %v437
  %v701 = vpop.f32.mrb[0].mxu0
  %v702 = vadd.f32 0.0, %v701
  %v703 = vpop.f32.mrb[0].mxu0
  %v704 = vpop.f32.mrb[0].mxu0
  %v705 = vadd.f32 0.0, %v704
  %v706 = vpop.f32.mrb[0].mxu0
  %707 = vmatprep.mubr.bf16.mxu0 %v440
  %708 = vmatmul.mubr.bf16.gmra.mrb[0].mxu0 %v439
  %v709 = vpop.f32.mrb[0].mxu0
  %v710 = vadd.f32 0.0, %v709
  %v711 = vpop.f32.mrb[0].mxu0
  %v712 = vpop.f32.mrb[0].mxu0
  %v713 = vadd.f32 0.0, %v712
  %v714 = vpop.f32.mrb[0].mxu0
  %715 = vmatprep.mubr.bf16.mxu0 %v442
  %716 = vmatmul.mubr.bf16.gmra.mrb[0].mxu0 %v441
  %v717 = vpop.f32.mrb[0].mxu0
  %v718 = vadd.f32 0.0, %v717
  %v719 = vpop.f32.mrb[0].mxu0
  %v720 = vpop.f32.mrb[0].mxu0
  %v721 = vadd.f32 0.0, %v720
  %v722 = vpop.f32.mrb[0].mxu0
  %723 = vmatprep.mubr.bf16.mxu0 %v444
  %724 = vmatmul.mubr.bf16.gmra.mrb[0].mxu0 %v443
  %v725 = vpop.f32.mrb[0].mxu0
  %v726 = vadd.f32 0.0, %v725
  %v727 = vpop.f32.mrb[0].mxu0
  %v728 = vpop.f32.mrb[0].mxu0
  %v729 = vadd.f32 0.0, %v728
  %v730 = vpop.f32.mrb[0].mxu0
  %731 = vmatprep.mubr.bf16.mxu0 %v446
  %732 = vmatmul.mubr.bf16.gmra.mrb[0].mxu0 %v445
  %v733 = vpop.f32.mrb[0].mxu0
  %v734 = vadd.f32 0.0, %v733
  %v735 = vpop.f32.mrb[0].mxu0
  %v736 = vpop.f32.mrb[0].mxu0
  %v737 = vadd.f32 0.0, %v736
  %v738 = vpop.f32.mrb[0].mxu0
  %739 = vmatprep.mubr.bf16.mxu0 %v448
  %740 = vmatmul.mubr.bf16.gmra.mrb[0].mxu0 %v447
  %v741 = vpop.f32.mrb[0].mxu0
  %v742 = vadd.f32 0.0, %v741
  %v743 = vpop.f32.mrb[0].mxu0
  %v744 = vpop.f32.mrb[0].mxu0
  %v745 = vadd.f32 0.0, %v744
  %v746 = vpop.f32.mrb[0].mxu0
  %747 = vmatprep.mubr.bf16.mxu0 %v450
  %748 = vmatmul.mubr.bf16.gmra.mrb[0].mxu0 %v449
  %v749 = vpop.f32.mrb[0].mxu0
  %v750 = vadd.f32 0.0, %v749
  %v751 = vpop.f32.mrb[0].mxu0
  %v752 = vpop.f32.mrb[0].mxu0
  %v753 = vadd.f32 0.0, %v752
  %v754 = vpop.f32.mrb[0].mxu0
  %755 = vmatprep.mubr.bf16.mxu0 %v452
  %756 = vmatmul.mubr.bf16.gmra.mrb[0].mxu0 %v451
  %v757 = vpop.f32.mrb[0].mxu0
  %v758 = vadd.f32 0.0, %v757
  %v759 = vpop.f32.mrb[0].mxu0
  %v760 = vpop.f32.mrb[0].mxu0
  %v761 = vadd.f32 0.0, %v760
  %v762 = vpop.f32.mrb[0].mxu0
  %763 = vmatprep.mubr.bf16.mxu0 %v454
  %764 = vmatmul.mubr.bf16.gmra.mrb[0].mxu0 %v453
  %v765 = vpop.f32.mrb[0].mxu0
  %v766 = vadd.f32 0.0, %v765
  %v767 = vpop.f32.mrb[0].mxu0
  %v768 = vpop.f32.mrb[0].mxu0
  %v769 = vadd.f32 0.0, %v768
  %v770 = vpop.f32.mrb[0].mxu0
  %771 = vmatprep.mubr.bf16.mxu0 %v456
  %772 = vmatmul.mubr.bf16.gmra.mrb[0].mxu0 %v455
  %v773 = vpop.f32.mrb[0].mxu0
  %v774 = vadd.f32 0.0, %v773
  %v775 = vpop.f32.mrb[0].mxu0
  %v776 = vpop.f32.mrb[0].mxu0
  %v777 = vadd.f32 0.0, %v776
  %v778 = vpop.f32.mrb[0].mxu0
  %779 = vmatprep.mubr.bf16.mxu0 %v458
  %780 = vmatmul.mubr.bf16.gmra.mrb[0].mxu0 %v457
  %v781 = vpop.f32.mrb[0].mxu0
  %v782 = vadd.f32 0.0, %v781
  %v783 = vpop.f32.mrb[0].mxu0
  %v784 = vpop.f32.mrb[0].mxu0
  %v785 = vadd.f32 0.0, %v784
  %v786 = vpop.f32.mrb[0].mxu0
  %787 = vmatprep.mubr.bf16.mxu0 %v460
  %788 = vmatmul.mubr.bf16.gmra.mrb[0].mxu0 %v459
  %v789 = vpop.f32.mrb[0].mxu0
  %v790 = vadd.f32 0.0, %v789
  %v791 = vpop.f32.mrb[0].mxu0
  %v792 = vpop.f32.mrb[0].mxu0
  %v793 = vadd.f32 0.0, %v792
  %v794 = vpop.f32.mrb[0].mxu0
  %795 = vmatprep.mubr.bf16.mxu0 %v462
  %796 = vmatmul.mubr.bf16.gmra.mrb[0].mxu0 %v461
  %v797 = vpop.f32.mrb[0].mxu0
  %v798 = vadd.f32 0.0, %v797
  %v799 = vpop.f32.mrb[0].mxu0
  %v800 = vpop.f32.mrb[0].mxu0
  %v801 = vadd.f32 0.0, %v800
  %v802 = vpop.f32.mrb[0].mxu0
  %803 = vmatprep.mubr.bf16.mxu0 %v464
  %804 = vmatmul.mubr.bf16.gmra.mrb[0].mxu0 %v463
  %v805 = vpop.f32.mrb[0].mxu0
  %v806 = vadd.f32 0.0, %v805
  %v807 = vpop.f32.mrb[0].mxu0
  %v808 = vpop.f32.mrb[0].mxu0
  %v809 = vadd.f32 0.0, %v808
  %v810 = vpop.f32.mrb[0].mxu0
  %811 = vmatprep.mubr.bf16.mxu0 %v466
  %812 = vmatmul.mubr.bf16.gmra.mrb[0].mxu0 %v465
  %v813 = vpop.f32.mrb[0].mxu0
  %v814 = vadd.f32 0.0, %v813
  %v815 = vpop.f32.mrb[0].mxu0
  %v816 = vpop.f32.mrb[0].mxu0
  %v817 = vadd.f32 0.0, %v816
  %v818 = vpop.f32.mrb[0].mxu0
  %819 = vmatprep.mubr.bf16.mxu0 %v468
  %820 = vmatmul.mubr.bf16.gmra.mrb[0].mxu0 %v467
  %v821 = vpop.f32.mrb[0].mxu0
  %v822 = vadd.f32 0.0, %v821
  %v823 = vpop.f32.mrb[0].mxu0
  %v824 = vpop.f32.mrb[0].mxu0
  %v825 = vadd.f32 0.0, %v824
  %v826 = vpop.f32.mrb[0].mxu0
  %827 = vmatprep.mubr.bf16.mxu0 %v470
  %828 = vmatmul.mubr.bf16.gmra.mrb[0].mxu0 %v469
  %v829 = vpop.f32.mrb[0].mxu0
  %v830 = vadd.f32 0.0, %v829
  %v831 = vpop.f32.mrb[0].mxu0
  %v832 = vpop.f32.mrb[0].mxu0
  %v833 = vadd.f32 0.0, %v832
  %v834 = vpop.f32.mrb[0].mxu0
  %835 = vmatprep.mubr.bf16.mxu0 %v472
  %836 = vmatmul.mubr.bf16.gmra.mrb[0].mxu0 %v471
  %v837 = vpop.f32.mrb[0].mxu0
  %v838 = vadd.f32 0.0, %v837
  %v839 = vpop.f32.mrb[0].mxu0
  %v840 = vpop.f32.mrb[0].mxu0
  %v841 = vadd.f32 0.0, %v840
  %v842 = vpop.f32.mrb[0].mxu0
  %843 = vmatprep.mubr.bf16.mxu0 %v474
  %844 = vmatmul.mubr.bf16.gmra.mrb[0].mxu0 %v473
  %v845 = vpop.f32.mrb[0].mxu0
  %v846 = vadd.f32 0.0, %v845
  %v847 = vpop.f32.mrb[0].mxu0
  %v848 = vpop.f32.mrb[0].mxu0
  %v849 = vadd.f32 0.0, %v848
  %v850 = vpop.f32.mrb[0].mxu0
  %851 = vmatprep.mubr.bf16.mxu0 %v476
  %852 = vmatmul.mubr.bf16.gmra.mrb[0].mxu0 %v475
  %v853 = vpop.f32.mrb[0].mxu0
  %v854 = vadd.f32 0.0, %v853
  %v855 = vpop.f32.mrb[0].mxu0
  %v856 = vpop.f32.mrb[0].mxu0
  %v857 = vadd.f32 0.0, %v856
  %v858 = vpop.f32.mrb[0].mxu0
  %859 = vmatprep.mubr.bf16.mxu0 %v478
  %860 = vmatmul.mubr.bf16.gmra.mrb[0].mxu0 %v477
  %v861 = vpop.f32.mrb[0].mxu0
  %v862 = vadd.f32 0.0, %v861
  %v863 = vpop.f32.mrb[0].mxu0
  %v864 = vpop.f32.mrb[0].mxu0
  %v865 = vadd.f32 0.0, %v864
  %v866 = vpop.f32.mrb[0].mxu0
  %867 = vmatprep.mubr.bf16.mxu0 %v480
  %868 = vmatmul.mubr.bf16.gmra.mrb[0].mxu0 %v479
  %v869 = vpop.f32.mrb[0].mxu0
  %v870 = vadd.f32 0.0, %v869
  %v871 = vpop.f32.mrb[0].mxu0
  %v872 = vpop.f32.mrb[0].mxu0
  %v873 = vadd.f32 0.0, %v872
  %v874 = vpop.f32.mrb[0].mxu0
  %875 = vmatprep.mubr.bf16.mxu0 %v482
  %876 = vmatmul.mubr.bf16.gmra.mrb[0].mxu0 %v481
  %v877 = vpop.f32.mrb[0].mxu0
  %v878 = vadd.f32 0.0, %v877
  %v879 = vpop.f32.mrb[0].mxu0
  %v880 = vpop.f32.mrb[0].mxu0
  %v881 = vadd.f32 0.0, %v880
  %v882 = vpop.f32.mrb[0].mxu0
  %883 = vmatprep.mubr.bf16.mxu0 %v484
  %884 = vmatmul.mubr.bf16.gmra.mrb[0].mxu0 %v483
  %v885 = vpop.f32.mrb[0].mxu0
  %v886 = vadd.f32 0.0, %v885
  %v887 = vpop.f32.mrb[0].mxu0
  %v888 = vpop.f32.mrb[0].mxu0
  %v889 = vadd.f32 0.0, %v888
  %v890 = vpop.f32.mrb[0].mxu0
  %891 = vmatprep.mubr.bf16.mxu0 %v486
  %892 = vmatmul.mubr.bf16.gmra.mrb[0].mxu0 %v485
  %v893 = vpop.f32.mrb[0].mxu0
  %v894 = vadd.f32 0.0, %v893
  %v895 = vpop.f32.mrb[0].mxu0
  %v896 = vpop.f32.mrb[0].mxu0
  %v897 = vadd.f32 0.0, %v896
  %v898 = vpop.f32.mrb[0].mxu0
  %899 = vmatprep.mubr.bf16.mxu0 %v488
  %900 = vmatmul.mubr.bf16.gmra.mrb[0].mxu0 %v487
  %v901 = vpop.f32.mrb[0].mxu0
  %v902 = vadd.f32 0.0, %v901
  %v903 = vpop.f32.mrb[0].mxu0
  %v904 = vpop.f32.mrb[0].mxu0
  %v905 = vadd.f32 0.0, %v904
  %v906 = vpop.f32.mrb[0].mxu0
  %907 = vmatprep.mubr.bf16.mxu0 %v490
  %908 = vmatmul.mubr.bf16.gmra.mrb[0].mxu0 %v489
  %v909 = vpop.f32.mrb[0].mxu0
  %v910 = vadd.f32 0.0, %v909
  %v911 = vpop.f32.mrb[0].mxu0
  %v912 = vpop.f32.mrb[0].mxu0
  %v913 = vadd.f32 0.0, %v912
  %v914 = vpop.f32.mrb[0].mxu0
  %915 = vmatprep.mubr.bf16.mxu0 %v492
  %916 = vmatmul.mubr.bf16.gmra.mrb[0].mxu0 %v491
  %v917 = vpop.f32.mrb[0].mxu0
  %v918 = vadd.f32 0.0, %v917
  %v919 = vpop.f32.mrb[0].mxu0
  %v920 = vpop.f32.mrb[0].mxu0
  %v921 = vadd.f32 0.0, %v920
  %v922 = vpop.f32.mrb[0].mxu0
  %923 = vmatprep.mubr.bf16.mxu0 %v494
  %924 = vmatmul.mubr.bf16.gmra.mrb[0].mxu0 %v493
  %v925 = vpop.f32.mrb[0].mxu0
  %v926 = vadd.f32 0.0, %v925
  %v927 = vpop.f32.mrb[0].mxu0
  %v928 = vpop.f32.mrb[0].mxu0
  %v929 = vadd.f32 0.0, %v928
  %v930 = vpop.f32.mrb[0].mxu0
  %931 = vmatprep.mubr.bf16.mxu0 %v496
  %932 = vmatmul.mubr.bf16.gmra.mrb[0].mxu0 %v495
  %v933 = vpop.f32.mrb[0].mxu0
  %v934 = vadd.f32 0.0, %v933
  %v935 = vpop.f32.mrb[0].mxu0
  %v936 = vpop.f32.mrb[0].mxu0
  %v937 = vadd.f32 0.0, %v936
  %v938 = vpop.f32.mrb[0].mxu0
  %939 = vmatprep.mubr.bf16.mxu0 %v498
  %940 = vmatmul.mubr.bf16.gmra.mrb[0].mxu0 %v497
  %v941 = vpop.f32.mrb[0].mxu0
  %v942 = vadd.f32 0.0, %v941
  %v943 = vpop.f32.mrb[0].mxu0
  %v944 = vpop.f32.mrb[0].mxu0
  %v945 = vadd.f32 0.0, %v944
  %v946 = vpop.f32.mrb[0].mxu0
  %947 = vdwg.mxu0
  %v948 = vadd.f32 %v147, %v694
  %v949 = vadd.f32 %v148, %v697
  %v950 = vadd.f32 %v149, %v702
  %v951 = vadd.f32 %v150, %v705
  %v952 = vadd.f32 %v151, %v710
  %v953 = vadd.f32 %v152, %v713
  %v954 = vadd.f32 %v153, %v718
  %v955 = vadd.f32 %v154, %v721
  %v956 = vadd.f32 %v155, %v726
  %v957 = vadd.f32 %v156, %v729
  %v958 = vadd.f32 %v157, %v734
  %v959 = vadd.f32 %v158, %v737
  %v960 = vadd.f32 %v159, %v742
  %v961 = vadd.f32 %v160, %v745
  %v962 = vadd.f32 %v161, %v750
  %v963 = vadd.f32 %v162, %v753
  %v964 = vadd.f32 %v163, %v758
  %v965 = vadd.f32 %v164, %v761
  %v966 = vadd.f32 %v165, %v766
  %v967 = vadd.f32 %v166, %v769
  %v968 = vadd.f32 %v167, %v774
  %v969 = vadd.f32 %v168, %v777
  %v970 = vadd.f32 %v169, %v782
  %v971 = vadd.f32 %v170, %v785
  %v972 = vadd.f32 %v171, %v790
  %v973 = vadd.f32 %v172, %v793
  %v974 = vadd.f32 %v173, %v798
  %v975 = vadd.f32 %v174, %v801
  %v976 = vadd.f32 %v175, %v806
  %v977 = vadd.f32 %v176, %v809
  %v978 = vadd.f32 %v177, %v814
  %v979 = vadd.f32 %v178, %v817
  %v980 = vadd.f32 %v179, %v822
  %v981 = vadd.f32 %v180, %v825
  %v982 = vadd.f32 %v181, %v830
  %v983 = vadd.f32 %v182, %v833
  %v984 = vadd.f32 %v183, %v838
  %v985 = vadd.f32 %v184, %v841
  %v986 = vadd.f32 %v185, %v846
  %v987 = vadd.f32 %v186, %v849
  %v988 = vadd.f32 %v187, %v854
  %v989 = vadd.f32 %v188, %v857
  %v990 = vadd.f32 %v189, %v862
  %v991 = vadd.f32 %v190, %v865
  %v992 = vadd.f32 %v191, %v870
  %v993 = vadd.f32 %v192, %v873
  %v994 = vadd.f32 %v193, %v878
  %v995 = vadd.f32 %v194, %v881
  %v996 = vadd.f32 %v195, %v886
  %v997 = vadd.f32 %v196, %v889
  %v998 = vadd.f32 %v197, %v894
  %v999 = vadd.f32 %v198, %v897
  %v1000 = vadd.f32 %v199, %v902
  %v1001 = vadd.f32 %v200, %v905
  %v1002 = vadd.f32 %v201, %v910
  %v1003 = vadd.f32 %v202, %v913
  %v1004 = vadd.f32 %v203, %v918
  %v1005 = vadd.f32 %v204, %v921
  %v1006 = vadd.f32 %v205, %v926
  %v1007 = vadd.f32 %v206, %v929
  %v1008 = vadd.f32 %v207, %v934
  %v1009 = vadd.f32 %v208, %v937
  %v1010 = vadd.f32 %v209, %v942
  %v1011 = vadd.f32 %v210, %v945
  %1012 = vst [vmem:[#allocation2] sm:$0xff] %v948
  %1013 = vst [vmem:[#allocation2 + $0x8] sm:$0xff] %v949
  %1014 = vst [vmem:[#allocation2 + $0x10] sm:$0xff] %v950
  %1015 = vst [vmem:[#allocation2 + $0x18] sm:$0xff] %v951
  %1016 = vst [vmem:[#allocation2 + $0x20] sm:$0xff] %v952
  %1017 = vst [vmem:[#allocation2 + $0x28] sm:$0xff] %v953
  %1018 = vst [vmem:[#allocation2 + $0x30] sm:$0xff] %v954
  %1019 = vst [vmem:[#allocation2 + $0x38] sm:$0xff] %v955
  %1020 = vst [vmem:[#allocation2 + $0x40] sm:$0xff] %v956
  %1021 = vst [vmem:[#allocation2 + $0x48] sm:$0xff] %v957
  %1022 = vst [vmem:[#allocation2 + $0x50] sm:$0xff] %v958
  %1023 = vst [vmem:[#allocation2 + $0x58] sm:$0xff] %v959
  %1024 = vst [vmem:[#allocation2 + $0x60] sm:$0xff] %v960
  %1025 = vst [vmem:[#allocation2 + $0x68] sm:$0xff] %v961
  %1026 = vst [vmem:[#allocation2 + $0x70] sm:$0xff] %v962
  %1027 = vst [vmem:[#allocation2 + $0x78] sm:$0xff] %v963
  %1028 = vst [vmem:[#allocation2 + $0x80] sm:$0xff] %v964
  %1029 = vst [vmem:[#allocation2 + $0x88] sm:$0xff] %v965
  %1030 = vst [vmem:[#allocation2 + $0x90] sm:$0xff] %v966
  %1031 = vst [vmem:[#allocation2 + $0x98] sm:$0xff] %v967
  %1032 = vst [vmem:[#allocation2 + $0xa0] sm:$0xff] %v968
  %1033 = vst [vmem:[#allocation2 + $0xa8] sm:$0xff] %v969
  %1034 = vst [vmem:[#allocation2 + $0xb0] sm:$0xff] %v970
  %1035 = vst [vmem:[#allocation2 + $0xb8] sm:$0xff] %v971
  %1036 = vst [vmem:[#allocation2 + $0xc0] sm:$0xff] %v972
  %1037 = vst [vmem:[#allocation2 + $0xc8] sm:$0xff] %v973
  %1038 = vst [vmem:[#allocation2 + $0xd0] sm:$0xff] %v974
  %1039 = vst [vmem:[#allocation2 + $0xd8] sm:$0xff] %v975
  %1040 = vst [vmem:[#allocation2 + $0xe0] sm:$0xff] %v976
  %1041 = vst [vmem:[#allocation2 + $0xe8] sm:$0xff] %v977
  %1042 = vst [vmem:[#allocation2 + $0xf0] sm:$0xff] %v978
  %1043 = vst [vmem:[#allocation2 + $0xf8] sm:$0xff] %v979
  %1044 = vst [vmem:[#allocation2 + $0x100] sm:$0xff] %v980
  %1045 = vst [vmem:[#allocation2 + $0x108] sm:$0xff] %v981
  %1046 = vst [vmem:[#allocation2 + $0x110] sm:$0xff] %v982
  %1047 = vst [vmem:[#allocation2 + $0x118] sm:$0xff] %v983
  %1048 = vst [vmem:[#allocation2 + $0x120] sm:$0xff] %v984
  %1049 = vst [vmem:[#allocation2 + $0x128] sm:$0xff] %v985
  %1050 = vst [vmem:[#allocation2 + $0x130] sm:$0xff] %v986
  %1051 = vst [vmem:[#allocation2 + $0x138] sm:$0xff] %v987
  %1052 = vst [vmem:[#allocation2 + $0x140] sm:$0xff] %v988
  %1053 = vst [vmem:[#allocation2 + $0x148] sm:$0xff] %v989
  %1054 = vst [vmem:[#allocation2 + $0x150] sm:$0xff] %v990
  %1055 = vst [vmem:[#allocation2 + $0x158] sm:$0xff] %v991
  %1056 = vst [vmem:[#allocation2 + $0x160] sm:$0xff] %v992
  %1057 = vst [vmem:[#allocation2 + $0x168] sm:$0xff] %v993
  %1058 = vst [vmem:[#allocation2 + $0x170] sm:$0xff] %v994
  %1059 = vst [vmem:[#allocation2 + $0x178] sm:$0xff] %v995
  %1060 = vst [vmem:[#allocation2 + $0x180] sm:$0xff] %v996
  %1061 = vst [vmem:[#allocation2 + $0x188] sm:$0xff] %v997
  %1062 = vst [vmem:[#allocation2 + $0x190] sm:$0xff] %v998
  %1063 = vst [vmem:[#allocation2 + $0x198] sm:$0xff] %v999
  %1064 = vst [vmem:[#allocation2 + $0x1a0] sm:$0xff] %v1000
  %1065 = vst [vmem:[#allocation2 + $0x1a8] sm:$0xff] %v1001
  %1066 = vst [vmem:[#allocation2 + $0x1b0] sm:$0xff] %v1002
  %1067 = vst [vmem:[#allocation2 + $0x1b8] sm:$0xff] %v1003
  %1068 = vst [vmem:[#allocation2 + $0x1c0] sm:$0xff] %v1004
  %1069 = vst [vmem:[#allocation2 + $0x1c8] sm:$0xff] %v1005
  %1070 = vst [vmem:[#allocation2 + $0x1d0] sm:$0xff] %v1006
  %1071 = vst [vmem:[#allocation2 + $0x1d8] sm:$0xff] %v1007
  %1072 = vst [vmem:[#allocation2 + $0x1e0] sm:$0xff] %v1008
  %1073 = vst [vmem:[#allocation2 + $0x1e8] sm:$0xff] %v1009
  %1074 = vst [vmem:[#allocation2 + $0x1f0] sm:$0xff] %v1010
  %1075 = vst [vmem:[#allocation2 + $0x1f8] sm:$0xff] %v1011
  // Predicated region
  $region18: #{vqvae_forward.31} parent=0 // pred_check
    %p1076 = pneg %p15
  $region19: #{vqvae_forward.31} parent=0 // pred_check_branch
    %1078 = sbr.rel (%p1076) target = $region21
  $region20: #{vqvae_forward.31} parent=0 // pred_region
    %v1079 = vld [vmem:[#allocation2] sm:$0xff]
    %v1080 = vld [vmem:[#allocation2 + $0x8] sm:$0xff]
    %v1081 = vld [vmem:[#allocation2 + $0x10] sm:$0xff]
    %v1082 = vld [vmem:[#allocation2 + $0x18] sm:$0xff]
    %v1083 = vld [vmem:[#allocation2 + $0x20] sm:$0xff]
    %v1084 = vld [vmem:[#allocation2 + $0x28] sm:$0xff]
    %v1085 = vld [vmem:[#allocation2 + $0x30] sm:$0xff]
    %v1086 = vld [vmem:[#allocation2 + $0x38] sm:$0xff]
    %v1087 = vld [vmem:[#allocation2 + $0x40] sm:$0xff]
    %v1088 = vld [vmem:[#allocation2 + $0x48] sm:$0xff]
    %v1089 = vld [vmem:[#allocation2 + $0x50] sm:$0xff]
    %v1090 = vld [vmem:[#allocation2 + $0x58] sm:$0xff]
    %v1091 = vld [vmem:[#allocation2 + $0x60] sm:$0xff]
    %v1092 = vld [vmem:[#allocation2 + $0x68] sm:$0xff]
    %v1093 = vld [vmem:[#allocation2 + $0x70] sm:$0xff]
    %v1094 = vld [vmem:[#allocation2 + $0x78] sm:$0xff]
    %v1095 = vld [vmem:[#allocation2 + $0x80] sm:$0xff]
    %v1096 = vld [vmem:[#allocation2 + $0x88] sm:$0xff]
    %v1097 = vld [vmem:[#allocation2 + $0x90] sm:$0xff]
    %v1098 = vld [vmem:[#allocation2 + $0x98] sm:$0xff]
    %v1099 = vld [vmem:[#allocation2 + $0xa0] sm:$0xff]
    %v1100 = vld [vmem:[#allocation2 + $0xa8] sm:$0xff]
    %v1101 = vld [vmem:[#allocation2 + $0xb0] sm:$0xff]
    %v1102 = vld [vmem:[#allocation2 + $0xb8] sm:$0xff]
    %v1103 = vld [vmem:[#allocation2 + $0xc0] sm:$0xff]
    %v1104 = vld [vmem:[#allocation2 + $0xc8] sm:$0xff]
    %v1105 = vld [vmem:[#allocation2 + $0xd0] sm:$0xff]
    %v1106 = vld [vmem:[#allocation2 + $0xd8] sm:$0xff]
    %v1107 = vld [vmem:[#allocation2 + $0xe0] sm:$0xff]
    %v1108 = vld [vmem:[#allocation2 + $0xe8] sm:$0xff]
    %v1109 = vld [vmem:[#allocation2 + $0xf0] sm:$0xff]
    %v1110 = vld [vmem:[#allocation2 + $0xf8] sm:$0xff]
    %v1111 = vld [vmem:[#allocation2 + $0x100] sm:$0xff]
    %v1112 = vld [vmem:[#allocation2 + $0x108] sm:$0xff]
    %v1113 = vld [vmem:[#allocation2 + $0x110] sm:$0xff]
    %v1114 = vld [vmem:[#allocation2 + $0x118] sm:$0xff]
    %v1115 = vld [vmem:[#allocation2 + $0x120] sm:$0xff]
    %v1116 = vld [vmem:[#allocation2 + $0x128] sm:$0xff]
    %v1117 = vld [vmem:[#allocation2 + $0x130] sm:$0xff]
    %v1118 = vld [vmem:[#allocation2 + $0x138] sm:$0xff]
    %v1119 = vld [vmem:[#allocation2 + $0x140] sm:$0xff]
    %v1120 = vld [vmem:[#allocation2 + $0x148] sm:$0xff]
    %v1121 = vld [vmem:[#allocation2 + $0x150] sm:$0xff]
    %v1122 = vld [vmem:[#allocation2 + $0x158] sm:$0xff]
    %v1123 = vld [vmem:[#allocation2 + $0x160] sm:$0xff]
    %v1124 = vld [vmem:[#allocation2 + $0x168] sm:$0xff]
    %v1125 = vld [vmem:[#allocation2 + $0x170] sm:$0xff]
    %v1126 = vld [vmem:[#allocation2 + $0x178] sm:$0xff]
    %v1127 = vld [vmem:[#allocation2 + $0x180] sm:$0xff]
    %v1128 = vld [vmem:[#allocation2 + $0x188] sm:$0xff]
    %v1129 = vld [vmem:[#allocation2 + $0x190] sm:$0xff]
    %v1130 = vld [vmem:[#allocation2 + $0x198] sm:$0xff]
    %v1131 = vld [vmem:[#allocation2 + $0x1a0] sm:$0xff]
    %v1132 = vld [vmem:[#allocation2 + $0x1a8] sm:$0xff]
    %v1133 = vld [vmem:[#allocation2 + $0x1b0] sm:$0xff]
    %v1134 = vld [vmem:[#allocation2 + $0x1b8] sm:$0xff]
    %v1135 = vld [vmem:[#allocation2 + $0x1c0] sm:$0xff]
    %v1136 = vld [vmem:[#allocation2 + $0x1c8] sm:$0xff]
    %v1137 = vld [vmem:[#allocation2 + $0x1d0] sm:$0xff]
    %v1138 = vld [vmem:[#allocation2 + $0x1d8] sm:$0xff]
    %v1139 = vld [vmem:[#allocation2 + $0x1e0] sm:$0xff]
    %v1140 = vld [vmem:[#allocation2 + $0x1e8] sm:$0xff]
    %v1141 = vld [vmem:[#allocation2 + $0x1f0] sm:$0xff]
    %v1142 = vld [vmem:[#allocation2 + $0x1f8] sm:$0xff]
    %v1143 = vld [vmem:[%s2] sm:$0x1]
    %v1145 = vlaneseq
    %v1146 = vshrl.u32 %v1145, 7
    %v1147 = vsub.s32 0, %v1146
    %v1148 = vrot.slane %v1143, %v1147
    %v1150 = vadd.f32 %v1079, %v1148
    %v1151 = vadd.f32 %v1080, %v1148
    %v1152 = vadd.f32 %v1081, %v1148
    %v1153 = vadd.f32 %v1082, %v1148
    %v1154 = vadd.f32 %v1083, %v1148
    %v1155 = vadd.f32 %v1084, %v1148
    %v1156 = vadd.f32 %v1085, %v1148
    %v1157 = vadd.f32 %v1086, %v1148
    %v1158 = vadd.f32 %v1087, %v1148
    %v1159 = vadd.f32 %v1088, %v1148
    %v1160 = vadd.f32 %v1089, %v1148
    %v1161 = vadd.f32 %v1090, %v1148
    %v1162 = vadd.f32 %v1091, %v1148
    %v1163 = vadd.f32 %v1092, %v1148
    %v1164 = vadd.f32 %v1093, %v1148
    %v1165 = vadd.f32 %v1094, %v1148
    %v1166 = vadd.f32 %v1095, %v1148
    %v1167 = vadd.f32 %v1096, %v1148
    %v1168 = vadd.f32 %v1097, %v1148
    %v1169 = vadd.f32 %v1098, %v1148
    %v1170 = vadd.f32 %v1099, %v1148
    %v1171 = vadd.f32 %v1100, %v1148
    %v1172 = vadd.f32 %v1101, %v1148
    %v1173 = vadd.f32 %v1102, %v1148
    %v1174 = vadd.f32 %v1103, %v1148
    %v1175 = vadd.f32 %v1104, %v1148
    %v1176 = vadd.f32 %v1105, %v1148
    %v1177 = vadd.f32 %v1106, %v1148
    %v1178 = vadd.f32 %v1107, %v1148
    %v1179 = vadd.f32 %v1108, %v1148
    %v1180 = vadd.f32 %v1109, %v1148
    %v1181 = vadd.f32 %v1110, %v1148
    %v1182 = vadd.f32 %v1111, %v1148
    %v1183 = vadd.f32 %v1112, %v1148
    %v1184 = vadd.f32 %v1113, %v1148
    %v1185 = vadd.f32 %v1114, %v1148
    %v1186 = vadd.f32 %v1115, %v1148
    %v1187 = vadd.f32 %v1116, %v1148
    %v1188 = vadd.f32 %v1117, %v1148
    %v1189 = vadd.f32 %v1118, %v1148
    %v1190 = vadd.f32 %v1119, %v1148
    %v1191 = vadd.f32 %v1120, %v1148
    %v1192 = vadd.f32 %v1121, %v1148
    %v1193 = vadd.f32 %v1122, %v1148
    %v1194 = vadd.f32 %v1123, %v1148
    %v1195 = vadd.f32 %v1124, %v1148
    %v1196 = vadd.f32 %v1125, %v1148
    %v1197 = vadd.f32 %v1126, %v1148
    %v1198 = vadd.f32 %v1127, %v1148
    %v1199 = vadd.f32 %v1128, %v1148
    %v1200 = vadd.f32 %v1129, %v1148
    %v1201 = vadd.f32 %v1130, %v1148
    %v1202 = vadd.f32 %v1131, %v1148
    %v1203 = vadd.f32 %v1132, %v1148
    %v1204 = vadd.f32 %v1133, %v1148
    %v1205 = vadd.f32 %v1134, %v1148
    %v1206 = vadd.f32 %v1135, %v1148
    %v1207 = vadd.f32 %v1136, %v1148
    %v1208 = vadd.f32 %v1137, %v1148
    %v1209 = vadd.f32 %v1138, %v1148
    %v1210 = vadd.f32 %v1139, %v1148
    %v1211 = vadd.f32 %v1140, %v1148
    %v1212 = vadd.f32 %v1141, %v1148
    %v1213 = vadd.f32 %v1142, %v1148
    %1214 = vst [vmem:[%s3] sm:$0xff] %v1150
    %1215 = vst [vmem:[%s3 + $0x8] sm:$0xff] %v1151
    %1216 = vst [vmem:[%s3 + $0x10] sm:$0xff] %v1152
    %1217 = vst [vmem:[%s3 + $0x18] sm:$0xff] %v1153
    %1218 = vst [vmem:[%s3 + $0x20] sm:$0xff] %v1154
    %1219 = vst [vmem:[%s3 + $0x28] sm:$0xff] %v1155
    %1220 = vst [vmem:[%s3 + $0x30] sm:$0xff] %v1156
    %1221 = vst [vmem:[%s3 + $0x38] sm:$0xff] %v1157
    %1222 = vst [vmem:[%s3 + $0x40] sm:$0xff] %v1158
    %1223 = vst [vmem:[%s3 + $0x48] sm:$0xff] %v1159
    %1224 = vst [vmem:[%s3 + $0x50] sm:$0xff] %v1160
    %1225 = vst [vmem:[%s3 + $0x58] sm:$0xff] %v1161
    %1226 = vst [vmem:[%s3 + $0x60] sm:$0xff] %v1162
    %1227 = vst [vmem:[%s3 + $0x68] sm:$0xff] %v1163
    %1228 = vst [vmem:[%s3 + $0x70] sm:$0xff] %v1164
    %1229 = vst [vmem:[%s3 + $0x78] sm:$0xff] %v1165
    %1230 = vst [vmem:[%s3 + $0x80] sm:$0xff] %v1166
    %1231 = vst [vmem:[%s3 + $0x88] sm:$0xff] %v1167
    %1232 = vst [vmem:[%s3 + $0x90] sm:$0xff] %v1168
    %1233 = vst [vmem:[%s3 + $0x98] sm:$0xff] %v1169
    %1234 = vst [vmem:[%s3 + $0xa0] sm:$0xff] %v1170
    %1235 = vst [vmem:[%s3 + $0xa8] sm:$0xff] %v1171
    %1236 = vst [vmem:[%s3 + $0xb0] sm:$0xff] %v1172
    %1237 = vst [vmem:[%s3 + $0xb8] sm:$0xff] %v1173
    %1238 = vst [vmem:[%s3 + $0xc0] sm:$0xff] %v1174
    %1239 = vst [vmem:[%s3 + $0xc8] sm:$0xff] %v1175
    %1240 = vst [vmem:[%s3 + $0xd0] sm:$0xff] %v1176
    %1241 = vst [vmem:[%s3 + $0xd8] sm:$0xff] %v1177
    %1242 = vst [vmem:[%s3 + $0xe0] sm:$0xff] %v1178
    %1243 = vst [vmem:[%s3 + $0xe8] sm:$0xff] %v1179
    %1244 = vst [vmem:[%s3 + $0xf0] sm:$0xff] %v1180
    %1245 = vst [vmem:[%s3 + $0xf8] sm:$0xff] %v1181
    %1246 = vst [vmem:[%s3 + $0x100] sm:$0xff] %v1182
    %1247 = vst [vmem:[%s3 + $0x108] sm:$0xff] %v1183
    %1248 = vst [vmem:[%s3 + $0x110] sm:$0xff] %v1184
    %1249 = vst [vmem:[%s3 + $0x118] sm:$0xff] %v1185
    %1250 = vst [vmem:[%s3 + $0x120] sm:$0xff] %v1186
    %1251 = vst [vmem:[%s3 + $0x128] sm:$0xff] %v1187
    %1252 = vst [vmem:[%s3 + $0x130] sm:$0xff] %v1188
    %1253 = vst [vmem:[%s3 + $0x138] sm:$0xff] %v1189
    %1254 = vst [vmem:[%s3 + $0x140] sm:$0xff] %v1190
    %1255 = vst [vmem:[%s3 + $0x148] sm:$0xff] %v1191
    %1256 = vst [vmem:[%s3 + $0x150] sm:$0xff] %v1192
    %1257 = vst [vmem:[%s3 + $0x158] sm:$0xff] %v1193
    %1258 = vst [vmem:[%s3 + $0x160] sm:$0xff] %v1194
    %1259 = vst [vmem:[%s3 + $0x168] sm:$0xff] %v1195
    %1260 = vst [vmem:[%s3 + $0x170] sm:$0xff] %v1196
    %1261 = vst [vmem:[%s3 + $0x178] sm:$0xff] %v1197
    %1262 = vst [vmem:[%s3 + $0x180] sm:$0xff] %v1198
    %1263 = vst [vmem:[%s3 + $0x188] sm:$0xff] %v1199
    %1264 = vst [vmem:[%s3 + $0x190] sm:$0xff] %v1200
    %1265 = vst [vmem:[%s3 + $0x198] sm:$0xff] %v1201
    %1266 = vst [vmem:[%s3 + $0x1a0] sm:$0xff] %v1202
    %1267 = vst [vmem:[%s3 + $0x1a8] sm:$0xff] %v1203
    %1268 = vst [vmem:[%s3 + $0x1b0] sm:$0xff] %v1204
    %1269 = vst [vmem:[%s3 + $0x1b8] sm:$0xff] %v1205
    %1270 = vst [vmem:[%s3 + $0x1c0] sm:$0xff] %v1206
    %1271 = vst [vmem:[%s3 + $0x1c8] sm:$0xff] %v1207
    %1272 = vst [vmem:[%s3 + $0x1d0] sm:$0xff] %v1208
    %1273 = vst [vmem:[%s3 + $0x1d8] sm:$0xff] %v1209
    %1274 = vst [vmem:[%s3 + $0x1e0] sm:$0xff] %v1210
    %1275 = vst [vmem:[%s3 + $0x1e8] sm:$0xff] %v1211
    %1276 = vst [vmem:[%s3 + $0x1f0] sm:$0xff] %v1212
    %1277 = vst [vmem:[%s3 + $0x1f8] sm:$0xff] %v1213
  $region21: #{vqvae_forward.31} parent=0 // pred_fallthru
    _
  // Predicated region
  $region22: #{vqvae_forward.31} parent=0 // pred_check
    _
  $region23: #{vqvae_forward.31} parent=0 // pred_check_branch
    %1279 = sbr.rel (0) target = $region25
  $region24: #{vqvae_forward.31} parent=0 // pred_region
    _
  $region25: #{vqvae_forward.31} parent=0 // pred_fallthru
    _
  // Predicated region
  $region26: #{vqvae_forward.31} parent=0 // pred_check
    _
  $region27: #{vqvae_forward.31} parent=0 // pred_check_branch
    %1281 = sbr.rel (0) target = $region29
  $region28: #{vqvae_forward.31} parent=0 // pred_region
    _
  $region29: #{vqvae_forward.31} parent=0 // pred_fallthru
    _

</llo_original>
